<compile_context>
chip_gen: v7x
topology: tpu7x:2x2x1
jax: 0.10.0
libtpu: 0.0.40
codegen_flags: <defaults>
</compile_context>

<pallas_src>
import functools

import jax
import jax.numpy as jnp
from jax import lax
from jax.experimental import pallas as pl
from jax.experimental.pallas import tpu as pltpu


_SQRT_HALF = 0.7071067811865476


def _gelu_exact(x):
    """PyTorch nn.GELU() default (approximate='none'): 0.5*x*(1+erf(x/sqrt(2))).

    erf is evaluated with the Abramowitz & Stegun 7.1.26 polynomial (|err| < 1.5e-7), which
    preserves exact-GELU semantics to f32 noise while routing the transcendental through
    exp (EUP) + VPU polynomial and avoiding any reliance on a native erf lowering.
    """
    z = x * _SQRT_HALF
    az = jnp.abs(z)
    t = 1.0 / (1.0 + 0.3275911 * az)
    poly = t * (0.254829592 + t * (-0.284496736 + t * (1.421413741
               + t * (-1.453152027 + t * 1.061405429))))
    erf_abs = 1.0 - poly * jnp.exp(-az * az)
    erf_z = jnp.where(z < 0.0, -erf_abs, erf_abs)
    return 0.5 * x * (1.0 + erf_z)


def _dw_edge_masks(H, W, K):
    """(K, H*W) 0/1 masks: mask[kx, p] == 1 iff column (p % W) + kx - K//2 stays in [0, W)."""
    half = K // 2
    cols = jnp.arange(H * W, dtype=jnp.int32) % W
    off = jnp.arange(K, dtype=jnp.int32)[:, None] - half
    valid = (cols[None, :] + off >= 0) & (cols[None, :] + off < W)
    return valid.astype(jnp.float32)


def _pointwise_conv(w, x, bias, *, mxu_min_k=64):
    """(O, C) @ (C, HW) 1x1 conv.  Tiny contraction dims stay on the VPU in f32
    (C broadcast-FMAs, split accumulators); large C falls back to an MXU matmul."""
    O, C = w.shape
    if C >= mxu_min_k:
        out = jnp.dot(w, x, preferred_element_type=jnp.float32)
    else:
        acc0 = w[:, 0:1] * x[0:1, :]
        acc1 = jnp.zeros_like(acc0)
        for c in range(1, C):
            term = w[:, c:c + 1] * x[c:c + 1, :]
            if c % 2 == 0:
                acc0 = acc0 + term
            else:
                acc1 = acc1 + term
        out = acc0 + acc1
    return out + bias


def convmod_kernel(x_ref, ln_w_ref, ln_b_ref, w_av_ref, b_av_ref,
                   wdw_rep_ref, bdw_ref, wp_ref, bp_ref, mask_ref, o_ref,
                   *, H, W, ksize, b_tile, eps=1e-6):
    HW = H * W
    Cout = o_ref.shape[1]
    half = ksize // 2
    slabw = HW + 2 * half            # width of the ky-shifted slabs
    halo = half * W + half
    pad = -(-halo // 128) * 128      # 128-aligned zero pad on each side of the lane axis

    # Small weights: load once, hoisted out of the batch-tile loop.
    ln_w = ln_w_ref[...]             # (Cin, 1)
    ln_b = ln_b_ref[...]             # (Cin, 1)
    w_av = w_av_ref[...]             # (2*Cout, Cin)
    b_av = b_av_ref[...]             # (2*Cout, 1)
    bdw = bdw_ref[...]               # (Cout, 1)
    wp = wp_ref[...]                 # (Cout, Cout)
    bp = bp_ref[...]                 # (Cout, 1)
    masks = mask_ref[...]            # (K, HW) row-edge column masks

    for b in range(b_tile):
        x = x_ref[b].astype(jnp.float32)                 # (Cin, HW), lane-dense

        # ---- LayerNorm over the channel (sublane) axis (channels_first) ----
        # (At production Cin, move this sublane reduce to a ones-row MXU matmul.)
        u = jnp.mean(x, axis=0, keepdims=True)
        d = x - u
        s = jnp.mean(d * d, axis=0, keepdims=True)
        xn = d * lax.rsqrt(s + eps)
        xn = xn * ln_w + ln_b

        # ---- fused a|v 1x1 convs: f32 VPU broadcast-FMAs (no MXU, no bf16 cast) ----
        av = _pointwise_conv(w_av, xn, b_av)             # (2*Cout, HW)
        a = _gelu_exact(av[:Cout])                       # (Cout, HW)
        v = av[Cout:]                                    # (Cout, HW)

        # ---- 11x11 depthwise conv (padding=half) on the flattened spatial axis ----
        # Re-associated form: build the K ky-shifted slabs once (K lane shifts), take the
        # ky-sum per kx on the VPU with lane-dense taps (K*K MACs, zero cross-lane work),
        # then ONE lane shift + row-edge column mask per kx.  22 cross-lane extractions
        # total instead of 121; vertical edges are handled by the zero padding.
        zpad = jnp.zeros((Cout, pad), jnp.float32)
        p_val = jnp.concatenate([zpad, a, zpad], axis=1)          # (Cout, pad+HW+pad)

        slabs = []
        for ky in range(ksize):
            start = pad + (ky - half) * W - half
            slabs.append(p_val[:, start:start + slabw])           # (Cout, slabw)

        acc0 = jnp.zeros((Cout, HW), jnp.float32)
        acc1 = jnp.zeros((Cout, HW), jnp.float32)
        for kx in range(ksize):
            # U_kx = sum_ky w[:, ky, kx] * slab_ky — taps pre-replicated lane-dense in the
            # wrapper, loaded per-tap from VMEM (low vreg pressure), pure VPU MACs.
            t0 = jnp.zeros((Cout, slabw), jnp.float32)
            t1 = jnp.zeros((Cout, slabw), jnp.float32)
            for ky in range(ksize):
                tap = wdw_rep_ref[ky * ksize + kx]                # (Cout, slabw)
                if ky % 2 == 0:
                    t0 = t0 + tap * slabs[ky]
                else:
                    t1 = t1 + tap * slabs[ky]
            u_kx = t0 + t1
            contrib = u_kx[:, kx:kx + HW] * masks[kx:kx + 1, :]   # 1 lane shift + edge mask
            if kx % 2 == 0:
                acc0 = acc0 + contrib
            else:
                acc1 = acc1 + contrib
        a_dw = acc0 + acc1 + bdw                                  # (Cout, HW), f32 throughout

        # ---- modulation + 1x1 projection (f32 VPU) ----
        out = _pointwise_conv(wp, a_dw * v, bp)
        o_ref[b] = out.astype(o_ref.dtype)                        # lane-dense, unmasked store


def _pick_b_tile(n, max_tile=8):
    """Largest divisor of n (<= max_tile) that still leaves >=2 grid steps, so both v7x
    TensorCores get work while up to `max_tile` images per step amortize the ~0.35us/step
    overhead on single-TC v5e/v6e."""
    divisors = [t for t in range(1, min(n, max_tile) + 1) if n % t == 0]
    two_step = [t for t in divisors if n // t >= 2]
    return max(two_step) if two_step else max(divisors)


def convmod_pallas(x, params, *, b_tile=None):
    """x: (N, Cin, H, W) NCHW, params in PyTorch module layouts (see __main__)."""
    (ln_w, ln_b, wa, ba, wdw, bdw, wv, bv, wp, bp) = params
    N, Cin, H, W = x.shape
    Cout = wa.shape[0]
    HW = H * W
    K = wdw.shape[-1]
    half = K // 2
    slabw = HW + 2 * half

    if b_tile is None:
        b_tile = _pick_b_tile(N)
    assert N % b_tile == 0, "b_tile must divide the batch"

    # Layout plumbing: free reshapes / tiny weight repacks only — no full-tensor transposes.
    x_flat = x.reshape(N, Cin, HW)
    ln_w_c = ln_w.reshape(Cin, 1).astype(jnp.float32)
    ln_b_c = ln_b.reshape(Cin, 1).astype(jnp.float32)
    w_av = jnp.concatenate([wa[:, :, 0, 0], wv[:, :, 0, 0]], axis=0).astype(jnp.float32)
    b_av = jnp.concatenate([ba, bv], axis=0).reshape(2 * Cout, 1).astype(jnp.float32)
    # Depthwise taps, pre-replicated lane-dense: (K*K, Cout, slabw) ~ 1 MiB at these sizes.
    # Removes the 121 in-kernel lane splats that were the dominant XLU traffic on v6e/v7x.
    wdw_rep = jnp.broadcast_to(
        wdw.reshape(Cout, K * K).T[:, :, None], (K * K, Cout, slabw)).astype(jnp.float32)
    bdw_c = bdw.reshape(Cout, 1).astype(jnp.float32)
    wp_m = wp[:, :, 0, 0].astype(jnp.float32)
    bp_c = bp.reshape(Cout, 1).astype(jnp.float32)
    masks = _dw_edge_masks(H, W, K)

    def full(arr):
        nd = arr.ndim
        return pl.BlockSpec(arr.shape, lambda n: (0,) * nd)

    kernel = functools.partial(convmod_kernel, H=H, W=W, ksize=K, b_tile=b_tile)

    out = pl.pallas_call(
        kernel,
        out_shape=jax.ShapeDtypeStruct((N, Cout, HW), jnp.float32),
        grid_spec=pltpu.PrefetchScalarGridSpec(
            num_scalar_prefetch=0,
            grid=(N // b_tile,),
            in_specs=[
                pl.BlockSpec((b_tile, Cin, HW), lambda n: (n, 0, 0)),
                full(ln_w_c), full(ln_b_c),
                full(w_av), full(b_av),
                full(wdw_rep), full(bdw_c),
                full(wp_m), full(bp_c),
                full(masks),
            ],
            out_specs=pl.BlockSpec((b_tile, Cout, HW), lambda n: (n, 0, 0)),
        ),
        compiler_params=pltpu.CompilerParams(
            dimension_semantics=("parallel",),
            # Ample here and inside v7x's 32 MiB scoped default; on v5e/v6e at production
            # C/H/W raise toward 64-96 MiB and re-sweep the spatial tile size.
            vmem_limit_bytes=32 * 1024 * 1024),
    )(x_flat, ln_w_c, ln_b_c, w_av, b_av, wdw_rep, bdw_c, wp_m, bp_c, masks)

    return out.reshape(N, Cout, H, W)


def _gelu_ref(x):
    return 0.5 * x * (1.0 + lax.erf(x * _SQRT_HALF))


def convmod_reference(x, params):
    """Pure-JAX NCHW reference matching the PyTorch forward (f32 everywhere)."""
    (ln_w, ln_b, wa, ba, wdw, bdw, wv, bv, wp, bp) = params
    Cout = wa.shape[0]
    pd = wdw.shape[-1] // 2

    u = jnp.mean(x, axis=1, keepdims=True)
    s = jnp.mean((x - u) ** 2, axis=1, keepdims=True)
    xn = (x - u) / jnp.sqrt(s + 1e-6)
    xn = ln_w[None, :, None, None] * xn + ln_b[None, :, None, None]

    a = jnp.einsum('nchw,oc->nohw', xn, wa[:, :, 0, 0]) + ba[None, :, None, None]
    a = _gelu_ref(a)
    a = lax.conv_general_dilated(
        a, wdw, window_strides=(1, 1), padding=((pd, pd), (pd, pd)),
        dimension_numbers=('NCHW', 'OIHW', 'NCHW'),
        feature_group_count=Cout) + bdw[None, :, None, None]

    v = jnp.einsum('nchw,oc->nohw', xn, wv[:, :, 0, 0]) + bv[None, :, None, None]
    out = jnp.einsum('nchw,oc->nohw', a * v, wp[:, :, 0, 0]) + bp[None, :, None, None]
    return out


if __name__ == "__main__":
    key = jax.random.PRNGKey(0)
    N, Cin, Cout, H, W, K = 2, 4, 8, 16, 16, 11

    ks = jax.random.split(key, 12)
    x = jax.random.normal(ks[0], (N, Cin, H, W), jnp.float32)

    # Parameters in PyTorch module layouts:
    ln_w = 1.0 + 0.1 * jax.random.normal(ks[1], (Cin,), jnp.float32)      # LayerNorm weight
    ln_b = 0.05 * jax.random.normal(ks[2], (Cin,), jnp.float32)           # LayerNorm bias
    wa = 0.2 * jax.random.normal(ks[3], (Cout, Cin, 1, 1), jnp.float32)   # a[0]: Conv2d(dim,outdim,1)
    ba = 0.1 * jax.random.normal(ks[4], (Cout,), jnp.float32)
    wdw = 0.05 * jax.random.normal(ks[5], (Cout, 1, K, K), jnp.float32)   # a[2]: depthwise 11x11
    bdw = 0.1 * jax.random.normal(ks[6], (Cout,), jnp.float32)
    wv = 0.2 * jax.random.normal(ks[7], (Cout, Cin, 1, 1), jnp.float32)   # v: Conv2d(dim,outdim,1)
    bv = 0.1 * jax.random.normal(ks[8], (Cout,), jnp.float32)
    wp = 0.2 * jax.random.normal(ks[9], (Cout, Cout, 1, 1), jnp.float32)  # proj: Conv2d(outdim,outdim,1)
    bp = 0.1 * jax.random.normal(ks[10], (Cout,), jnp.float32)

    params = (ln_w, ln_b, wa, ba, wdw, bdw, wv, bv, wp, bp)

    # Default tiling (b_tile=1, grid=(2,) "parallel" -> both v7x TCs busy) and the batched
    # path (b_tile=N, grid=(1,) -> single-step, the v5e/v6e large-batch configuration).
    y1 = jax.block_until_ready(convmod_pallas(x, params))
    y2 = jax.block_until_ready(convmod_pallas(x, params, b_tile=N))

    y_ref = convmod_reference(x, params)
    assert y1.shape == (N, Cout, H, W)
    for y in (y1, y2):
        err = jnp.max(jnp.abs(y - y_ref))
        assert jnp.allclose(y, y_ref, atol=1e-3, rtol=1e-3), f"max abs err {err}"

    print("KERNEL_OK")
</pallas_src>

<mosaic_0001>
module attributes {stable_mosaic.version = 11 : i64} {
  func.func @convmod_kernel(%arg0: i32, %arg1: memref<1x4x256xf32, #tpu.memory_space<vmem>>, %arg2: memref<4x1xf32, #tpu.memory_space<vmem>>, %arg3: memref<4x1xf32, #tpu.memory_space<vmem>>, %arg4: memref<16x4xf32, #tpu.memory_space<vmem>>, %arg5: memref<16x1xf32, #tpu.memory_space<vmem>>, %arg6: memref<121x8x266xf32, #tpu.memory_space<vmem>>, %arg7: memref<8x1xf32, #tpu.memory_space<vmem>>, %arg8: memref<8x8xf32, #tpu.memory_space<vmem>>, %arg9: memref<8x1xf32, #tpu.memory_space<vmem>>, %arg10: memref<11x256xf32, #tpu.memory_space<vmem>>, %arg11: memref<1x8x256xf32, #tpu.memory_space<vmem>>) attributes {dimension_semantics = [#tpu.dimension_semantics<parallel>], iteration_bounds = array<i64: 2>, scalar_prefetch = 0 : i64, scratch_operands = 0 : i64, tpu.core_type = #tpu.core_type<tc>, window_params = [{transform_indices = @transform_0, window_bounds = array<i64: 1, 4, 256>}, {pipeline_mode = #tpu.pipeline_mode<synchronous>, transform_indices = @transform_1, window_bounds = array<i64: 4, 1>}, {pipeline_mode = #tpu.pipeline_mode<synchronous>, transform_indices = @transform_2, window_bounds = array<i64: 4, 1>}, {pipeline_mode = #tpu.pipeline_mode<synchronous>, transform_indices = @transform_3, window_bounds = array<i64: 16, 4>}, {pipeline_mode = #tpu.pipeline_mode<synchronous>, transform_indices = @transform_4, window_bounds = array<i64: 16, 1>}, {pipeline_mode = #tpu.pipeline_mode<synchronous>, transform_indices = @transform_5, window_bounds = array<i64: 121, 8, 266>}, {pipeline_mode = #tpu.pipeline_mode<synchronous>, transform_indices = @transform_6, window_bounds = array<i64: 8, 1>}, {pipeline_mode = #tpu.pipeline_mode<synchronous>, transform_indices = @transform_7, window_bounds = array<i64: 8, 8>}, {pipeline_mode = #tpu.pipeline_mode<synchronous>, transform_indices = @transform_8, window_bounds = array<i64: 8, 1>}, {pipeline_mode = #tpu.pipeline_mode<synchronous>, transform_indices = @transform_9, window_bounds = array<i64: 11, 256>}, {transform_indices = @transform_10, window_bounds = array<i64: 1, 8, 256>}]} {
    %c0 = arith.constant 0 : index
    %c0_0 = arith.constant 0 : index
    %0 = vector.load %arg2[%c0, %c0_0] : memref<4x1xf32, #tpu.memory_space<vmem>>, vector<4x1xf32>
    %c0_1 = arith.constant 0 : index
    %c0_2 = arith.constant 0 : index
    %1 = vector.load %arg3[%c0_1, %c0_2] : memref<4x1xf32, #tpu.memory_space<vmem>>, vector<4x1xf32>
    %c0_3 = arith.constant 0 : index
    %c0_4 = arith.constant 0 : index
    %2 = vector.load %arg4[%c0_3, %c0_4] : memref<16x4xf32, #tpu.memory_space<vmem>>, vector<16x4xf32>
    %c0_5 = arith.constant 0 : index
    %c0_6 = arith.constant 0 : index
    %3 = vector.load %arg5[%c0_5, %c0_6] : memref<16x1xf32, #tpu.memory_space<vmem>>, vector<16x1xf32>
    %c0_7 = arith.constant 0 : index
    %c0_8 = arith.constant 0 : index
    %4 = vector.load %arg7[%c0_7, %c0_8] : memref<8x1xf32, #tpu.memory_space<vmem>>, vector<8x1xf32>
    %c0_9 = arith.constant 0 : index
    %c0_10 = arith.constant 0 : index
    %5 = vector.load %arg8[%c0_9, %c0_10] : memref<8x8xf32, #tpu.memory_space<vmem>>, vector<8x8xf32>
    %c0_11 = arith.constant 0 : index
    %c0_12 = arith.constant 0 : index
    %6 = vector.load %arg9[%c0_11, %c0_12] : memref<8x1xf32, #tpu.memory_space<vmem>>, vector<8x1xf32>
    %c0_13 = arith.constant 0 : index
    %c0_14 = arith.constant 0 : index
    %7 = vector.load %arg10[%c0_13, %c0_14] : memref<11x256xf32, #tpu.memory_space<vmem>>, vector<11x256xf32>
    %c0_15 = arith.constant 0 : index
    %c0_16 = arith.constant 0 : index
    %c0_17 = arith.constant 0 : index
    %8 = vector.load %arg1[%c0_15, %c0_16, %c0_17] : memref<1x4x256xf32, #tpu.memory_space<vmem>>, vector<1x4x256xf32>
    %9 = vector.shape_cast %8 : vector<1x4x256xf32> to vector<4x256xf32>
    %cst = arith.constant dense<0.000000e+00> : vector<256xf32>
    %10 = vector.multi_reduction <add>, %9, %cst [0] : vector<4x256xf32> to vector<256xf32>
    %11 = vector.shape_cast %10 : vector<256xf32> to vector<1x256xf32>
    %cst_18 = arith.constant 4.000000e+00 : f32
    %12 = vector.broadcast %cst_18 : f32 to vector<1x256xf32>
    %13 = arith.divf %11, %12 : vector<1x256xf32>
    %14 = vector.broadcast %13 : vector<1x256xf32> to vector<4x256xf32>
    %15 = arith.subf %9, %14 : vector<4x256xf32>
    %16 = arith.mulf %15, %15 : vector<4x256xf32>
    %cst_19 = arith.constant dense<0.000000e+00> : vector<256xf32>
    %17 = vector.multi_reduction <add>, %16, %cst_19 [0] : vector<4x256xf32> to vector<256xf32>
    %18 = vector.shape_cast %17 : vector<256xf32> to vector<1x256xf32>
    %cst_20 = arith.constant 4.000000e+00 : f32
    %19 = vector.broadcast %cst_20 : f32 to vector<1x256xf32>
    %20 = arith.divf %18, %19 : vector<1x256xf32>
    %cst_21 = arith.constant 9.99999997E-7 : f32
    %21 = vector.broadcast %cst_21 : f32 to vector<1x256xf32>
    %22 = arith.addf %20, %21 : vector<1x256xf32>
    %23 = math.rsqrt %22 : vector<1x256xf32>
    %24 = vector.broadcast %23 : vector<1x256xf32> to vector<4x256xf32>
    %25 = arith.mulf %15, %24 : vector<4x256xf32>
    %26 = vector.broadcast %0 : vector<4x1xf32> to vector<4x256xf32>
    %27 = arith.mulf %25, %26 : vector<4x256xf32>
    %28 = vector.broadcast %1 : vector<4x1xf32> to vector<4x256xf32>
    %29 = arith.addf %27, %28 : vector<4x256xf32>
    %30 = vector.extract_strided_slice %2 {offsets = [0, 0], sizes = [16, 1], strides = [1, 1]} : vector<16x4xf32> to vector<16x1xf32>
    %31 = vector.extract_strided_slice %29 {offsets = [0, 0], sizes = [1, 256], strides = [1, 1]} : vector<4x256xf32> to vector<1x256xf32>
    %32 = vector.broadcast %30 : vector<16x1xf32> to vector<16x256xf32>
    %33 = vector.broadcast %31 : vector<1x256xf32> to vector<16x256xf32>
    %34 = arith.mulf %32, %33 : vector<16x256xf32>
    %cst_22 = arith.constant 0.000000e+00 : f32
    %35 = vector.broadcast %cst_22 : f32 to vector<16x256xf32>
    %36 = vector.extract_strided_slice %2 {offsets = [0, 1], sizes = [16, 1], strides = [1, 1]} : vector<16x4xf32> to vector<16x1xf32>
    %37 = vector.extract_strided_slice %29 {offsets = [1, 0], sizes = [1, 256], strides = [1, 1]} : vector<4x256xf32> to vector<1x256xf32>
    %38 = vector.broadcast %36 : vector<16x1xf32> to vector<16x256xf32>
    %39 = vector.broadcast %37 : vector<1x256xf32> to vector<16x256xf32>
    %40 = arith.mulf %38, %39 : vector<16x256xf32>
    %41 = arith.addf %35, %40 : vector<16x256xf32>
    %42 = vector.extract_strided_slice %2 {offsets = [0, 2], sizes = [16, 1], strides = [1, 1]} : vector<16x4xf32> to vector<16x1xf32>
    %43 = vector.extract_strided_slice %29 {offsets = [2, 0], sizes = [1, 256], strides = [1, 1]} : vector<4x256xf32> to vector<1x256xf32>
    %44 = vector.broadcast %42 : vector<16x1xf32> to vector<16x256xf32>
    %45 = vector.broadcast %43 : vector<1x256xf32> to vector<16x256xf32>
    %46 = arith.mulf %44, %45 : vector<16x256xf32>
    %47 = arith.addf %34, %46 : vector<16x256xf32>
    %48 = vector.extract_strided_slice %2 {offsets = [0, 3], sizes = [16, 1], strides = [1, 1]} : vector<16x4xf32> to vector<16x1xf32>
    %49 = vector.extract_strided_slice %29 {offsets = [3, 0], sizes = [1, 256], strides = [1, 1]} : vector<4x256xf32> to vector<1x256xf32>
    %50 = vector.broadcast %48 : vector<16x1xf32> to vector<16x256xf32>
    %51 = vector.broadcast %49 : vector<1x256xf32> to vector<16x256xf32>
    %52 = arith.mulf %50, %51 : vector<16x256xf32>
    %53 = arith.addf %41, %52 : vector<16x256xf32>
    %54 = arith.addf %47, %53 : vector<16x256xf32>
    %55 = vector.broadcast %3 : vector<16x1xf32> to vector<16x256xf32>
    %56 = arith.addf %54, %55 : vector<16x256xf32>
    %57 = vector.extract_strided_slice %56 {offsets = [0, 0], sizes = [8, 256], strides = [1, 1]} : vector<16x256xf32> to vector<8x256xf32>
    %cst_23 = arith.constant 0.707106769 : f32
    %58 = vector.broadcast %cst_23 : f32 to vector<8x256xf32>
    %59 = arith.mulf %57, %58 : vector<8x256xf32>
    %60 = math.absf %59 : vector<8x256xf32>
    %cst_24 = arith.constant 0.327591091 : f32
    %61 = vector.broadcast %cst_24 : f32 to vector<8x256xf32>
    %62 = arith.mulf %61, %60 : vector<8x256xf32>
    %cst_25 = arith.constant 1.000000e+00 : f32
    %63 = vector.broadcast %cst_25 : f32 to vector<8x256xf32>
    %64 = arith.addf %63, %62 : vector<8x256xf32>
    %cst_26 = arith.constant 1.000000e+00 : f32
    %65 = vector.broadcast %cst_26 : f32 to vector<8x256xf32>
    %66 = arith.divf %65, %64 : vector<8x256xf32>
    %cst_27 = arith.constant 1.06140542 : f32
    %67 = vector.broadcast %cst_27 : f32 to vector<8x256xf32>
    %68 = arith.mulf %66, %67 : vector<8x256xf32>
    %cst_28 = arith.constant -1.45315206 : f32
    %69 = vector.broadcast %cst_28 : f32 to vector<8x256xf32>
    %70 = arith.addf %69, %68 : vector<8x256xf32>
    %71 = arith.mulf %66, %70 : vector<8x256xf32>
    %cst_29 = arith.constant 1.42141378 : f32
    %72 = vector.broadcast %cst_29 : f32 to vector<8x256xf32>
    %73 = arith.addf %72, %71 : vector<8x256xf32>
    %74 = arith.mulf %66, %73 : vector<8x256xf32>
    %cst_30 = arith.constant -0.284496725 : f32
    %75 = vector.broadcast %cst_30 : f32 to vector<8x256xf32>
    %76 = arith.addf %75, %74 : vector<8x256xf32>
    %77 = arith.mulf %66, %76 : vector<8x256xf32>
    %cst_31 = arith.constant 0.254829586 : f32
    %78 = vector.broadcast %cst_31 : f32 to vector<8x256xf32>
    %79 = arith.addf %78, %77 : vector<8x256xf32>
    %80 = arith.mulf %66, %79 : vector<8x256xf32>
    %cst_32 = arith.constant 0.000000e+00 : f32
    %81 = vector.broadcast %cst_32 : f32 to vector<8x256xf32>
    %82 = arith.subf %81, %60 : vector<8x256xf32>
    %83 = arith.mulf %82, %60 : vector<8x256xf32>
    %84 = math.exp %83 : vector<8x256xf32>
    %85 = arith.mulf %80, %84 : vector<8x256xf32>
    %cst_33 = arith.constant 1.000000e+00 : f32
    %86 = vector.broadcast %cst_33 : f32 to vector<8x256xf32>
    %87 = arith.subf %86, %85 : vector<8x256xf32>
    %cst_34 = arith.constant 0.000000e+00 : f32
    %88 = vector.broadcast %cst_34 : f32 to vector<8x256xf32>
    %89 = arith.cmpf olt, %59, %88 : vector<8x256xf32>
    %cst_35 = arith.constant 0.000000e+00 : f32
    %90 = vector.broadcast %cst_35 : f32 to vector<8x256xf32>
    %91 = arith.subf %90, %87 : vector<8x256xf32>
    %92 = arith.select %89, %91, %87 : vector<8x256xi1>, vector<8x256xf32>
    %cst_36 = arith.constant 5.000000e-01 : f32
    %93 = vector.broadcast %cst_36 : f32 to vector<8x256xf32>
    %94 = arith.mulf %93, %57 : vector<8x256xf32>
    %cst_37 = arith.constant 1.000000e+00 : f32
    %95 = vector.broadcast %cst_37 : f32 to vector<8x256xf32>
    %96 = arith.addf %95, %92 : vector<8x256xf32>
    %97 = arith.mulf %94, %96 : vector<8x256xf32>
    %98 = vector.extract_strided_slice %56 {offsets = [8, 0], sizes = [8, 256], strides = [1, 1]} : vector<16x256xf32> to vector<8x256xf32>
    %cst_38 = arith.constant 0.000000e+00 : f32
    %99 = vector.broadcast %cst_38 : f32 to vector<8x128xf32>
    %100 = tpu.concatenate %99, %97, %99 in 1 : vector<8x128xf32>, vector<8x256xf32>, vector<8x128xf32> -> vector<8x512xf32>
    %101 = vector.extract_strided_slice %100 {offsets = [0, 43], sizes = [8, 266], strides = [1, 1]} : vector<8x512xf32> to vector<8x266xf32>
    %102 = vector.extract_strided_slice %100 {offsets = [0, 59], sizes = [8, 266], strides = [1, 1]} : vector<8x512xf32> to vector<8x266xf32>
    %103 = vector.extract_strided_slice %100 {offsets = [0, 75], sizes = [8, 266], strides = [1, 1]} : vector<8x512xf32> to vector<8x266xf32>
    %104 = vector.extract_strided_slice %100 {offsets = [0, 91], sizes = [8, 266], strides = [1, 1]} : vector<8x512xf32> to vector<8x266xf32>
    %105 = vector.extract_strided_slice %100 {offsets = [0, 107], sizes = [8, 266], strides = [1, 1]} : vector<8x512xf32> to vector<8x266xf32>
    %106 = vector.extract_strided_slice %100 {offsets = [0, 123], sizes = [8, 266], strides = [1, 1]} : vector<8x512xf32> to vector<8x266xf32>
    %107 = vector.extract_strided_slice %100 {offsets = [0, 139], sizes = [8, 266], strides = [1, 1]} : vector<8x512xf32> to vector<8x266xf32>
    %108 = vector.extract_strided_slice %100 {offsets = [0, 155], sizes = [8, 266], strides = [1, 1]} : vector<8x512xf32> to vector<8x266xf32>
    %109 = vector.extract_strided_slice %100 {offsets = [0, 171], sizes = [8, 266], strides = [1, 1]} : vector<8x512xf32> to vector<8x266xf32>
    %110 = vector.extract_strided_slice %100 {offsets = [0, 187], sizes = [8, 266], strides = [1, 1]} : vector<8x512xf32> to vector<8x266xf32>
    %111 = vector.extract_strided_slice %100 {offsets = [0, 203], sizes = [8, 266], strides = [1, 1]} : vector<8x512xf32> to vector<8x266xf32>
    %cst_39 = arith.constant 0.000000e+00 : f32
    %112 = vector.broadcast %cst_39 : f32 to vector<8x256xf32>
    %cst_40 = arith.constant 0.000000e+00 : f32
    %113 = vector.broadcast %cst_40 : f32 to vector<8x256xf32>
    %cst_41 = arith.constant 0.000000e+00 : f32
    %114 = vector.broadcast %cst_41 : f32 to vector<8x266xf32>
    %cst_42 = arith.constant 0.000000e+00 : f32
    %115 = vector.broadcast %cst_42 : f32 to vector<8x266xf32>
    %c0_43 = arith.constant 0 : index
    %c0_44 = arith.constant 0 : index
    %c0_45 = arith.constant 0 : index
    %116 = vector.load %arg6[%c0_43, %c0_44, %c0_45] : memref<121x8x266xf32, #tpu.memory_space<vmem>>, vector<1x8x266xf32>
    %117 = vector.shape_cast %116 : vector<1x8x266xf32> to vector<8x266xf32>
    %118 = arith.mulf %117, %101 : vector<8x266xf32>
    %119 = arith.addf %114, %118 : vector<8x266xf32>
    %c11 = arith.constant 11 : index
    %c0_46 = arith.constant 0 : index
    %c0_47 = arith.constant 0 : index
    %120 = vector.load %arg6[%c11, %c0_46, %c0_47] : memref<121x8x266xf32, #tpu.memory_space<vmem>>, vector<1x8x266xf32>
    %121 = vector.shape_cast %120 : vector<1x8x266xf32> to vector<8x266xf32>
    %122 = arith.mulf %121, %102 : vector<8x266xf32>
    %123 = arith.addf %115, %122 : vector<8x266xf32>
    %c22 = arith.constant 22 : index
    %c0_48 = arith.constant 0 : index
    %c0_49 = arith.constant 0 : index
    %124 = vector.load %arg6[%c22, %c0_48, %c0_49] : memref<121x8x266xf32, #tpu.memory_space<vmem>>, vector<1x8x266xf32>
    %125 = vector.shape_cast %124 : vector<1x8x266xf32> to vector<8x266xf32>
    %126 = arith.mulf %125, %103 : vector<8x266xf32>
    %127 = arith.addf %119, %126 : vector<8x266xf32>
    %c33 = arith.constant 33 : index
    %c0_50 = arith.constant 0 : index
    %c0_51 = arith.constant 0 : index
    %128 = vector.load %arg6[%c33, %c0_50, %c0_51] : memref<121x8x266xf32, #tpu.memory_space<vmem>>, vector<1x8x266xf32>
    %129 = vector.shape_cast %128 : vector<1x8x266xf32> to vector<8x266xf32>
    %130 = arith.mulf %129, %104 : vector<8x266xf32>
    %131 = arith.addf %123, %130 : vector<8x266xf32>
    %c44 = arith.constant 44 : index
    %c0_52 = arith.constant 0 : index
    %c0_53 = arith.constant 0 : index
    %132 = vector.load %arg6[%c44, %c0_52, %c0_53] : memref<121x8x266xf32, #tpu.memory_space<vmem>>, vector<1x8x266xf32>
    %133 = vector.shape_cast %132 : vector<1x8x266xf32> to vector<8x266xf32>
    %134 = arith.mulf %133, %105 : vector<8x266xf32>
    %135 = arith.addf %127, %134 : vector<8x266xf32>
    %c55 = arith.constant 55 : index
    %c0_54 = arith.constant 0 : index
    %c0_55 = arith.constant 0 : index
    %136 = vector.load %arg6[%c55, %c0_54, %c0_55] : memref<121x8x266xf32, #tpu.memory_space<vmem>>, vector<1x8x266xf32>
    %137 = vector.shape_cast %136 : vector<1x8x266xf32> to vector<8x266xf32>
    %138 = arith.mulf %137, %106 : vector<8x266xf32>
    %139 = arith.addf %131, %138 : vector<8x266xf32>
    %c66 = arith.constant 66 : index
    %c0_56 = arith.constant 0 : index
    %c0_57 = arith.constant 0 : index
    %140 = vector.load %arg6[%c66, %c0_56, %c0_57] : memref<121x8x266xf32, #tpu.memory_space<vmem>>, vector<1x8x266xf32>
    %141 = vector.shape_cast %140 : vector<1x8x266xf32> to vector<8x266xf32>
    %142 = arith.mulf %141, %107 : vector<8x266xf32>
    %143 = arith.addf %135, %142 : vector<8x266xf32>
    %c77 = arith.constant 77 : index
    %c0_58 = arith.constant 0 : index
    %c0_59 = arith.constant 0 : index
    %144 = vector.load %arg6[%c77, %c0_58, %c0_59] : memref<121x8x266xf32, #tpu.memory_space<vmem>>, vector<1x8x266xf32>
    %145 = vector.shape_cast %144 : vector<1x8x266xf32> to vector<8x266xf32>
    %146 = arith.mulf %145, %108 : vector<8x266xf32>
    %147 = arith.addf %139, %146 : vector<8x266xf32>
    %c88 = arith.constant 88 : index
    %c0_60 = arith.constant 0 : index
    %c0_61 = arith.constant 0 : index
    %148 = vector.load %arg6[%c88, %c0_60, %c0_61] : memref<121x8x266xf32, #tpu.memory_space<vmem>>, vector<1x8x266xf32>
    %149 = vector.shape_cast %148 : vector<1x8x266xf32> to vector<8x266xf32>
    %150 = arith.mulf %149, %109 : vector<8x266xf32>
    %151 = arith.addf %143, %150 : vector<8x266xf32>
    %c99 = arith.constant 99 : index
    %c0_62 = arith.constant 0 : index
    %c0_63 = arith.constant 0 : index
    %152 = vector.load %arg6[%c99, %c0_62, %c0_63] : memref<121x8x266xf32, #tpu.memory_space<vmem>>, vector<1x8x266xf32>
    %153 = vector.shape_cast %152 : vector<1x8x266xf32> to vector<8x266xf32>
    %154 = arith.mulf %153, %110 : vector<8x266xf32>
    %155 = arith.addf %147, %154 : vector<8x266xf32>
    %c110 = arith.constant 110 : index
    %c0_64 = arith.constant 0 : index
    %c0_65 = arith.constant 0 : index
    %156 = vector.load %arg6[%c110, %c0_64, %c0_65] : memref<121x8x266xf32, #tpu.memory_space<vmem>>, vector<1x8x266xf32>
    %157 = vector.shape_cast %156 : vector<1x8x266xf32> to vector<8x266xf32>
    %158 = arith.mulf %157, %111 : vector<8x266xf32>
    %159 = arith.addf %151, %158 : vector<8x266xf32>
    %160 = arith.addf %159, %155 : vector<8x266xf32>
    %161 = vector.extract_strided_slice %160 {offsets = [0, 0], sizes = [8, 256], strides = [1, 1]} : vector<8x266xf32> to vector<8x256xf32>
    %162 = vector.extract_strided_slice %7 {offsets = [0, 0], sizes = [1, 256], strides = [1, 1]} : vector<11x256xf32> to vector<1x256xf32>
    %163 = vector.broadcast %162 : vector<1x256xf32> to vector<8x256xf32>
    %164 = arith.mulf %161, %163 : vector<8x256xf32>
    %165 = arith.addf %112, %164 : vector<8x256xf32>
    %cst_66 = arith.constant 0.000000e+00 : f32
    %166 = vector.broadcast %cst_66 : f32 to vector<8x266xf32>
    %cst_67 = arith.constant 0.000000e+00 : f32
    %167 = vector.broadcast %cst_67 : f32 to vector<8x266xf32>
    %c1 = arith.constant 1 : index
    %c0_68 = arith.constant 0 : index
    %c0_69 = arith.constant 0 : index
    %168 = vector.load %arg6[%c1, %c0_68, %c0_69] : memref<121x8x266xf32, #tpu.memory_space<vmem>>, vector<1x8x266xf32>
    %169 = vector.shape_cast %168 : vector<1x8x266xf32> to vector<8x266xf32>
    %170 = arith.mulf %169, %101 : vector<8x266xf32>
    %171 = arith.addf %166, %170 : vector<8x266xf32>
    %c12 = arith.constant 12 : index
    %c0_70 = arith.constant 0 : index
    %c0_71 = arith.constant 0 : index
    %172 = vector.load %arg6[%c12, %c0_70, %c0_71] : memref<121x8x266xf32, #tpu.memory_space<vmem>>, vector<1x8x266xf32>
    %173 = vector.shape_cast %172 : vector<1x8x266xf32> to vector<8x266xf32>
    %174 = arith.mulf %173, %102 : vector<8x266xf32>
    %175 = arith.addf %167, %174 : vector<8x266xf32>
    %c23 = arith.constant 23 : index
    %c0_72 = arith.constant 0 : index
    %c0_73 = arith.constant 0 : index
    %176 = vector.load %arg6[%c23, %c0_72, %c0_73] : memref<121x8x266xf32, #tpu.memory_space<vmem>>, vector<1x8x266xf32>
    %177 = vector.shape_cast %176 : vector<1x8x266xf32> to vector<8x266xf32>
    %178 = arith.mulf %177, %103 : vector<8x266xf32>
    %179 = arith.addf %171, %178 : vector<8x266xf32>
    %c34 = arith.constant 34 : index
    %c0_74 = arith.constant 0 : index
    %c0_75 = arith.constant 0 : index
    %180 = vector.load %arg6[%c34, %c0_74, %c0_75] : memref<121x8x266xf32, #tpu.memory_space<vmem>>, vector<1x8x266xf32>
    %181 = vector.shape_cast %180 : vector<1x8x266xf32> to vector<8x266xf32>
    %182 = arith.mulf %181, %104 : vector<8x266xf32>
    %183 = arith.addf %175, %182 : vector<8x266xf32>
    %c45 = arith.constant 45 : index
    %c0_76 = arith.constant 0 : index
    %c0_77 = arith.constant 0 : index
    %184 = vector.load %arg6[%c45, %c0_76, %c0_77] : memref<121x8x266xf32, #tpu.memory_space<vmem>>, vector<1x8x266xf32>
    %185 = vector.shape_cast %184 : vector<1x8x266xf32> to vector<8x266xf32>
    %186 = arith.mulf %185, %105 : vector<8x266xf32>
    %187 = arith.addf %179, %186 : vector<8x266xf32>
    %c56 = arith.constant 56 : index
    %c0_78 = arith.constant 0 : index
    %c0_79 = arith.constant 0 : index
    %188 = vector.load %arg6[%c56, %c0_78, %c0_79] : memref<121x8x266xf32, #tpu.memory_space<vmem>>, vector<1x8x266xf32>
    %189 = vector.shape_cast %188 : vector<1x8x266xf32> to vector<8x266xf32>
    %190 = arith.mulf %189, %106 : vector<8x266xf32>
    %191 = arith.addf %183, %190 : vector<8x266xf32>
    %c67 = arith.constant 67 : index
    %c0_80 = arith.constant 0 : index
    %c0_81 = arith.constant 0 : index
    %192 = vector.load %arg6[%c67, %c0_80, %c0_81] : memref<121x8x266xf32, #tpu.memory_space<vmem>>, vector<1x8x266xf32>
    %193 = vector.shape_cast %192 : vector<1x8x266xf32> to vector<8x266xf32>
    %194 = arith.mulf %193, %107 : vector<8x266xf32>
    %195 = arith.addf %187, %194 : vector<8x266xf32>
    %c78 = arith.constant 78 : index
    %c0_82 = arith.constant 0 : index
    %c0_83 = arith.constant 0 : index
    %196 = vector.load %arg6[%c78, %c0_82, %c0_83] : memref<121x8x266xf32, #tpu.memory_space<vmem>>, vector<1x8x266xf32>
    %197 = vector.shape_cast %196 : vector<1x8x266xf32> to vector<8x266xf32>
    %198 = arith.mulf %197, %108 : vector<8x266xf32>
    %199 = arith.addf %191, %198 : vector<8x266xf32>
    %c89 = arith.constant 89 : index
    %c0_84 = arith.constant 0 : index
    %c0_85 = arith.constant 0 : index
    %200 = vector.load %arg6[%c89, %c0_84, %c0_85] : memref<121x8x266xf32, #tpu.memory_space<vmem>>, vector<1x8x266xf32>
    %201 = vector.shape_cast %200 : vector<1x8x266xf32> to vector<8x266xf32>
    %202 = arith.mulf %201, %109 : vector<8x266xf32>
    %203 = arith.addf %195, %202 : vector<8x266xf32>
    %c100 = arith.constant 100 : index
    %c0_86 = arith.constant 0 : index
    %c0_87 = arith.constant 0 : index
    %204 = vector.load %arg6[%c100, %c0_86, %c0_87] : memref<121x8x266xf32, #tpu.memory_space<vmem>>, vector<1x8x266xf32>
    %205 = vector.shape_cast %204 : vector<1x8x266xf32> to vector<8x266xf32>
    %206 = arith.mulf %205, %110 : vector<8x266xf32>
    %207 = arith.addf %199, %206 : vector<8x266xf32>
    %c111 = arith.constant 111 : index
    %c0_88 = arith.constant 0 : index
    %c0_89 = arith.constant 0 : index
    %208 = vector.load %arg6[%c111, %c0_88, %c0_89] : memref<121x8x266xf32, #tpu.memory_space<vmem>>, vector<1x8x266xf32>
    %209 = vector.shape_cast %208 : vector<1x8x266xf32> to vector<8x266xf32>
    %210 = arith.mulf %209, %111 : vector<8x266xf32>
    %211 = arith.addf %203, %210 : vector<8x266xf32>
    %212 = arith.addf %211, %207 : vector<8x266xf32>
    %213 = vector.extract_strided_slice %212 {offsets = [0, 1], sizes = [8, 256], strides = [1, 1]} : vector<8x266xf32> to vector<8x256xf32>
    %214 = vector.extract_strided_slice %7 {offsets = [1, 0], sizes = [1, 256], strides = [1, 1]} : vector<11x256xf32> to vector<1x256xf32>
    %215 = vector.broadcast %214 : vector<1x256xf32> to vector<8x256xf32>
    %216 = arith.mulf %213, %215 : vector<8x256xf32>
    %217 = arith.addf %113, %216 : vector<8x256xf32>
    %cst_90 = arith.constant 0.000000e+00 : f32
    %218 = vector.broadcast %cst_90 : f32 to vector<8x266xf32>
    %cst_91 = arith.constant 0.000000e+00 : f32
    %219 = vector.broadcast %cst_91 : f32 to vector<8x266xf32>
    %c2 = arith.constant 2 : index
    %c0_92 = arith.constant 0 : index
    %c0_93 = arith.constant 0 : index
    %220 = vector.load %arg6[%c2, %c0_92, %c0_93] : memref<121x8x266xf32, #tpu.memory_space<vmem>>, vector<1x8x266xf32>
    %221 = vector.shape_cast %220 : vector<1x8x266xf32> to vector<8x266xf32>
    %222 = arith.mulf %221, %101 : vector<8x266xf32>
    %223 = arith.addf %218, %222 : vector<8x266xf32>
    %c13 = arith.constant 13 : index
    %c0_94 = arith.constant 0 : index
    %c0_95 = arith.constant 0 : index
    %224 = vector.load %arg6[%c13, %c0_94, %c0_95] : memref<121x8x266xf32, #tpu.memory_space<vmem>>, vector<1x8x266xf32>
    %225 = vector.shape_cast %224 : vector<1x8x266xf32> to vector<8x266xf32>
    %226 = arith.mulf %225, %102 : vector<8x266xf32>
    %227 = arith.addf %219, %226 : vector<8x266xf32>
    %c24 = arith.constant 24 : index
    %c0_96 = arith.constant 0 : index
    %c0_97 = arith.constant 0 : index
    %228 = vector.load %arg6[%c24, %c0_96, %c0_97] : memref<121x8x266xf32, #tpu.memory_space<vmem>>, vector<1x8x266xf32>
    %229 = vector.shape_cast %228 : vector<1x8x266xf32> to vector<8x266xf32>
    %230 = arith.mulf %229, %103 : vector<8x266xf32>
    %231 = arith.addf %223, %230 : vector<8x266xf32>
    %c35 = arith.constant 35 : index
    %c0_98 = arith.constant 0 : index
    %c0_99 = arith.constant 0 : index
    %232 = vector.load %arg6[%c35, %c0_98, %c0_99] : memref<121x8x266xf32, #tpu.memory_space<vmem>>, vector<1x8x266xf32>
    %233 = vector.shape_cast %232 : vector<1x8x266xf32> to vector<8x266xf32>
    %234 = arith.mulf %233, %104 : vector<8x266xf32>
    %235 = arith.addf %227, %234 : vector<8x266xf32>
    %c46 = arith.constant 46 : index
    %c0_100 = arith.constant 0 : index
    %c0_101 = arith.constant 0 : index
    %236 = vector.load %arg6[%c46, %c0_100, %c0_101] : memref<121x8x266xf32, #tpu.memory_space<vmem>>, vector<1x8x266xf32>
    %237 = vector.shape_cast %236 : vector<1x8x266xf32> to vector<8x266xf32>
    %238 = arith.mulf %237, %105 : vector<8x266xf32>
    %239 = arith.addf %231, %238 : vector<8x266xf32>
    %c57 = arith.constant 57 : index
    %c0_102 = arith.constant 0 : index
    %c0_103 = arith.constant 0 : index
    %240 = vector.load %arg6[%c57, %c0_102, %c0_103] : memref<121x8x266xf32, #tpu.memory_space<vmem>>, vector<1x8x266xf32>
    %241 = vector.shape_cast %240 : vector<1x8x266xf32> to vector<8x266xf32>
    %242 = arith.mulf %241, %106 : vector<8x266xf32>
    %243 = arith.addf %235, %242 : vector<8x266xf32>
    %c68 = arith.constant 68 : index
    %c0_104 = arith.constant 0 : index
    %c0_105 = arith.constant 0 : index
    %244 = vector.load %arg6[%c68, %c0_104, %c0_105] : memref<121x8x266xf32, #tpu.memory_space<vmem>>, vector<1x8x266xf32>
    %245 = vector.shape_cast %244 : vector<1x8x266xf32> to vector<8x266xf32>
    %246 = arith.mulf %245, %107 : vector<8x266xf32>
    %247 = arith.addf %239, %246 : vector<8x266xf32>
    %c79 = arith.constant 79 : index
    %c0_106 = arith.constant 0 : index
    %c0_107 = arith.constant 0 : index
    %248 = vector.load %arg6[%c79, %c0_106, %c0_107] : memref<121x8x266xf32, #tpu.memory_space<vmem>>, vector<1x8x266xf32>
    %249 = vector.shape_cast %248 : vector<1x8x266xf32> to vector<8x266xf32>
    %250 = arith.mulf %249, %108 : vector<8x266xf32>
    %251 = arith.addf %243, %250 : vector<8x266xf32>
    %c90 = arith.constant 90 : index
    %c0_108 = arith.constant 0 : index
    %c0_109 = arith.constant 0 : index
    %252 = vector.load %arg6[%c90, %c0_108, %c0_109] : memref<121x8x266xf32, #tpu.memory_space<vmem>>, vector<1x8x266xf32>
    %253 = vector.shape_cast %252 : vector<1x8x266xf32> to vector<8x266xf32>
    %254 = arith.mulf %253, %109 : vector<8x266xf32>
    %255 = arith.addf %247, %254 : vector<8x266xf32>
    %c101 = arith.constant 101 : index
    %c0_110 = arith.constant 0 : index
    %c0_111 = arith.constant 0 : index
    %256 = vector.load %arg6[%c101, %c0_110, %c0_111] : memref<121x8x266xf32, #tpu.memory_space<vmem>>, vector<1x8x266xf32>
    %257 = vector.shape_cast %256 : vector<1x8x266xf32> to vector<8x266xf32>
    %258 = arith.mulf %257, %110 : vector<8x266xf32>
    %259 = arith.addf %251, %258 : vector<8x266xf32>
    %c112 = arith.constant 112 : index
    %c0_112 = arith.constant 0 : index
    %c0_113 = arith.constant 0 : index
    %260 = vector.load %arg6[%c112, %c0_112, %c0_113] : memref<121x8x266xf32, #tpu.memory_space<vmem>>, vector<1x8x266xf32>
    %261 = vector.shape_cast %260 : vector<1x8x266xf32> to vector<8x266xf32>
    %262 = arith.mulf %261, %111 : vector<8x266xf32>
    %263 = arith.addf %255, %262 : vector<8x266xf32>
    %264 = arith.addf %263, %259 : vector<8x266xf32>
    %265 = vector.extract_strided_slice %264 {offsets = [0, 2], sizes = [8, 256], strides = [1, 1]} : vector<8x266xf32> to vector<8x256xf32>
    %266 = vector.extract_strided_slice %7 {offsets = [2, 0], sizes = [1, 256], strides = [1, 1]} : vector<11x256xf32> to vector<1x256xf32>
    %267 = vector.broadcast %266 : vector<1x256xf32> to vector<8x256xf32>
    %268 = arith.mulf %265, %267 : vector<8x256xf32>
    %269 = arith.addf %165, %268 : vector<8x256xf32>
    %cst_114 = arith.constant 0.000000e+00 : f32
    %270 = vector.broadcast %cst_114 : f32 to vector<8x266xf32>
    %cst_115 = arith.constant 0.000000e+00 : f32
    %271 = vector.broadcast %cst_115 : f32 to vector<8x266xf32>
    %c3 = arith.constant 3 : index
    %c0_116 = arith.constant 0 : index
    %c0_117 = arith.constant 0 : index
    %272 = vector.load %arg6[%c3, %c0_116, %c0_117] : memref<121x8x266xf32, #tpu.memory_space<vmem>>, vector<1x8x266xf32>
    %273 = vector.shape_cast %272 : vector<1x8x266xf32> to vector<8x266xf32>
    %274 = arith.mulf %273, %101 : vector<8x266xf32>
    %275 = arith.addf %270, %274 : vector<8x266xf32>
    %c14 = arith.constant 14 : index
    %c0_118 = arith.constant 0 : index
    %c0_119 = arith.constant 0 : index
    %276 = vector.load %arg6[%c14, %c0_118, %c0_119] : memref<121x8x266xf32, #tpu.memory_space<vmem>>, vector<1x8x266xf32>
    %277 = vector.shape_cast %276 : vector<1x8x266xf32> to vector<8x266xf32>
    %278 = arith.mulf %277, %102 : vector<8x266xf32>
    %279 = arith.addf %271, %278 : vector<8x266xf32>
    %c25 = arith.constant 25 : index
    %c0_120 = arith.constant 0 : index
    %c0_121 = arith.constant 0 : index
    %280 = vector.load %arg6[%c25, %c0_120, %c0_121] : memref<121x8x266xf32, #tpu.memory_space<vmem>>, vector<1x8x266xf32>
    %281 = vector.shape_cast %280 : vector<1x8x266xf32> to vector<8x266xf32>
    %282 = arith.mulf %281, %103 : vector<8x266xf32>
    %283 = arith.addf %275, %282 : vector<8x266xf32>
    %c36 = arith.constant 36 : index
    %c0_122 = arith.constant 0 : index
    %c0_123 = arith.constant 0 : index
    %284 = vector.load %arg6[%c36, %c0_122, %c0_123] : memref<121x8x266xf32, #tpu.memory_space<vmem>>, vector<1x8x266xf32>
    %285 = vector.shape_cast %284 : vector<1x8x266xf32> to vector<8x266xf32>
    %286 = arith.mulf %285, %104 : vector<8x266xf32>
    %287 = arith.addf %279, %286 : vector<8x266xf32>
    %c47 = arith.constant 47 : index
    %c0_124 = arith.constant 0 : index
    %c0_125 = arith.constant 0 : index
    %288 = vector.load %arg6[%c47, %c0_124, %c0_125] : memref<121x8x266xf32, #tpu.memory_space<vmem>>, vector<1x8x266xf32>
    %289 = vector.shape_cast %288 : vector<1x8x266xf32> to vector<8x266xf32>
    %290 = arith.mulf %289, %105 : vector<8x266xf32>
    %291 = arith.addf %283, %290 : vector<8x266xf32>
    %c58 = arith.constant 58 : index
    %c0_126 = arith.constant 0 : index
    %c0_127 = arith.constant 0 : index
    %292 = vector.load %arg6[%c58, %c0_126, %c0_127] : memref<121x8x266xf32, #tpu.memory_space<vmem>>, vector<1x8x266xf32>
    %293 = vector.shape_cast %292 : vector<1x8x266xf32> to vector<8x266xf32>
    %294 = arith.mulf %293, %106 : vector<8x266xf32>
    %295 = arith.addf %287, %294 : vector<8x266xf32>
    %c69 = arith.constant 69 : index
    %c0_128 = arith.constant 0 : index
    %c0_129 = arith.constant 0 : index
    %296 = vector.load %arg6[%c69, %c0_128, %c0_129] : memref<121x8x266xf32, #tpu.memory_space<vmem>>, vector<1x8x266xf32>
    %297 = vector.shape_cast %296 : vector<1x8x266xf32> to vector<8x266xf32>
    %298 = arith.mulf %297, %107 : vector<8x266xf32>
    %299 = arith.addf %291, %298 : vector<8x266xf32>
    %c80 = arith.constant 80 : index
    %c0_130 = arith.constant 0 : index
    %c0_131 = arith.constant 0 : index
    %300 = vector.load %arg6[%c80, %c0_130, %c0_131] : memref<121x8x266xf32, #tpu.memory_space<vmem>>, vector<1x8x266xf32>
    %301 = vector.shape_cast %300 : vector<1x8x266xf32> to vector<8x266xf32>
    %302 = arith.mulf %301, %108 : vector<8x266xf32>
    %303 = arith.addf %295, %302 : vector<8x266xf32>
    %c91 = arith.constant 91 : index
    %c0_132 = arith.constant 0 : index
    %c0_133 = arith.constant 0 : index
    %304 = vector.load %arg6[%c91, %c0_132, %c0_133] : memref<121x8x266xf32, #tpu.memory_space<vmem>>, vector<1x8x266xf32>
    %305 = vector.shape_cast %304 : vector<1x8x266xf32> to vector<8x266xf32>
    %306 = arith.mulf %305, %109 : vector<8x266xf32>
    %307 = arith.addf %299, %306 : vector<8x266xf32>
    %c102 = arith.constant 102 : index
    %c0_134 = arith.constant 0 : index
    %c0_135 = arith.constant 0 : index
    %308 = vector.load %arg6[%c102, %c0_134, %c0_135] : memref<121x8x266xf32, #tpu.memory_space<vmem>>, vector<1x8x266xf32>
    %309 = vector.shape_cast %308 : vector<1x8x266xf32> to vector<8x266xf32>
    %310 = arith.mulf %309, %110 : vector<8x266xf32>
    %311 = arith.addf %303, %310 : vector<8x266xf32>
    %c113 = arith.constant 113 : index
    %c0_136 = arith.constant 0 : index
    %c0_137 = arith.constant 0 : index
    %312 = vector.load %arg6[%c113, %c0_136, %c0_137] : memref<121x8x266xf32, #tpu.memory_space<vmem>>, vector<1x8x266xf32>
    %313 = vector.shape_cast %312 : vector<1x8x266xf32> to vector<8x266xf32>
    %314 = arith.mulf %313, %111 : vector<8x266xf32>
    %315 = arith.addf %307, %314 : vector<8x266xf32>
    %316 = arith.addf %315, %311 : vector<8x266xf32>
    %317 = vector.extract_strided_slice %316 {offsets = [0, 3], sizes = [8, 256], strides = [1, 1]} : vector<8x266xf32> to vector<8x256xf32>
    %318 = vector.extract_strided_slice %7 {offsets = [3, 0], sizes = [1, 256], strides = [1, 1]} : vector<11x256xf32> to vector<1x256xf32>
    %319 = vector.broadcast %318 : vector<1x256xf32> to vector<8x256xf32>
    %320 = arith.mulf %317, %319 : vector<8x256xf32>
    %321 = arith.addf %217, %320 : vector<8x256xf32>
    %cst_138 = arith.constant 0.000000e+00 : f32
    %322 = vector.broadcast %cst_138 : f32 to vector<8x266xf32>
    %cst_139 = arith.constant 0.000000e+00 : f32
    %323 = vector.broadcast %cst_139 : f32 to vector<8x266xf32>
    %c4 = arith.constant 4 : index
    %c0_140 = arith.constant 0 : index
    %c0_141 = arith.constant 0 : index
    %324 = vector.load %arg6[%c4, %c0_140, %c0_141] : memref<121x8x266xf32, #tpu.memory_space<vmem>>, vector<1x8x266xf32>
    %325 = vector.shape_cast %324 : vector<1x8x266xf32> to vector<8x266xf32>
    %326 = arith.mulf %325, %101 : vector<8x266xf32>
    %327 = arith.addf %322, %326 : vector<8x266xf32>
    %c15 = arith.constant 15 : index
    %c0_142 = arith.constant 0 : index
    %c0_143 = arith.constant 0 : index
    %328 = vector.load %arg6[%c15, %c0_142, %c0_143] : memref<121x8x266xf32, #tpu.memory_space<vmem>>, vector<1x8x266xf32>
    %329 = vector.shape_cast %328 : vector<1x8x266xf32> to vector<8x266xf32>
    %330 = arith.mulf %329, %102 : vector<8x266xf32>
    %331 = arith.addf %323, %330 : vector<8x266xf32>
    %c26 = arith.constant 26 : index
    %c0_144 = arith.constant 0 : index
    %c0_145 = arith.constant 0 : index
    %332 = vector.load %arg6[%c26, %c0_144, %c0_145] : memref<121x8x266xf32, #tpu.memory_space<vmem>>, vector<1x8x266xf32>
    %333 = vector.shape_cast %332 : vector<1x8x266xf32> to vector<8x266xf32>
    %334 = arith.mulf %333, %103 : vector<8x266xf32>
    %335 = arith.addf %327, %334 : vector<8x266xf32>
    %c37 = arith.constant 37 : index
    %c0_146 = arith.constant 0 : index
    %c0_147 = arith.constant 0 : index
    %336 = vector.load %arg6[%c37, %c0_146, %c0_147] : memref<121x8x266xf32, #tpu.memory_space<vmem>>, vector<1x8x266xf32>
    %337 = vector.shape_cast %336 : vector<1x8x266xf32> to vector<8x266xf32>
    %338 = arith.mulf %337, %104 : vector<8x266xf32>
    %339 = arith.addf %331, %338 : vector<8x266xf32>
    %c48 = arith.constant 48 : index
    %c0_148 = arith.constant 0 : index
    %c0_149 = arith.constant 0 : index
    %340 = vector.load %arg6[%c48, %c0_148, %c0_149] : memref<121x8x266xf32, #tpu.memory_space<vmem>>, vector<1x8x266xf32>
    %341 = vector.shape_cast %340 : vector<1x8x266xf32> to vector<8x266xf32>
    %342 = arith.mulf %341, %105 : vector<8x266xf32>
    %343 = arith.addf %335, %342 : vector<8x266xf32>
    %c59 = arith.constant 59 : index
    %c0_150 = arith.constant 0 : index
    %c0_151 = arith.constant 0 : index
    %344 = vector.load %arg6[%c59, %c0_150, %c0_151] : memref<121x8x266xf32, #tpu.memory_space<vmem>>, vector<1x8x266xf32>
    %345 = vector.shape_cast %344 : vector<1x8x266xf32> to vector<8x266xf32>
    %346 = arith.mulf %345, %106 : vector<8x266xf32>
    %347 = arith.addf %339, %346 : vector<8x266xf32>
    %c70 = arith.constant 70 : index
    %c0_152 = arith.constant 0 : index
    %c0_153 = arith.constant 0 : index
    %348 = vector.load %arg6[%c70, %c0_152, %c0_153] : memref<121x8x266xf32, #tpu.memory_space<vmem>>, vector<1x8x266xf32>
    %349 = vector.shape_cast %348 : vector<1x8x266xf32> to vector<8x266xf32>
    %350 = arith.mulf %349, %107 : vector<8x266xf32>
    %351 = arith.addf %343, %350 : vector<8x266xf32>
    %c81 = arith.constant 81 : index
    %c0_154 = arith.constant 0 : index
    %c0_155 = arith.constant 0 : index
    %352 = vector.load %arg6[%c81, %c0_154, %c0_155] : memref<121x8x266xf32, #tpu.memory_space<vmem>>, vector<1x8x266xf32>
    %353 = vector.shape_cast %352 : vector<1x8x266xf32> to vector<8x266xf32>
    %354 = arith.mulf %353, %108 : vector<8x266xf32>
    %355 = arith.addf %347, %354 : vector<8x266xf32>
    %c92 = arith.constant 92 : index
    %c0_156 = arith.constant 0 : index
    %c0_157 = arith.constant 0 : index
    %356 = vector.load %arg6[%c92, %c0_156, %c0_157] : memref<121x8x266xf32, #tpu.memory_space<vmem>>, vector<1x8x266xf32>
    %357 = vector.shape_cast %356 : vector<1x8x266xf32> to vector<8x266xf32>
    %358 = arith.mulf %357, %109 : vector<8x266xf32>
    %359 = arith.addf %351, %358 : vector<8x266xf32>
    %c103 = arith.constant 103 : index
    %c0_158 = arith.constant 0 : index
    %c0_159 = arith.constant 0 : index
    %360 = vector.load %arg6[%c103, %c0_158, %c0_159] : memref<121x8x266xf32, #tpu.memory_space<vmem>>, vector<1x8x266xf32>
    %361 = vector.shape_cast %360 : vector<1x8x266xf32> to vector<8x266xf32>
    %362 = arith.mulf %361, %110 : vector<8x266xf32>
    %363 = arith.addf %355, %362 : vector<8x266xf32>
    %c114 = arith.constant 114 : index
    %c0_160 = arith.constant 0 : index
    %c0_161 = arith.constant 0 : index
    %364 = vector.load %arg6[%c114, %c0_160, %c0_161] : memref<121x8x266xf32, #tpu.memory_space<vmem>>, vector<1x8x266xf32>
    %365 = vector.shape_cast %364 : vector<1x8x266xf32> to vector<8x266xf32>
    %366 = arith.mulf %365, %111 : vector<8x266xf32>
    %367 = arith.addf %359, %366 : vector<8x266xf32>
    %368 = arith.addf %367, %363 : vector<8x266xf32>
    %369 = vector.extract_strided_slice %368 {offsets = [0, 4], sizes = [8, 256], strides = [1, 1]} : vector<8x266xf32> to vector<8x256xf32>
    %370 = vector.extract_strided_slice %7 {offsets = [4, 0], sizes = [1, 256], strides = [1, 1]} : vector<11x256xf32> to vector<1x256xf32>
    %371 = vector.broadcast %370 : vector<1x256xf32> to vector<8x256xf32>
    %372 = arith.mulf %369, %371 : vector<8x256xf32>
    %373 = arith.addf %269, %372 : vector<8x256xf32>
    %cst_162 = arith.constant 0.000000e+00 : f32
    %374 = vector.broadcast %cst_162 : f32 to vector<8x266xf32>
    %cst_163 = arith.constant 0.000000e+00 : f32
    %375 = vector.broadcast %cst_163 : f32 to vector<8x266xf32>
    %c5 = arith.constant 5 : index
    %c0_164 = arith.constant 0 : index
    %c0_165 = arith.constant 0 : index
    %376 = vector.load %arg6[%c5, %c0_164, %c0_165] : memref<121x8x266xf32, #tpu.memory_space<vmem>>, vector<1x8x266xf32>
    %377 = vector.shape_cast %376 : vector<1x8x266xf32> to vector<8x266xf32>
    %378 = arith.mulf %377, %101 : vector<8x266xf32>
    %379 = arith.addf %374, %378 : vector<8x266xf32>
    %c16 = arith.constant 16 : index
    %c0_166 = arith.constant 0 : index
    %c0_167 = arith.constant 0 : index
    %380 = vector.load %arg6[%c16, %c0_166, %c0_167] : memref<121x8x266xf32, #tpu.memory_space<vmem>>, vector<1x8x266xf32>
    %381 = vector.shape_cast %380 : vector<1x8x266xf32> to vector<8x266xf32>
    %382 = arith.mulf %381, %102 : vector<8x266xf32>
    %383 = arith.addf %375, %382 : vector<8x266xf32>
    %c27 = arith.constant 27 : index
    %c0_168 = arith.constant 0 : index
    %c0_169 = arith.constant 0 : index
    %384 = vector.load %arg6[%c27, %c0_168, %c0_169] : memref<121x8x266xf32, #tpu.memory_space<vmem>>, vector<1x8x266xf32>
    %385 = vector.shape_cast %384 : vector<1x8x266xf32> to vector<8x266xf32>
    %386 = arith.mulf %385, %103 : vector<8x266xf32>
    %387 = arith.addf %379, %386 : vector<8x266xf32>
    %c38 = arith.constant 38 : index
    %c0_170 = arith.constant 0 : index
    %c0_171 = arith.constant 0 : index
    %388 = vector.load %arg6[%c38, %c0_170, %c0_171] : memref<121x8x266xf32, #tpu.memory_space<vmem>>, vector<1x8x266xf32>
    %389 = vector.shape_cast %388 : vector<1x8x266xf32> to vector<8x266xf32>
    %390 = arith.mulf %389, %104 : vector<8x266xf32>
    %391 = arith.addf %383, %390 : vector<8x266xf32>
    %c49 = arith.constant 49 : index
    %c0_172 = arith.constant 0 : index
    %c0_173 = arith.constant 0 : index
    %392 = vector.load %arg6[%c49, %c0_172, %c0_173] : memref<121x8x266xf32, #tpu.memory_space<vmem>>, vector<1x8x266xf32>
    %393 = vector.shape_cast %392 : vector<1x8x266xf32> to vector<8x266xf32>
    %394 = arith.mulf %393, %105 : vector<8x266xf32>
    %395 = arith.addf %387, %394 : vector<8x266xf32>
    %c60 = arith.constant 60 : index
    %c0_174 = arith.constant 0 : index
    %c0_175 = arith.constant 0 : index
    %396 = vector.load %arg6[%c60, %c0_174, %c0_175] : memref<121x8x266xf32, #tpu.memory_space<vmem>>, vector<1x8x266xf32>
    %397 = vector.shape_cast %396 : vector<1x8x266xf32> to vector<8x266xf32>
    %398 = arith.mulf %397, %106 : vector<8x266xf32>
    %399 = arith.addf %391, %398 : vector<8x266xf32>
    %c71 = arith.constant 71 : index
    %c0_176 = arith.constant 0 : index
    %c0_177 = arith.constant 0 : index
    %400 = vector.load %arg6[%c71, %c0_176, %c0_177] : memref<121x8x266xf32, #tpu.memory_space<vmem>>, vector<1x8x266xf32>
    %401 = vector.shape_cast %400 : vector<1x8x266xf32> to vector<8x266xf32>
    %402 = arith.mulf %401, %107 : vector<8x266xf32>
    %403 = arith.addf %395, %402 : vector<8x266xf32>
    %c82 = arith.constant 82 : index
    %c0_178 = arith.constant 0 : index
    %c0_179 = arith.constant 0 : index
    %404 = vector.load %arg6[%c82, %c0_178, %c0_179] : memref<121x8x266xf32, #tpu.memory_space<vmem>>, vector<1x8x266xf32>
    %405 = vector.shape_cast %404 : vector<1x8x266xf32> to vector<8x266xf32>
    %406 = arith.mulf %405, %108 : vector<8x266xf32>
    %407 = arith.addf %399, %406 : vector<8x266xf32>
    %c93 = arith.constant 93 : index
    %c0_180 = arith.constant 0 : index
    %c0_181 = arith.constant 0 : index
    %408 = vector.load %arg6[%c93, %c0_180, %c0_181] : memref<121x8x266xf32, #tpu.memory_space<vmem>>, vector<1x8x266xf32>
    %409 = vector.shape_cast %408 : vector<1x8x266xf32> to vector<8x266xf32>
    %410 = arith.mulf %409, %109 : vector<8x266xf32>
    %411 = arith.addf %403, %410 : vector<8x266xf32>
    %c104 = arith.constant 104 : index
    %c0_182 = arith.constant 0 : index
    %c0_183 = arith.constant 0 : index
    %412 = vector.load %arg6[%c104, %c0_182, %c0_183] : memref<121x8x266xf32, #tpu.memory_space<vmem>>, vector<1x8x266xf32>
    %413 = vector.shape_cast %412 : vector<1x8x266xf32> to vector<8x266xf32>
    %414 = arith.mulf %413, %110 : vector<8x266xf32>
    %415 = arith.addf %407, %414 : vector<8x266xf32>
    %c115 = arith.constant 115 : index
    %c0_184 = arith.constant 0 : index
    %c0_185 = arith.constant 0 : index
    %416 = vector.load %arg6[%c115, %c0_184, %c0_185] : memref<121x8x266xf32, #tpu.memory_space<vmem>>, vector<1x8x266xf32>
    %417 = vector.shape_cast %416 : vector<1x8x266xf32> to vector<8x266xf32>
    %418 = arith.mulf %417, %111 : vector<8x266xf32>
    %419 = arith.addf %411, %418 : vector<8x266xf32>
    %420 = arith.addf %419, %415 : vector<8x266xf32>
    %421 = vector.extract_strided_slice %420 {offsets = [0, 5], sizes = [8, 256], strides = [1, 1]} : vector<8x266xf32> to vector<8x256xf32>
    %422 = vector.extract_strided_slice %7 {offsets = [5, 0], sizes = [1, 256], strides = [1, 1]} : vector<11x256xf32> to vector<1x256xf32>
    %423 = vector.broadcast %422 : vector<1x256xf32> to vector<8x256xf32>
    %424 = arith.mulf %421, %423 : vector<8x256xf32>
    %425 = arith.addf %321, %424 : vector<8x256xf32>
    %cst_186 = arith.constant 0.000000e+00 : f32
    %426 = vector.broadcast %cst_186 : f32 to vector<8x266xf32>
    %cst_187 = arith.constant 0.000000e+00 : f32
    %427 = vector.broadcast %cst_187 : f32 to vector<8x266xf32>
    %c6 = arith.constant 6 : index
    %c0_188 = arith.constant 0 : index
    %c0_189 = arith.constant 0 : index
    %428 = vector.load %arg6[%c6, %c0_188, %c0_189] : memref<121x8x266xf32, #tpu.memory_space<vmem>>, vector<1x8x266xf32>
    %429 = vector.shape_cast %428 : vector<1x8x266xf32> to vector<8x266xf32>
    %430 = arith.mulf %429, %101 : vector<8x266xf32>
    %431 = arith.addf %426, %430 : vector<8x266xf32>
    %c17 = arith.constant 17 : index
    %c0_190 = arith.constant 0 : index
    %c0_191 = arith.constant 0 : index
    %432 = vector.load %arg6[%c17, %c0_190, %c0_191] : memref<121x8x266xf32, #tpu.memory_space<vmem>>, vector<1x8x266xf32>
    %433 = vector.shape_cast %432 : vector<1x8x266xf32> to vector<8x266xf32>
    %434 = arith.mulf %433, %102 : vector<8x266xf32>
    %435 = arith.addf %427, %434 : vector<8x266xf32>
    %c28 = arith.constant 28 : index
    %c0_192 = arith.constant 0 : index
    %c0_193 = arith.constant 0 : index
    %436 = vector.load %arg6[%c28, %c0_192, %c0_193] : memref<121x8x266xf32, #tpu.memory_space<vmem>>, vector<1x8x266xf32>
    %437 = vector.shape_cast %436 : vector<1x8x266xf32> to vector<8x266xf32>
    %438 = arith.mulf %437, %103 : vector<8x266xf32>
    %439 = arith.addf %431, %438 : vector<8x266xf32>
    %c39 = arith.constant 39 : index
    %c0_194 = arith.constant 0 : index
    %c0_195 = arith.constant 0 : index
    %440 = vector.load %arg6[%c39, %c0_194, %c0_195] : memref<121x8x266xf32, #tpu.memory_space<vmem>>, vector<1x8x266xf32>
    %441 = vector.shape_cast %440 : vector<1x8x266xf32> to vector<8x266xf32>
    %442 = arith.mulf %441, %104 : vector<8x266xf32>
    %443 = arith.addf %435, %442 : vector<8x266xf32>
    %c50 = arith.constant 50 : index
    %c0_196 = arith.constant 0 : index
    %c0_197 = arith.constant 0 : index
    %444 = vector.load %arg6[%c50, %c0_196, %c0_197] : memref<121x8x266xf32, #tpu.memory_space<vmem>>, vector<1x8x266xf32>
    %445 = vector.shape_cast %444 : vector<1x8x266xf32> to vector<8x266xf32>
    %446 = arith.mulf %445, %105 : vector<8x266xf32>
    %447 = arith.addf %439, %446 : vector<8x266xf32>
    %c61 = arith.constant 61 : index
    %c0_198 = arith.constant 0 : index
    %c0_199 = arith.constant 0 : index
    %448 = vector.load %arg6[%c61, %c0_198, %c0_199] : memref<121x8x266xf32, #tpu.memory_space<vmem>>, vector<1x8x266xf32>
    %449 = vector.shape_cast %448 : vector<1x8x266xf32> to vector<8x266xf32>
    %450 = arith.mulf %449, %106 : vector<8x266xf32>
    %451 = arith.addf %443, %450 : vector<8x266xf32>
    %c72 = arith.constant 72 : index
    %c0_200 = arith.constant 0 : index
    %c0_201 = arith.constant 0 : index
    %452 = vector.load %arg6[%c72, %c0_200, %c0_201] : memref<121x8x266xf32, #tpu.memory_space<vmem>>, vector<1x8x266xf32>
    %453 = vector.shape_cast %452 : vector<1x8x266xf32> to vector<8x266xf32>
    %454 = arith.mulf %453, %107 : vector<8x266xf32>
    %455 = arith.addf %447, %454 : vector<8x266xf32>
    %c83 = arith.constant 83 : index
    %c0_202 = arith.constant 0 : index
    %c0_203 = arith.constant 0 : index
    %456 = vector.load %arg6[%c83, %c0_202, %c0_203] : memref<121x8x266xf32, #tpu.memory_space<vmem>>, vector<1x8x266xf32>
    %457 = vector.shape_cast %456 : vector<1x8x266xf32> to vector<8x266xf32>
    %458 = arith.mulf %457, %108 : vector<8x266xf32>
    %459 = arith.addf %451, %458 : vector<8x266xf32>
    %c94 = arith.constant 94 : index
    %c0_204 = arith.constant 0 : index
    %c0_205 = arith.constant 0 : index
    %460 = vector.load %arg6[%c94, %c0_204, %c0_205] : memref<121x8x266xf32, #tpu.memory_space<vmem>>, vector<1x8x266xf32>
    %461 = vector.shape_cast %460 : vector<1x8x266xf32> to vector<8x266xf32>
    %462 = arith.mulf %461, %109 : vector<8x266xf32>
    %463 = arith.addf %455, %462 : vector<8x266xf32>
    %c105 = arith.constant 105 : index
    %c0_206 = arith.constant 0 : index
    %c0_207 = arith.constant 0 : index
    %464 = vector.load %arg6[%c105, %c0_206, %c0_207] : memref<121x8x266xf32, #tpu.memory_space<vmem>>, vector<1x8x266xf32>
    %465 = vector.shape_cast %464 : vector<1x8x266xf32> to vector<8x266xf32>
    %466 = arith.mulf %465, %110 : vector<8x266xf32>
    %467 = arith.addf %459, %466 : vector<8x266xf32>
    %c116 = arith.constant 116 : index
    %c0_208 = arith.constant 0 : index
    %c0_209 = arith.constant 0 : index
    %468 = vector.load %arg6[%c116, %c0_208, %c0_209] : memref<121x8x266xf32, #tpu.memory_space<vmem>>, vector<1x8x266xf32>
    %469 = vector.shape_cast %468 : vector<1x8x266xf32> to vector<8x266xf32>
    %470 = arith.mulf %469, %111 : vector<8x266xf32>
    %471 = arith.addf %463, %470 : vector<8x266xf32>
    %472 = arith.addf %471, %467 : vector<8x266xf32>
    %473 = vector.extract_strided_slice %472 {offsets = [0, 6], sizes = [8, 256], strides = [1, 1]} : vector<8x266xf32> to vector<8x256xf32>
    %474 = vector.extract_strided_slice %7 {offsets = [6, 0], sizes = [1, 256], strides = [1, 1]} : vector<11x256xf32> to vector<1x256xf32>
    %475 = vector.broadcast %474 : vector<1x256xf32> to vector<8x256xf32>
    %476 = arith.mulf %473, %475 : vector<8x256xf32>
    %477 = arith.addf %373, %476 : vector<8x256xf32>
    %cst_210 = arith.constant 0.000000e+00 : f32
    %478 = vector.broadcast %cst_210 : f32 to vector<8x266xf32>
    %cst_211 = arith.constant 0.000000e+00 : f32
    %479 = vector.broadcast %cst_211 : f32 to vector<8x266xf32>
    %c7 = arith.constant 7 : index
    %c0_212 = arith.constant 0 : index
    %c0_213 = arith.constant 0 : index
    %480 = vector.load %arg6[%c7, %c0_212, %c0_213] : memref<121x8x266xf32, #tpu.memory_space<vmem>>, vector<1x8x266xf32>
    %481 = vector.shape_cast %480 : vector<1x8x266xf32> to vector<8x266xf32>
    %482 = arith.mulf %481, %101 : vector<8x266xf32>
    %483 = arith.addf %478, %482 : vector<8x266xf32>
    %c18 = arith.constant 18 : index
    %c0_214 = arith.constant 0 : index
    %c0_215 = arith.constant 0 : index
    %484 = vector.load %arg6[%c18, %c0_214, %c0_215] : memref<121x8x266xf32, #tpu.memory_space<vmem>>, vector<1x8x266xf32>
    %485 = vector.shape_cast %484 : vector<1x8x266xf32> to vector<8x266xf32>
    %486 = arith.mulf %485, %102 : vector<8x266xf32>
    %487 = arith.addf %479, %486 : vector<8x266xf32>
    %c29 = arith.constant 29 : index
    %c0_216 = arith.constant 0 : index
    %c0_217 = arith.constant 0 : index
    %488 = vector.load %arg6[%c29, %c0_216, %c0_217] : memref<121x8x266xf32, #tpu.memory_space<vmem>>, vector<1x8x266xf32>
    %489 = vector.shape_cast %488 : vector<1x8x266xf32> to vector<8x266xf32>
    %490 = arith.mulf %489, %103 : vector<8x266xf32>
    %491 = arith.addf %483, %490 : vector<8x266xf32>
    %c40 = arith.constant 40 : index
    %c0_218 = arith.constant 0 : index
    %c0_219 = arith.constant 0 : index
    %492 = vector.load %arg6[%c40, %c0_218, %c0_219] : memref<121x8x266xf32, #tpu.memory_space<vmem>>, vector<1x8x266xf32>
    %493 = vector.shape_cast %492 : vector<1x8x266xf32> to vector<8x266xf32>
    %494 = arith.mulf %493, %104 : vector<8x266xf32>
    %495 = arith.addf %487, %494 : vector<8x266xf32>
    %c51 = arith.constant 51 : index
    %c0_220 = arith.constant 0 : index
    %c0_221 = arith.constant 0 : index
    %496 = vector.load %arg6[%c51, %c0_220, %c0_221] : memref<121x8x266xf32, #tpu.memory_space<vmem>>, vector<1x8x266xf32>
    %497 = vector.shape_cast %496 : vector<1x8x266xf32> to vector<8x266xf32>
    %498 = arith.mulf %497, %105 : vector<8x266xf32>
    %499 = arith.addf %491, %498 : vector<8x266xf32>
    %c62 = arith.constant 62 : index
    %c0_222 = arith.constant 0 : index
    %c0_223 = arith.constant 0 : index
    %500 = vector.load %arg6[%c62, %c0_222, %c0_223] : memref<121x8x266xf32, #tpu.memory_space<vmem>>, vector<1x8x266xf32>
    %501 = vector.shape_cast %500 : vector<1x8x266xf32> to vector<8x266xf32>
    %502 = arith.mulf %501, %106 : vector<8x266xf32>
    %503 = arith.addf %495, %502 : vector<8x266xf32>
    %c73 = arith.constant 73 : index
    %c0_224 = arith.constant 0 : index
    %c0_225 = arith.constant 0 : index
    %504 = vector.load %arg6[%c73, %c0_224, %c0_225] : memref<121x8x266xf32, #tpu.memory_space<vmem>>, vector<1x8x266xf32>
    %505 = vector.shape_cast %504 : vector<1x8x266xf32> to vector<8x266xf32>
    %506 = arith.mulf %505, %107 : vector<8x266xf32>
    %507 = arith.addf %499, %506 : vector<8x266xf32>
    %c84 = arith.constant 84 : index
    %c0_226 = arith.constant 0 : index
    %c0_227 = arith.constant 0 : index
    %508 = vector.load %arg6[%c84, %c0_226, %c0_227] : memref<121x8x266xf32, #tpu.memory_space<vmem>>, vector<1x8x266xf32>
    %509 = vector.shape_cast %508 : vector<1x8x266xf32> to vector<8x266xf32>
    %510 = arith.mulf %509, %108 : vector<8x266xf32>
    %511 = arith.addf %503, %510 : vector<8x266xf32>
    %c95 = arith.constant 95 : index
    %c0_228 = arith.constant 0 : index
    %c0_229 = arith.constant 0 : index
    %512 = vector.load %arg6[%c95, %c0_228, %c0_229] : memref<121x8x266xf32, #tpu.memory_space<vmem>>, vector<1x8x266xf32>
    %513 = vector.shape_cast %512 : vector<1x8x266xf32> to vector<8x266xf32>
    %514 = arith.mulf %513, %109 : vector<8x266xf32>
    %515 = arith.addf %507, %514 : vector<8x266xf32>
    %c106 = arith.constant 106 : index
    %c0_230 = arith.constant 0 : index
    %c0_231 = arith.constant 0 : index
    %516 = vector.load %arg6[%c106, %c0_230, %c0_231] : memref<121x8x266xf32, #tpu.memory_space<vmem>>, vector<1x8x266xf32>
    %517 = vector.shape_cast %516 : vector<1x8x266xf32> to vector<8x266xf32>
    %518 = arith.mulf %517, %110 : vector<8x266xf32>
    %519 = arith.addf %511, %518 : vector<8x266xf32>
    %c117 = arith.constant 117 : index
    %c0_232 = arith.constant 0 : index
    %c0_233 = arith.constant 0 : index
    %520 = vector.load %arg6[%c117, %c0_232, %c0_233] : memref<121x8x266xf32, #tpu.memory_space<vmem>>, vector<1x8x266xf32>
    %521 = vector.shape_cast %520 : vector<1x8x266xf32> to vector<8x266xf32>
    %522 = arith.mulf %521, %111 : vector<8x266xf32>
    %523 = arith.addf %515, %522 : vector<8x266xf32>
    %524 = arith.addf %523, %519 : vector<8x266xf32>
    %525 = vector.extract_strided_slice %524 {offsets = [0, 7], sizes = [8, 256], strides = [1, 1]} : vector<8x266xf32> to vector<8x256xf32>
    %526 = vector.extract_strided_slice %7 {offsets = [7, 0], sizes = [1, 256], strides = [1, 1]} : vector<11x256xf32> to vector<1x256xf32>
    %527 = vector.broadcast %526 : vector<1x256xf32> to vector<8x256xf32>
    %528 = arith.mulf %525, %527 : vector<8x256xf32>
    %529 = arith.addf %425, %528 : vector<8x256xf32>
    %cst_234 = arith.constant 0.000000e+00 : f32
    %530 = vector.broadcast %cst_234 : f32 to vector<8x266xf32>
    %cst_235 = arith.constant 0.000000e+00 : f32
    %531 = vector.broadcast %cst_235 : f32 to vector<8x266xf32>
    %c8 = arith.constant 8 : index
    %c0_236 = arith.constant 0 : index
    %c0_237 = arith.constant 0 : index
    %532 = vector.load %arg6[%c8, %c0_236, %c0_237] : memref<121x8x266xf32, #tpu.memory_space<vmem>>, vector<1x8x266xf32>
    %533 = vector.shape_cast %532 : vector<1x8x266xf32> to vector<8x266xf32>
    %534 = arith.mulf %533, %101 : vector<8x266xf32>
    %535 = arith.addf %530, %534 : vector<8x266xf32>
    %c19 = arith.constant 19 : index
    %c0_238 = arith.constant 0 : index
    %c0_239 = arith.constant 0 : index
    %536 = vector.load %arg6[%c19, %c0_238, %c0_239] : memref<121x8x266xf32, #tpu.memory_space<vmem>>, vector<1x8x266xf32>
    %537 = vector.shape_cast %536 : vector<1x8x266xf32> to vector<8x266xf32>
    %538 = arith.mulf %537, %102 : vector<8x266xf32>
    %539 = arith.addf %531, %538 : vector<8x266xf32>
    %c30 = arith.constant 30 : index
    %c0_240 = arith.constant 0 : index
    %c0_241 = arith.constant 0 : index
    %540 = vector.load %arg6[%c30, %c0_240, %c0_241] : memref<121x8x266xf32, #tpu.memory_space<vmem>>, vector<1x8x266xf32>
    %541 = vector.shape_cast %540 : vector<1x8x266xf32> to vector<8x266xf32>
    %542 = arith.mulf %541, %103 : vector<8x266xf32>
    %543 = arith.addf %535, %542 : vector<8x266xf32>
    %c41 = arith.constant 41 : index
    %c0_242 = arith.constant 0 : index
    %c0_243 = arith.constant 0 : index
    %544 = vector.load %arg6[%c41, %c0_242, %c0_243] : memref<121x8x266xf32, #tpu.memory_space<vmem>>, vector<1x8x266xf32>
    %545 = vector.shape_cast %544 : vector<1x8x266xf32> to vector<8x266xf32>
    %546 = arith.mulf %545, %104 : vector<8x266xf32>
    %547 = arith.addf %539, %546 : vector<8x266xf32>
    %c52 = arith.constant 52 : index
    %c0_244 = arith.constant 0 : index
    %c0_245 = arith.constant 0 : index
    %548 = vector.load %arg6[%c52, %c0_244, %c0_245] : memref<121x8x266xf32, #tpu.memory_space<vmem>>, vector<1x8x266xf32>
    %549 = vector.shape_cast %548 : vector<1x8x266xf32> to vector<8x266xf32>
    %550 = arith.mulf %549, %105 : vector<8x266xf32>
    %551 = arith.addf %543, %550 : vector<8x266xf32>
    %c63 = arith.constant 63 : index
    %c0_246 = arith.constant 0 : index
    %c0_247 = arith.constant 0 : index
    %552 = vector.load %arg6[%c63, %c0_246, %c0_247] : memref<121x8x266xf32, #tpu.memory_space<vmem>>, vector<1x8x266xf32>
    %553 = vector.shape_cast %552 : vector<1x8x266xf32> to vector<8x266xf32>
    %554 = arith.mulf %553, %106 : vector<8x266xf32>
    %555 = arith.addf %547, %554 : vector<8x266xf32>
    %c74 = arith.constant 74 : index
    %c0_248 = arith.constant 0 : index
    %c0_249 = arith.constant 0 : index
    %556 = vector.load %arg6[%c74, %c0_248, %c0_249] : memref<121x8x266xf32, #tpu.memory_space<vmem>>, vector<1x8x266xf32>
    %557 = vector.shape_cast %556 : vector<1x8x266xf32> to vector<8x266xf32>
    %558 = arith.mulf %557, %107 : vector<8x266xf32>
    %559 = arith.addf %551, %558 : vector<8x266xf32>
    %c85 = arith.constant 85 : index
    %c0_250 = arith.constant 0 : index
    %c0_251 = arith.constant 0 : index
    %560 = vector.load %arg6[%c85, %c0_250, %c0_251] : memref<121x8x266xf32, #tpu.memory_space<vmem>>, vector<1x8x266xf32>
    %561 = vector.shape_cast %560 : vector<1x8x266xf32> to vector<8x266xf32>
    %562 = arith.mulf %561, %108 : vector<8x266xf32>
    %563 = arith.addf %555, %562 : vector<8x266xf32>
    %c96 = arith.constant 96 : index
    %c0_252 = arith.constant 0 : index
    %c0_253 = arith.constant 0 : index
    %564 = vector.load %arg6[%c96, %c0_252, %c0_253] : memref<121x8x266xf32, #tpu.memory_space<vmem>>, vector<1x8x266xf32>
    %565 = vector.shape_cast %564 : vector<1x8x266xf32> to vector<8x266xf32>
    %566 = arith.mulf %565, %109 : vector<8x266xf32>
    %567 = arith.addf %559, %566 : vector<8x266xf32>
    %c107 = arith.constant 107 : index
    %c0_254 = arith.constant 0 : index
    %c0_255 = arith.constant 0 : index
    %568 = vector.load %arg6[%c107, %c0_254, %c0_255] : memref<121x8x266xf32, #tpu.memory_space<vmem>>, vector<1x8x266xf32>
    %569 = vector.shape_cast %568 : vector<1x8x266xf32> to vector<8x266xf32>
    %570 = arith.mulf %569, %110 : vector<8x266xf32>
    %571 = arith.addf %563, %570 : vector<8x266xf32>
    %c118 = arith.constant 118 : index
    %c0_256 = arith.constant 0 : index
    %c0_257 = arith.constant 0 : index
    %572 = vector.load %arg6[%c118, %c0_256, %c0_257] : memref<121x8x266xf32, #tpu.memory_space<vmem>>, vector<1x8x266xf32>
    %573 = vector.shape_cast %572 : vector<1x8x266xf32> to vector<8x266xf32>
    %574 = arith.mulf %573, %111 : vector<8x266xf32>
    %575 = arith.addf %567, %574 : vector<8x266xf32>
    %576 = arith.addf %575, %571 : vector<8x266xf32>
    %577 = vector.extract_strided_slice %576 {offsets = [0, 8], sizes = [8, 256], strides = [1, 1]} : vector<8x266xf32> to vector<8x256xf32>
    %578 = vector.extract_strided_slice %7 {offsets = [8, 0], sizes = [1, 256], strides = [1, 1]} : vector<11x256xf32> to vector<1x256xf32>
    %579 = vector.broadcast %578 : vector<1x256xf32> to vector<8x256xf32>
    %580 = arith.mulf %577, %579 : vector<8x256xf32>
    %581 = arith.addf %477, %580 : vector<8x256xf32>
    %cst_258 = arith.constant 0.000000e+00 : f32
    %582 = vector.broadcast %cst_258 : f32 to vector<8x266xf32>
    %cst_259 = arith.constant 0.000000e+00 : f32
    %583 = vector.broadcast %cst_259 : f32 to vector<8x266xf32>
    %c9 = arith.constant 9 : index
    %c0_260 = arith.constant 0 : index
    %c0_261 = arith.constant 0 : index
    %584 = vector.load %arg6[%c9, %c0_260, %c0_261] : memref<121x8x266xf32, #tpu.memory_space<vmem>>, vector<1x8x266xf32>
    %585 = vector.shape_cast %584 : vector<1x8x266xf32> to vector<8x266xf32>
    %586 = arith.mulf %585, %101 : vector<8x266xf32>
    %587 = arith.addf %582, %586 : vector<8x266xf32>
    %c20 = arith.constant 20 : index
    %c0_262 = arith.constant 0 : index
    %c0_263 = arith.constant 0 : index
    %588 = vector.load %arg6[%c20, %c0_262, %c0_263] : memref<121x8x266xf32, #tpu.memory_space<vmem>>, vector<1x8x266xf32>
    %589 = vector.shape_cast %588 : vector<1x8x266xf32> to vector<8x266xf32>
    %590 = arith.mulf %589, %102 : vector<8x266xf32>
    %591 = arith.addf %583, %590 : vector<8x266xf32>
    %c31 = arith.constant 31 : index
    %c0_264 = arith.constant 0 : index
    %c0_265 = arith.constant 0 : index
    %592 = vector.load %arg6[%c31, %c0_264, %c0_265] : memref<121x8x266xf32, #tpu.memory_space<vmem>>, vector<1x8x266xf32>
    %593 = vector.shape_cast %592 : vector<1x8x266xf32> to vector<8x266xf32>
    %594 = arith.mulf %593, %103 : vector<8x266xf32>
    %595 = arith.addf %587, %594 : vector<8x266xf32>
    %c42 = arith.constant 42 : index
    %c0_266 = arith.constant 0 : index
    %c0_267 = arith.constant 0 : index
    %596 = vector.load %arg6[%c42, %c0_266, %c0_267] : memref<121x8x266xf32, #tpu.memory_space<vmem>>, vector<1x8x266xf32>
    %597 = vector.shape_cast %596 : vector<1x8x266xf32> to vector<8x266xf32>
    %598 = arith.mulf %597, %104 : vector<8x266xf32>
    %599 = arith.addf %591, %598 : vector<8x266xf32>
    %c53 = arith.constant 53 : index
    %c0_268 = arith.constant 0 : index
    %c0_269 = arith.constant 0 : index
    %600 = vector.load %arg6[%c53, %c0_268, %c0_269] : memref<121x8x266xf32, #tpu.memory_space<vmem>>, vector<1x8x266xf32>
    %601 = vector.shape_cast %600 : vector<1x8x266xf32> to vector<8x266xf32>
    %602 = arith.mulf %601, %105 : vector<8x266xf32>
    %603 = arith.addf %595, %602 : vector<8x266xf32>
    %c64 = arith.constant 64 : index
    %c0_270 = arith.constant 0 : index
    %c0_271 = arith.constant 0 : index
    %604 = vector.load %arg6[%c64, %c0_270, %c0_271] : memref<121x8x266xf32, #tpu.memory_space<vmem>>, vector<1x8x266xf32>
    %605 = vector.shape_cast %604 : vector<1x8x266xf32> to vector<8x266xf32>
    %606 = arith.mulf %605, %106 : vector<8x266xf32>
    %607 = arith.addf %599, %606 : vector<8x266xf32>
    %c75 = arith.constant 75 : index
    %c0_272 = arith.constant 0 : index
    %c0_273 = arith.constant 0 : index
    %608 = vector.load %arg6[%c75, %c0_272, %c0_273] : memref<121x8x266xf32, #tpu.memory_space<vmem>>, vector<1x8x266xf32>
    %609 = vector.shape_cast %608 : vector<1x8x266xf32> to vector<8x266xf32>
    %610 = arith.mulf %609, %107 : vector<8x266xf32>
    %611 = arith.addf %603, %610 : vector<8x266xf32>
    %c86 = arith.constant 86 : index
    %c0_274 = arith.constant 0 : index
    %c0_275 = arith.constant 0 : index
    %612 = vector.load %arg6[%c86, %c0_274, %c0_275] : memref<121x8x266xf32, #tpu.memory_space<vmem>>, vector<1x8x266xf32>
    %613 = vector.shape_cast %612 : vector<1x8x266xf32> to vector<8x266xf32>
    %614 = arith.mulf %613, %108 : vector<8x266xf32>
    %615 = arith.addf %607, %614 : vector<8x266xf32>
    %c97 = arith.constant 97 : index
    %c0_276 = arith.constant 0 : index
    %c0_277 = arith.constant 0 : index
    %616 = vector.load %arg6[%c97, %c0_276, %c0_277] : memref<121x8x266xf32, #tpu.memory_space<vmem>>, vector<1x8x266xf32>
    %617 = vector.shape_cast %616 : vector<1x8x266xf32> to vector<8x266xf32>
    %618 = arith.mulf %617, %109 : vector<8x266xf32>
    %619 = arith.addf %611, %618 : vector<8x266xf32>
    %c108 = arith.constant 108 : index
    %c0_278 = arith.constant 0 : index
    %c0_279 = arith.constant 0 : index
    %620 = vector.load %arg6[%c108, %c0_278, %c0_279] : memref<121x8x266xf32, #tpu.memory_space<vmem>>, vector<1x8x266xf32>
    %621 = vector.shape_cast %620 : vector<1x8x266xf32> to vector<8x266xf32>
    %622 = arith.mulf %621, %110 : vector<8x266xf32>
    %623 = arith.addf %615, %622 : vector<8x266xf32>
    %c119 = arith.constant 119 : index
    %c0_280 = arith.constant 0 : index
    %c0_281 = arith.constant 0 : index
    %624 = vector.load %arg6[%c119, %c0_280, %c0_281] : memref<121x8x266xf32, #tpu.memory_space<vmem>>, vector<1x8x266xf32>
    %625 = vector.shape_cast %624 : vector<1x8x266xf32> to vector<8x266xf32>
    %626 = arith.mulf %625, %111 : vector<8x266xf32>
    %627 = arith.addf %619, %626 : vector<8x266xf32>
    %628 = arith.addf %627, %623 : vector<8x266xf32>
    %629 = vector.extract_strided_slice %628 {offsets = [0, 9], sizes = [8, 256], strides = [1, 1]} : vector<8x266xf32> to vector<8x256xf32>
    %630 = vector.extract_strided_slice %7 {offsets = [9, 0], sizes = [1, 256], strides = [1, 1]} : vector<11x256xf32> to vector<1x256xf32>
    %631 = vector.broadcast %630 : vector<1x256xf32> to vector<8x256xf32>
    %632 = arith.mulf %629, %631 : vector<8x256xf32>
    %633 = arith.addf %529, %632 : vector<8x256xf32>
    %cst_282 = arith.constant 0.000000e+00 : f32
    %634 = vector.broadcast %cst_282 : f32 to vector<8x266xf32>
    %cst_283 = arith.constant 0.000000e+00 : f32
    %635 = vector.broadcast %cst_283 : f32 to vector<8x266xf32>
    %c10 = arith.constant 10 : index
    %c0_284 = arith.constant 0 : index
    %c0_285 = arith.constant 0 : index
    %636 = vector.load %arg6[%c10, %c0_284, %c0_285] : memref<121x8x266xf32, #tpu.memory_space<vmem>>, vector<1x8x266xf32>
    %637 = vector.shape_cast %636 : vector<1x8x266xf32> to vector<8x266xf32>
    %638 = arith.mulf %637, %101 : vector<8x266xf32>
    %639 = arith.addf %634, %638 : vector<8x266xf32>
    %c21 = arith.constant 21 : index
    %c0_286 = arith.constant 0 : index
    %c0_287 = arith.constant 0 : index
    %640 = vector.load %arg6[%c21, %c0_286, %c0_287] : memref<121x8x266xf32, #tpu.memory_space<vmem>>, vector<1x8x266xf32>
    %641 = vector.shape_cast %640 : vector<1x8x266xf32> to vector<8x266xf32>
    %642 = arith.mulf %641, %102 : vector<8x266xf32>
    %643 = arith.addf %635, %642 : vector<8x266xf32>
    %c32 = arith.constant 32 : index
    %c0_288 = arith.constant 0 : index
    %c0_289 = arith.constant 0 : index
    %644 = vector.load %arg6[%c32, %c0_288, %c0_289] : memref<121x8x266xf32, #tpu.memory_space<vmem>>, vector<1x8x266xf32>
    %645 = vector.shape_cast %644 : vector<1x8x266xf32> to vector<8x266xf32>
    %646 = arith.mulf %645, %103 : vector<8x266xf32>
    %647 = arith.addf %639, %646 : vector<8x266xf32>
    %c43 = arith.constant 43 : index
    %c0_290 = arith.constant 0 : index
    %c0_291 = arith.constant 0 : index
    %648 = vector.load %arg6[%c43, %c0_290, %c0_291] : memref<121x8x266xf32, #tpu.memory_space<vmem>>, vector<1x8x266xf32>
    %649 = vector.shape_cast %648 : vector<1x8x266xf32> to vector<8x266xf32>
    %650 = arith.mulf %649, %104 : vector<8x266xf32>
    %651 = arith.addf %643, %650 : vector<8x266xf32>
    %c54 = arith.constant 54 : index
    %c0_292 = arith.constant 0 : index
    %c0_293 = arith.constant 0 : index
    %652 = vector.load %arg6[%c54, %c0_292, %c0_293] : memref<121x8x266xf32, #tpu.memory_space<vmem>>, vector<1x8x266xf32>
    %653 = vector.shape_cast %652 : vector<1x8x266xf32> to vector<8x266xf32>
    %654 = arith.mulf %653, %105 : vector<8x266xf32>
    %655 = arith.addf %647, %654 : vector<8x266xf32>
    %c65 = arith.constant 65 : index
    %c0_294 = arith.constant 0 : index
    %c0_295 = arith.constant 0 : index
    %656 = vector.load %arg6[%c65, %c0_294, %c0_295] : memref<121x8x266xf32, #tpu.memory_space<vmem>>, vector<1x8x266xf32>
    %657 = vector.shape_cast %656 : vector<1x8x266xf32> to vector<8x266xf32>
    %658 = arith.mulf %657, %106 : vector<8x266xf32>
    %659 = arith.addf %651, %658 : vector<8x266xf32>
    %c76 = arith.constant 76 : index
    %c0_296 = arith.constant 0 : index
    %c0_297 = arith.constant 0 : index
    %660 = vector.load %arg6[%c76, %c0_296, %c0_297] : memref<121x8x266xf32, #tpu.memory_space<vmem>>, vector<1x8x266xf32>
    %661 = vector.shape_cast %660 : vector<1x8x266xf32> to vector<8x266xf32>
    %662 = arith.mulf %661, %107 : vector<8x266xf32>
    %663 = arith.addf %655, %662 : vector<8x266xf32>
    %c87 = arith.constant 87 : index
    %c0_298 = arith.constant 0 : index
    %c0_299 = arith.constant 0 : index
    %664 = vector.load %arg6[%c87, %c0_298, %c0_299] : memref<121x8x266xf32, #tpu.memory_space<vmem>>, vector<1x8x266xf32>
    %665 = vector.shape_cast %664 : vector<1x8x266xf32> to vector<8x266xf32>
    %666 = arith.mulf %665, %108 : vector<8x266xf32>
    %667 = arith.addf %659, %666 : vector<8x266xf32>
    %c98 = arith.constant 98 : index
    %c0_300 = arith.constant 0 : index
    %c0_301 = arith.constant 0 : index
    %668 = vector.load %arg6[%c98, %c0_300, %c0_301] : memref<121x8x266xf32, #tpu.memory_space<vmem>>, vector<1x8x266xf32>
    %669 = vector.shape_cast %668 : vector<1x8x266xf32> to vector<8x266xf32>
    %670 = arith.mulf %669, %109 : vector<8x266xf32>
    %671 = arith.addf %663, %670 : vector<8x266xf32>
    %c109 = arith.constant 109 : index
    %c0_302 = arith.constant 0 : index
    %c0_303 = arith.constant 0 : index
    %672 = vector.load %arg6[%c109, %c0_302, %c0_303] : memref<121x8x266xf32, #tpu.memory_space<vmem>>, vector<1x8x266xf32>
    %673 = vector.shape_cast %672 : vector<1x8x266xf32> to vector<8x266xf32>
    %674 = arith.mulf %673, %110 : vector<8x266xf32>
    %675 = arith.addf %667, %674 : vector<8x266xf32>
    %c120 = arith.constant 120 : index
    %c0_304 = arith.constant 0 : index
    %c0_305 = arith.constant 0 : index
    %676 = vector.load %arg6[%c120, %c0_304, %c0_305] : memref<121x8x266xf32, #tpu.memory_space<vmem>>, vector<1x8x266xf32>
    %677 = vector.shape_cast %676 : vector<1x8x266xf32> to vector<8x266xf32>
    %678 = arith.mulf %677, %111 : vector<8x266xf32>
    %679 = arith.addf %671, %678 : vector<8x266xf32>
    %680 = arith.addf %679, %675 : vector<8x266xf32>
    %681 = vector.extract_strided_slice %680 {offsets = [0, 10], sizes = [8, 256], strides = [1, 1]} : vector<8x266xf32> to vector<8x256xf32>
    %682 = vector.extract_strided_slice %7 {offsets = [10, 0], sizes = [1, 256], strides = [1, 1]} : vector<11x256xf32> to vector<1x256xf32>
    %683 = vector.broadcast %682 : vector<1x256xf32> to vector<8x256xf32>
    %684 = arith.mulf %681, %683 : vector<8x256xf32>
    %685 = arith.addf %581, %684 : vector<8x256xf32>
    %686 = arith.addf %685, %633 : vector<8x256xf32>
    %687 = vector.broadcast %4 : vector<8x1xf32> to vector<8x256xf32>
    %688 = arith.addf %686, %687 : vector<8x256xf32>
    %689 = arith.mulf %688, %98 : vector<8x256xf32>
    %690 = vector.extract_strided_slice %5 {offsets = [0, 0], sizes = [8, 1], strides = [1, 1]} : vector<8x8xf32> to vector<8x1xf32>
    %691 = vector.extract_strided_slice %689 {offsets = [0, 0], sizes = [1, 256], strides = [1, 1]} : vector<8x256xf32> to vector<1x256xf32>
    %692 = vector.broadcast %690 : vector<8x1xf32> to vector<8x256xf32>
    %693 = vector.broadcast %691 : vector<1x256xf32> to vector<8x256xf32>
    %694 = arith.mulf %692, %693 : vector<8x256xf32>
    %cst_306 = arith.constant 0.000000e+00 : f32
    %695 = vector.broadcast %cst_306 : f32 to vector<8x256xf32>
    %696 = vector.extract_strided_slice %5 {offsets = [0, 1], sizes = [8, 1], strides = [1, 1]} : vector<8x8xf32> to vector<8x1xf32>
    %697 = vector.extract_strided_slice %689 {offsets = [1, 0], sizes = [1, 256], strides = [1, 1]} : vector<8x256xf32> to vector<1x256xf32>
    %698 = vector.broadcast %696 : vector<8x1xf32> to vector<8x256xf32>
    %699 = vector.broadcast %697 : vector<1x256xf32> to vector<8x256xf32>
    %700 = arith.mulf %698, %699 : vector<8x256xf32>
    %701 = arith.addf %695, %700 : vector<8x256xf32>
    %702 = vector.extract_strided_slice %5 {offsets = [0, 2], sizes = [8, 1], strides = [1, 1]} : vector<8x8xf32> to vector<8x1xf32>
    %703 = vector.extract_strided_slice %689 {offsets = [2, 0], sizes = [1, 256], strides = [1, 1]} : vector<8x256xf32> to vector<1x256xf32>
    %704 = vector.broadcast %702 : vector<8x1xf32> to vector<8x256xf32>
    %705 = vector.broadcast %703 : vector<1x256xf32> to vector<8x256xf32>
    %706 = arith.mulf %704, %705 : vector<8x256xf32>
    %707 = arith.addf %694, %706 : vector<8x256xf32>
    %708 = vector.extract_strided_slice %5 {offsets = [0, 3], sizes = [8, 1], strides = [1, 1]} : vector<8x8xf32> to vector<8x1xf32>
    %709 = vector.extract_strided_slice %689 {offsets = [3, 0], sizes = [1, 256], strides = [1, 1]} : vector<8x256xf32> to vector<1x256xf32>
    %710 = vector.broadcast %708 : vector<8x1xf32> to vector<8x256xf32>
    %711 = vector.broadcast %709 : vector<1x256xf32> to vector<8x256xf32>
    %712 = arith.mulf %710, %711 : vector<8x256xf32>
    %713 = arith.addf %701, %712 : vector<8x256xf32>
    %714 = vector.extract_strided_slice %5 {offsets = [0, 4], sizes = [8, 1], strides = [1, 1]} : vector<8x8xf32> to vector<8x1xf32>
    %715 = vector.extract_strided_slice %689 {offsets = [4, 0], sizes = [1, 256], strides = [1, 1]} : vector<8x256xf32> to vector<1x256xf32>
    %716 = vector.broadcast %714 : vector<8x1xf32> to vector<8x256xf32>
    %717 = vector.broadcast %715 : vector<1x256xf32> to vector<8x256xf32>
    %718 = arith.mulf %716, %717 : vector<8x256xf32>
    %719 = arith.addf %707, %718 : vector<8x256xf32>
    %720 = vector.extract_strided_slice %5 {offsets = [0, 5], sizes = [8, 1], strides = [1, 1]} : vector<8x8xf32> to vector<8x1xf32>
    %721 = vector.extract_strided_slice %689 {offsets = [5, 0], sizes = [1, 256], strides = [1, 1]} : vector<8x256xf32> to vector<1x256xf32>
    %722 = vector.broadcast %720 : vector<8x1xf32> to vector<8x256xf32>
    %723 = vector.broadcast %721 : vector<1x256xf32> to vector<8x256xf32>
    %724 = arith.mulf %722, %723 : vector<8x256xf32>
    %725 = arith.addf %713, %724 : vector<8x256xf32>
    %726 = vector.extract_strided_slice %5 {offsets = [0, 6], sizes = [8, 1], strides = [1, 1]} : vector<8x8xf32> to vector<8x1xf32>
    %727 = vector.extract_strided_slice %689 {offsets = [6, 0], sizes = [1, 256], strides = [1, 1]} : vector<8x256xf32> to vector<1x256xf32>
    %728 = vector.broadcast %726 : vector<8x1xf32> to vector<8x256xf32>
    %729 = vector.broadcast %727 : vector<1x256xf32> to vector<8x256xf32>
    %730 = arith.mulf %728, %729 : vector<8x256xf32>
    %731 = arith.addf %719, %730 : vector<8x256xf32>
    %732 = vector.extract_strided_slice %5 {offsets = [0, 7], sizes = [8, 1], strides = [1, 1]} : vector<8x8xf32> to vector<8x1xf32>
    %733 = vector.extract_strided_slice %689 {offsets = [7, 0], sizes = [1, 256], strides = [1, 1]} : vector<8x256xf32> to vector<1x256xf32>
    %734 = vector.broadcast %732 : vector<8x1xf32> to vector<8x256xf32>
    %735 = vector.broadcast %733 : vector<1x256xf32> to vector<8x256xf32>
    %736 = arith.mulf %734, %735 : vector<8x256xf32>
    %737 = arith.addf %725, %736 : vector<8x256xf32>
    %738 = arith.addf %731, %737 : vector<8x256xf32>
    %739 = vector.broadcast %6 : vector<8x1xf32> to vector<8x256xf32>
    %740 = arith.addf %738, %739 : vector<8x256xf32>
    %c0_307 = arith.constant 0 : index
    %c0_308 = arith.constant 0 : index
    %c0_309 = arith.constant 0 : index
    %741 = vector.load %arg11[%c0_307, %c0_308, %c0_309] : memref<1x8x256xf32, #tpu.memory_space<vmem>>, vector<1x8x256xf32>
    %742 = vector.shape_cast %741 : vector<1x8x256xf32> to vector<8x256xf32>
    %743 = vector.shape_cast %740 : vector<8x256xf32> to vector<1x8x256xf32>
    tpu.vector_store %arg11[%c0_307, %c0_308, %c0_309], %743 {strides = array<i32>} : memref<1x8x256xf32, #tpu.memory_space<vmem>>, vector<1x8x256xf32>,
    return
  }
  func.func @transform_0(%arg0: i32) -> (i32, i32, i32) {
    %c0_i32 = arith.constant 0 : i32
    %c0_i32_0 = arith.constant 0 : i32
    %c0_i32_1 = arith.constant 0 : i32
    return %arg0, %c0_i32, %c0_i32_0 : i32, i32, i32
  }
  func.func @transform_1(%arg0: i32) -> (i32, i32) {
    %c0_i32 = arith.constant 0 : i32
    %c0_i32_0 = arith.constant 0 : i32
    %c0_i32_1 = arith.constant 0 : i32
    return %c0_i32, %c0_i32_0 : i32, i32
  }
  func.func @transform_2(%arg0: i32) -> (i32, i32) {
    %c0_i32 = arith.constant 0 : i32
    %c0_i32_0 = arith.constant 0 : i32
    %c0_i32_1 = arith.constant 0 : i32
    return %c0_i32, %c0_i32_0 : i32, i32
  }
  func.func @transform_3(%arg0: i32) -> (i32, i32) {
    %c0_i32 = arith.constant 0 : i32
    %c0_i32_0 = arith.constant 0 : i32
    %c0_i32_1 = arith.constant 0 : i32
    return %c0_i32, %c0_i32_0 : i32, i32
  }
  func.func @transform_4(%arg0: i32) -> (i32, i32) {
    %c0_i32 = arith.constant 0 : i32
    %c0_i32_0 = arith.constant 0 : i32
    %c0_i32_1 = arith.constant 0 : i32
    return %c0_i32, %c0_i32_0 : i32, i32
  }
  func.func @transform_5(%arg0: i32) -> (i32, i32, i32) {
    %c0_i32 = arith.constant 0 : i32
    %c0_i32_0 = arith.constant 0 : i32
    %c0_i32_1 = arith.constant 0 : i32
    %c0_i32_2 = arith.constant 0 : i32
    return %c0_i32, %c0_i32_0, %c0_i32_1 : i32, i32, i32
  }
  func.func @transform_6(%arg0: i32) -> (i32, i32) {
    %c0_i32 = arith.constant 0 : i32
    %c0_i32_0 = arith.constant 0 : i32
    %c0_i32_1 = arith.constant 0 : i32
    return %c0_i32, %c0_i32_0 : i32, i32
  }
  func.func @transform_7(%arg0: i32) -> (i32, i32) {
    %c0_i32 = arith.constant 0 : i32
    %c0_i32_0 = arith.constant 0 : i32
    %c0_i32_1 = arith.constant 0 : i32
    return %c0_i32, %c0_i32_0 : i32, i32
  }
  func.func @transform_8(%arg0: i32) -> (i32, i32) {
    %c0_i32 = arith.constant 0 : i32
    %c0_i32_0 = arith.constant 0 : i32
    %c0_i32_1 = arith.constant 0 : i32
    return %c0_i32, %c0_i32_0 : i32, i32
  }
  func.func @transform_9(%arg0: i32) -> (i32, i32) {
    %c0_i32 = arith.constant 0 : i32
    %c0_i32_0 = arith.constant 0 : i32
    %c0_i32_1 = arith.constant 0 : i32
    return %c0_i32, %c0_i32_0 : i32, i32
  }
  func.func @transform_10(%arg0: i32) -> (i32, i32, i32) {
    %c0_i32 = arith.constant 0 : i32
    %c0_i32_0 = arith.constant 0 : i32
    %c0_i32_1 = arith.constant 0 : i32
    return %arg0, %c0_i32, %c0_i32_0 : i32, i32, i32
  }
}

</mosaic_0001>

<llo_original>
// kernel: tpu_custom_call.1
$region0: #{tpu_custom_call.1}
  #allocation0 [shape = 'u32[]', space=smem, size = 0x4, offset = 0x4, fixed_abs, tag = 'smem constant byte address 0x4 - core index']
  #allocation1 [shape = 'u32[144,128]{1,0:T(1,128)}', space=vmem, size = 0x12000, scoped, tag = 'internal scratch']
  %s0 = inlined_call_operand.vmem [shape: f32[2,4,256], index: 0, kind: input, shape index: {}]
  %s1 = inlined_call_operand.vmem [shape: f32[4,1], index: 1, kind: input, shape index: {}]
  %s2 = inlined_call_operand.vmem [shape: f32[4,1], index: 2, kind: input, shape index: {}]
  %s3 = inlined_call_operand.vmem [shape: f32[16,4], index: 3, kind: input, shape index: {}]
  %s4 = inlined_call_operand.vmem [shape: f32[16,1], index: 4, kind: input, shape index: {}]
  %s5 = inlined_call_operand.vmem [shape: f32[121,8,266], index: 5, kind: input, shape index: {}]
  %s6 = inlined_call_operand.vmem [shape: f32[8,1], index: 6, kind: input, shape index: {}]
  %s7 = inlined_call_operand.vmem [shape: f32[8,8], index: 7, kind: input, shape index: {}]
  %s8 = inlined_call_operand.vmem [shape: f32[8,1], index: 8, kind: input, shape index: {}]
  %s9 = inlined_call_operand.vmem [shape: f32[11,256], index: 9, kind: input, shape index: {}]
  %s10 = inlined_call_operand.hbm [shape: f32[2,8,256], index: 10, kind: output, shape index: {}]
  %s11 = sld [smem:[#allocation0]]
  $region73: #{tpu_custom_call.1} parent=0
    _
  %s13 = ssub.s32 1, %s11
  %s14 = scalar_select 0, %s13, %s11
  $region1: #{tpu_custom_call.1} parent=0
    #allocation2 [shape = 'u8[16384]{0}', space=vmem, size = 0x4000, scoped, tag = 'output window, operand 0']
    #allocation3 [shape = 's32[2]{0}', space=sflag, size = 0x8, scoped, tag = 'scoped memory for tpu_custom_call.1']
    %15 = vsyncpa [#allocation3], 0
    %s16 = scalar_lea.sflag [#allocation3], 1
    %17 = vsyncpa %s16, 0
    loop: start=0, step=1, limit=4
    $region2: #{tpu_custom_call.1} parent=1 // loop_pre_header
      _
    $region3: #{tpu_custom_call.1} parent=1 // loop_header
      %s19 = sphi 0, %s23
      %p20 = scmp.ge.s32.totalorder %s19, 4
      %s29 = sphi 0, %s31
      %s32 = sphi 0, %s29
      %s33 = sphi 0, %s32
      %s49 = sphi 0, %s33
      %s53 = sphi 0, %s53
      %s55 = sphi 0, %s53
      %s56 = sphi 0, %s55
      %s70 = sphi 0, %s56
      %s74 = sphi 0, %s74
      %s76 = sphi 0, %s74
      %s77 = sphi 0, %s76
      %s91 = sphi 0, %s77
      %s95 = sphi 0, %s95
      %s97 = sphi 0, %s95
      %s98 = sphi 0, %s97
      %s112 = sphi 0, %s98
      %s116 = sphi 0, %s116
      %s118 = sphi 0, %s116
      %s119 = sphi 0, %s118
      %s133 = sphi 0, %s119
      %s137 = sphi 0, %s137
      %s139 = sphi 0, %s137
      %s140 = sphi 0, %s139
      %s154 = sphi 0, %s140
      %s158 = sphi 0, %s158
      %s160 = sphi 0, %s158
      %s161 = sphi 0, %s160
      %s175 = sphi 0, %s161
      %s179 = sphi 0, %s179
      %s181 = sphi 0, %s179
      %s182 = sphi 0, %s181
      %s196 = sphi 0, %s182
      %s200 = sphi 0, %s200
      %s202 = sphi 0, %s200
      %s203 = sphi 0, %s202
      %s217 = sphi 0, %s203
      %s221 = sphi 0, %s221
      %s223 = sphi 0, %s221
      %s224 = sphi 0, %s223
      %s238 = sphi 0, %s224
      %s244 = sphi 0, %s246
      %s247 = sphi 0, %s244
      %s248 = sphi 0, %s247
      %s264 = sphi 0, %s248
    $region4: #{tpu_custom_call.1} parent=1 // loop_header_branch
      %22 = sbr.rel (%p20) target = $region8
    $region5: #{tpu_custom_call.1} parent=1 // loop_body
      %s24 = ssub.s32 %s19, 1
      %s25 = ssub.s32 %s19, 2
      %s26 = sadd.s32 %s19, 1
      %s27 = ssub.s32 %s19, %s26
      %p28 = scmp.eq.s32.totalorder %s27, 0
      %s30 = sadd.s32 %s29, 1
      %s31 = scalar_select %p28, %s29, %s30
      %p34 = pneg %p28
      %p35 = scmp.eq.s32.totalorder %s19, 1
      %p36 = por %p34, %p35
      %p37 = scmp.ne.s32.totalorder %s29, %s32
      %p38 = scmp.eq.s32.totalorder %s19, 0
      %p39 = por %p37, %p38
      %p40 = scmp.ne.s32.totalorder %s29, %s32
      %p41 = scmp.eq.s32.totalorder %s24, 1
      %p42 = por %p40, %p41
      %p43 = scmp.ne.s32.totalorder %s32, %s33
      %p44 = scmp.eq.s32.totalorder %s24, 0
      %p45 = por %p43, %p44
      %p46 = scmp.ne.s32.totalorder %s32, %s33
      %p47 = scmp.eq.s32.totalorder %s25, 1
      %p48 = por %p46, %p47
      %p50 = scmp.ne.s32.totalorder %s33, %s49
      %p51 = scmp.eq.s32.totalorder %s25, 0
      %p52 = por %p50, %p51
      %s54 = sadd.s32 %s53, 1
      %p57 = scmp.eq.s32.totalorder %s19, 1
      %p58 = scmp.ne.s32.totalorder %s53, %s55
      %p59 = scmp.eq.s32.totalorder %s19, 0
      %p60 = por %p58, %p59
      %p61 = scmp.ne.s32.totalorder %s53, %s55
      %p62 = scmp.eq.s32.totalorder %s24, 1
      %p63 = por %p61, %p62
      %p64 = scmp.ne.s32.totalorder %s55, %s56
      %p65 = scmp.eq.s32.totalorder %s24, 0
      %p66 = por %p64, %p65
      %p67 = scmp.ne.s32.totalorder %s55, %s56
      %p68 = scmp.eq.s32.totalorder %s25, 1
      %p69 = por %p67, %p68
      %p71 = scmp.ne.s32.totalorder %s56, %s70
      %p72 = scmp.eq.s32.totalorder %s25, 0
      %p73 = por %p71, %p72
      %s75 = sadd.s32 %s74, 1
      %p78 = scmp.eq.s32.totalorder %s19, 1
      %p79 = scmp.ne.s32.totalorder %s74, %s76
      %p80 = scmp.eq.s32.totalorder %s19, 0
      %p81 = por %p79, %p80
      %p82 = scmp.ne.s32.totalorder %s74, %s76
      %p83 = scmp.eq.s32.totalorder %s24, 1
      %p84 = por %p82, %p83
      %p85 = scmp.ne.s32.totalorder %s76, %s77
      %p86 = scmp.eq.s32.totalorder %s24, 0
      %p87 = por %p85, %p86
      %p88 = scmp.ne.s32.totalorder %s76, %s77
      %p89 = scmp.eq.s32.totalorder %s25, 1
      %p90 = por %p88, %p89
      %p92 = scmp.ne.s32.totalorder %s77, %s91
      %p93 = scmp.eq.s32.totalorder %s25, 0
      %p94 = por %p92, %p93
      %s96 = sadd.s32 %s95, 1
      %p99 = scmp.eq.s32.totalorder %s19, 1
      %p100 = scmp.ne.s32.totalorder %s95, %s97
      %p101 = scmp.eq.s32.totalorder %s19, 0
      %p102 = por %p100, %p101
      %p103 = scmp.ne.s32.totalorder %s95, %s97
      %p104 = scmp.eq.s32.totalorder %s24, 1
      %p105 = por %p103, %p104
      %p106 = scmp.ne.s32.totalorder %s97, %s98
      %p107 = scmp.eq.s32.totalorder %s24, 0
      %p108 = por %p106, %p107
      %p109 = scmp.ne.s32.totalorder %s97, %s98
      %p110 = scmp.eq.s32.totalorder %s25, 1
      %p111 = por %p109, %p110
      %p113 = scmp.ne.s32.totalorder %s98, %s112
      %p114 = scmp.eq.s32.totalorder %s25, 0
      %p115 = por %p113, %p114
      %s117 = sadd.s32 %s116, 1
      %p120 = scmp.eq.s32.totalorder %s19, 1
      %p121 = scmp.ne.s32.totalorder %s116, %s118
      %p122 = scmp.eq.s32.totalorder %s19, 0
      %p123 = por %p121, %p122
      %p124 = scmp.ne.s32.totalorder %s116, %s118
      %p125 = scmp.eq.s32.totalorder %s24, 1
      %p126 = por %p124, %p125
      %p127 = scmp.ne.s32.totalorder %s118, %s119
      %p128 = scmp.eq.s32.totalorder %s24, 0
      %p129 = por %p127, %p128
      %p130 = scmp.ne.s32.totalorder %s118, %s119
      %p131 = scmp.eq.s32.totalorder %s25, 1
      %p132 = por %p130, %p131
      %p134 = scmp.ne.s32.totalorder %s119, %s133
      %p135 = scmp.eq.s32.totalorder %s25, 0
      %p136 = por %p134, %p135
      %s138 = sadd.s32 %s137, 1
      %p141 = scmp.eq.s32.totalorder %s19, 1
      %p142 = scmp.ne.s32.totalorder %s137, %s139
      %p143 = scmp.eq.s32.totalorder %s19, 0
      %p144 = por %p142, %p143
      %p145 = scmp.ne.s32.totalorder %s137, %s139
      %p146 = scmp.eq.s32.totalorder %s24, 1
      %p147 = por %p145, %p146
      %p148 = scmp.ne.s32.totalorder %s139, %s140
      %p149 = scmp.eq.s32.totalorder %s24, 0
      %p150 = por %p148, %p149
      %p151 = scmp.ne.s32.totalorder %s139, %s140
      %p152 = scmp.eq.s32.totalorder %s25, 1
      %p153 = por %p151, %p152
      %p155 = scmp.ne.s32.totalorder %s140, %s154
      %p156 = scmp.eq.s32.totalorder %s25, 0
      %p157 = por %p155, %p156
      %s159 = sadd.s32 %s158, 1
      %p162 = scmp.eq.s32.totalorder %s19, 1
      %p163 = scmp.ne.s32.totalorder %s158, %s160
      %p164 = scmp.eq.s32.totalorder %s19, 0
      %p165 = por %p163, %p164
      %p166 = scmp.ne.s32.totalorder %s158, %s160
      %p167 = scmp.eq.s32.totalorder %s24, 1
      %p168 = por %p166, %p167
      %p169 = scmp.ne.s32.totalorder %s160, %s161
      %p170 = scmp.eq.s32.totalorder %s24, 0
      %p171 = por %p169, %p170
      %p172 = scmp.ne.s32.totalorder %s160, %s161
      %p173 = scmp.eq.s32.totalorder %s25, 1
      %p174 = por %p172, %p173
      %p176 = scmp.ne.s32.totalorder %s161, %s175
      %p177 = scmp.eq.s32.totalorder %s25, 0
      %p178 = por %p176, %p177
      %s180 = sadd.s32 %s179, 1
      %p183 = scmp.eq.s32.totalorder %s19, 1
      %p184 = scmp.ne.s32.totalorder %s179, %s181
      %p185 = scmp.eq.s32.totalorder %s19, 0
      %p186 = por %p184, %p185
      %p187 = scmp.ne.s32.totalorder %s179, %s181
      %p188 = scmp.eq.s32.totalorder %s24, 1
      %p189 = por %p187, %p188
      %p190 = scmp.ne.s32.totalorder %s181, %s182
      %p191 = scmp.eq.s32.totalorder %s24, 0
      %p192 = por %p190, %p191
      %p193 = scmp.ne.s32.totalorder %s181, %s182
      %p194 = scmp.eq.s32.totalorder %s25, 1
      %p195 = por %p193, %p194
      %p197 = scmp.ne.s32.totalorder %s182, %s196
      %p198 = scmp.eq.s32.totalorder %s25, 0
      %p199 = por %p197, %p198
      %s201 = sadd.s32 %s200, 1
      %p204 = scmp.eq.s32.totalorder %s19, 1
      %p205 = scmp.ne.s32.totalorder %s200, %s202
      %p206 = scmp.eq.s32.totalorder %s19, 0
      %p207 = por %p205, %p206
      %p208 = scmp.ne.s32.totalorder %s200, %s202
      %p209 = scmp.eq.s32.totalorder %s24, 1
      %p210 = por %p208, %p209
      %p211 = scmp.ne.s32.totalorder %s202, %s203
      %p212 = scmp.eq.s32.totalorder %s24, 0
      %p213 = por %p211, %p212
      %p214 = scmp.ne.s32.totalorder %s202, %s203
      %p215 = scmp.eq.s32.totalorder %s25, 1
      %p216 = por %p214, %p215
      %p218 = scmp.ne.s32.totalorder %s203, %s217
      %p219 = scmp.eq.s32.totalorder %s25, 0
      %p220 = por %p218, %p219
      %s222 = sadd.s32 %s221, 1
      %p225 = scmp.eq.s32.totalorder %s19, 1
      %p226 = scmp.ne.s32.totalorder %s221, %s223
      %p227 = scmp.eq.s32.totalorder %s19, 0
      %p228 = por %p226, %p227
      %p229 = scmp.ne.s32.totalorder %s221, %s223
      %p230 = scmp.eq.s32.totalorder %s24, 1
      %p231 = por %p229, %p230
      %p232 = scmp.ne.s32.totalorder %s223, %s224
      %p233 = scmp.eq.s32.totalorder %s24, 0
      %p234 = por %p232, %p233
      %p235 = scmp.ne.s32.totalorder %s223, %s224
      %p236 = scmp.eq.s32.totalorder %s25, 1
      %p237 = por %p235, %p236
      %p239 = scmp.ne.s32.totalorder %s224, %s238
      %p240 = scmp.eq.s32.totalorder %s25, 0
      %p241 = por %p239, %p240
      %s242 = ssub.s32 %s19, %s26
      %p243 = scmp.eq.s32.totalorder %s242, 0
      %s245 = sadd.s32 %s244, 1
      %s246 = scalar_select %p243, %s244, %s245
      %p249 = pneg %p243
      %p250 = scmp.eq.s32.totalorder %s19, 1
      %p251 = por %p249, %p250
      %p252 = scmp.ne.s32.totalorder %s244, %s247
      %p253 = scmp.eq.s32.totalorder %s19, 0
      %p254 = por %p252, %p253
      %p255 = scmp.ne.s32.totalorder %s244, %s247
      %p256 = scmp.eq.s32.totalorder %s24, 1
      %p257 = por %p255, %p256
      %p258 = scmp.ne.s32.totalorder %s247, %s248
      %p259 = scmp.eq.s32.totalorder %s24, 0
      %p260 = por %p258, %p259
      %p261 = scmp.ne.s32.totalorder %s247, %s248
      %p262 = scmp.eq.s32.totalorder %s25, 1
      %p263 = por %p261, %p262
      %p265 = scmp.ne.s32.totalorder %s248, %s264
      %p266 = scmp.eq.s32.totalorder %s25, 0
      %p267 = por %p265, %p266
      %p268 = scmp.le.s32.totalorder 1, %s19
      %p269 = scmp.lt.s32.totalorder %s19, 3
      %p270 = pnand %p268, %p269
      %p271 = pneg %p270
      // Predicated region
      $region9: #{tpu_custom_call.1} parent=5 // pred_check
        _
      $region10: #{tpu_custom_call.1} parent=5 // pred_check_branch
        %273 = sbr.rel (%p270) target = $region12
      $region11: #{tpu_custom_call.1} parent=5 // pred_region
        %s274 = ssub.s32 %s19, 1
        // Predicated region
        $region13: #{tpu_custom_call.1} parent=11 // pred_check
          %p275 = pneg %p66
        $region14: #{tpu_custom_call.1} parent=11 // pred_check_branch
          %277 = sbr.rel (%p275) target = $region16
        $region15: #{tpu_custom_call.1} parent=11 // pred_region
          _
        $region16: #{tpu_custom_call.1} parent=11 // pred_fallthru
          _
        // Predicated region
        $region17: #{tpu_custom_call.1} parent=11 // pred_check
          %p278 = pneg %p87
        $region18: #{tpu_custom_call.1} parent=11 // pred_check_branch
          %280 = sbr.rel (%p278) target = $region20
        $region19: #{tpu_custom_call.1} parent=11 // pred_region
          _
        $region20: #{tpu_custom_call.1} parent=11 // pred_fallthru
          _
        // Predicated region
        $region21: #{tpu_custom_call.1} parent=11 // pred_check
          %p281 = pneg %p108
        $region22: #{tpu_custom_call.1} parent=11 // pred_check_branch
          %283 = sbr.rel (%p281) target = $region24
        $region23: #{tpu_custom_call.1} parent=11 // pred_region
          _
        $region24: #{tpu_custom_call.1} parent=11 // pred_fallthru
          _
        // Predicated region
        $region25: #{tpu_custom_call.1} parent=11 // pred_check
          %p284 = pneg %p129
        $region26: #{tpu_custom_call.1} parent=11 // pred_check_branch
          %286 = sbr.rel (%p284) target = $region28
        $region27: #{tpu_custom_call.1} parent=11 // pred_region
          _
        $region28: #{tpu_custom_call.1} parent=11 // pred_fallthru
          _
        // Predicated region
        $region29: #{tpu_custom_call.1} parent=11 // pred_check
          %p287 = pneg %p150
        $region30: #{tpu_custom_call.1} parent=11 // pred_check_branch
          %289 = sbr.rel (%p287) target = $region32
        $region31: #{tpu_custom_call.1} parent=11 // pred_region
          _
        $region32: #{tpu_custom_call.1} parent=11 // pred_fallthru
          _
        // Predicated region
        $region33: #{tpu_custom_call.1} parent=11 // pred_check
          %p290 = pneg %p171
        $region34: #{tpu_custom_call.1} parent=11 // pred_check_branch
          %292 = sbr.rel (%p290) target = $region36
        $region35: #{tpu_custom_call.1} parent=11 // pred_region
          _
        $region36: #{tpu_custom_call.1} parent=11 // pred_fallthru
          _
        // Predicated region
        $region37: #{tpu_custom_call.1} parent=11 // pred_check
          %p293 = pneg %p192
        $region38: #{tpu_custom_call.1} parent=11 // pred_check_branch
          %295 = sbr.rel (%p293) target = $region40
        $region39: #{tpu_custom_call.1} parent=11 // pred_region
          _
        $region40: #{tpu_custom_call.1} parent=11 // pred_fallthru
          _
        // Predicated region
        $region41: #{tpu_custom_call.1} parent=11 // pred_check
          %p296 = pneg %p213
        $region42: #{tpu_custom_call.1} parent=11 // pred_check_branch
          %298 = sbr.rel (%p296) target = $region44
        $region43: #{tpu_custom_call.1} parent=11 // pred_region
          _
        $region44: #{tpu_custom_call.1} parent=11 // pred_fallthru
          _
        // Predicated region
        $region45: #{tpu_custom_call.1} parent=11 // pred_check
          %p299 = pneg %p234
        $region46: #{tpu_custom_call.1} parent=11 // pred_check_branch
          %301 = sbr.rel (%p299) target = $region48
        $region47: #{tpu_custom_call.1} parent=11 // pred_region
          _
        $region48: #{tpu_custom_call.1} parent=11 // pred_fallthru
          _
      $region12: #{tpu_custom_call.1} parent=5 // pred_fallthru
        _
      %p302 = scmp.lt.s32.totalorder %s19, 2
      // Predicated region
      $region49: #{tpu_custom_call.1} parent=5 // pred_check
        %p303 = pneg %p302
      $region50: #{tpu_custom_call.1} parent=5 // pred_check_branch
        %305 = sbr.rel (%p303) target = $region52
      $region51: #{tpu_custom_call.1} parent=5 // pred_region
        // Predicated region
        $region53: #{tpu_custom_call.1} parent=51 // pred_check
          %p306 = pneg %p39
        $region54: #{tpu_custom_call.1} parent=51 // pred_check_branch
          %308 = sbr.rel (%p306) target = $region56
        $region55: #{tpu_custom_call.1} parent=51 // pred_region
          %p309 = scmp.lt.s32.totalorder %s19, 1
          %s310 = scalar_select %p309, %s19, 1
          %s311 = smul.addr %s310, 2
          %s312 = smul.addr %s311, 4
          %s313 = scalar_lea.vmem %s0, %s312
        $region56: #{tpu_custom_call.1} parent=51 // pred_fallthru
          _
      $region52: #{tpu_custom_call.1} parent=5 // pred_fallthru
        _
      %p314 = scmp.le.s32.totalorder 1, %s19
      %p315 = scmp.lt.s32.totalorder %s19, 3
      %p316 = pnand %p314, %p315
      %p317 = pneg %p316
      // Predicated region
      $region57: #{tpu_custom_call.1} parent=5 // pred_check
        _
      $region58: #{tpu_custom_call.1} parent=5 // pred_check_branch
        %319 = sbr.rel (%p316) target = $region60
      $region59: #{tpu_custom_call.1} parent=5 // pred_region
        %s320 = ssub.s32 %s19, 1
        %p321 = scmp.lt.s32.totalorder %s24, 1
        %s322 = scalar_select %p321, %s24, 1
        %s323 = smul.addr %s322, 2
        %s324 = smul.addr %s323, 4
        %s325 = scalar_lea.vmem %s0, %s324
        %p326 = pneg %p45
        %p327 = pneg %p42
        %p328 = pneg %p66
        %p329 = pneg %p63
        %p330 = pneg %p87
        %p331 = pneg %p84
        %p332 = pneg %p108
        %p333 = pneg %p105
        %p334 = pneg %p129
        %p335 = pneg %p126
        %p336 = pneg %p150
        %p337 = pneg %p147
        %p338 = pneg %p171
        %p339 = pneg %p168
        %p340 = pneg %p192
        %p341 = pneg %p189
        %p342 = pneg %p213
        %p343 = pneg %p210
        %p344 = pneg %p234
        %p345 = pneg %p231
        %p346 = pneg %p260
        %p347 = pneg %p257
        %s348 = sand.u32 %s247, 1
        %s349 = scalar_lea.sflag [#allocation3], %s348
        %s350 = sand.u32 %s247, 1
        %s351 = smul.addr %s350, 16
        %s352 = scalar_lea.vmem [#allocation2], %s351
        %p353 = scmp.lt.s32.totalorder %s24, 1
        %s354 = scalar_select %p353, %s24, 1
        %s355 = smul.addr %s354, 2
        %s356 = smul.addr %s355, 4
        %s357 = scalar_lea.vmem %s0, %s356
        %v358 = vld [vmem:[%s1] sm:$0xf]
        %v359 = vld [vmem:[%s2] sm:$0xf]
        %v360 = vld [vmem:[%s3] sm:$0xff]
        %v361 = vld [vmem:[%s3 + $0x8] sm:$0xff]
        %v362 = vld [vmem:[%s4] sm:$0xff]
        %v363 = vld [vmem:[%s4 + $0x8] sm:$0xff]
        %v364 = vld [vmem:[%s6] sm:$0xff]
        %v365 = vld [vmem:[%s7] sm:$0xff]
        %v366 = vld [vmem:[%s8] sm:$0xff]
        %v367 = vld [vmem:[%s9] sm:$0xff]
        %v368 = vld [vmem:[%s9 + $0x8] sm:$0xff]
        %v369 = vld [vmem:[%s9 + $0x10] sm:$0x7]
        %v370 = vld [vmem:[%s9 + $0x18] sm:$0x7]
        %v371 = vld [vmem:[%s357] sm:$0xff]
        %v373 = vcombine.high %v371, %v371
        %vm375 = vcmask 1043456
        %v376 = vsel %vm375, %v371, 0.0
        %v377 = vrot.slane %v376, 4
        %v378 = vadd.f32 %v376, %v377
        %v379 = vrot.slane %v378, 2
        %v380 = vadd.f32 %v378, %v379
        %v381 = vrot.slane %v380, 1
        %v382 = vadd.f32 %v380, %v381
        %v383 = vsel %vm375, %v373, 0.0
        %v384 = vrot.slane %v383, 4
        %v385 = vadd.f32 %v383, %v384
        %v386 = vrot.slane %v385, 2
        %v387 = vadd.f32 %v385, %v386
        %v388 = vrot.slane %v387, 1
        %v389 = vadd.f32 %v387, %v388
        %v390 = vrcp.pop 4.0
        %v391 = vmul.f32 %v382, %v390
        %v392 = vmul.f32 %v389, %v390
        %v395 = vcombine.low %v391, %v392
        %v397 = vsub.f32 %v371, %v395
        %v398 = vmul.f32 %v397, %v397
        %v400 = vcombine.high %v398, %v398
        %v402 = vsel %vm375, %v398, 0.0
        %v403 = vrot.slane %v402, 4
        %v404 = vadd.f32 %v402, %v403
        %v405 = vrot.slane %v404, 2
        %v406 = vadd.f32 %v404, %v405
        %v407 = vrot.slane %v406, 1
        %v408 = vadd.f32 %v406, %v407
        %v409 = vsel %vm375, %v400, 0.0
        %v410 = vrot.slane %v409, 4
        %v411 = vadd.f32 %v409, %v410
        %v412 = vrot.slane %v411, 2
        %v413 = vadd.f32 %v411, %v412
        %v414 = vrot.slane %v413, 1
        %v415 = vadd.f32 %v413, %v414
        %v416 = vmul.f32 %v408, %v390
        %v417 = vmul.f32 %v415, %v390
        %v418 = vadd.f32 %v416, 1e-06
        %v419 = vadd.f32 %v417, 1e-06
        %v420 = vrsqrt.pop %v418
        %v421 = vrsqrt.pop %v419
        %v424 = vcombine.low %v420, %v421
        %v426 = vmul.f32 %v397, %v424
        %428 = vset.pattern.permute.xlu0 0
        %429 = vperm.xlu0 %428, %v358
        %v430 = vpop.permute.xlu0 %429
        %v432 = vunpack.c.l.s4 839922192
        %v433 = vunpack.c.0.s8 %v432
        %v434 = vlaneseq
        %v435 = vshrl.u32 %v434, 7
        %v436 = vsub.s32 %v433, %v435
        %v437 = vrot.slane %v430, %v436
        %v439 = vmul.f32 %v426, %v437
        %441 = vset.pattern.permute.xlu0 0
        %442 = vperm.xlu0 %441, %v359
        %v443 = vpop.permute.xlu0 %442
        %v445 = vunpack.c.l.s4 839922192
        %v446 = vunpack.c.0.s8 %v445
        %v447 = vlaneseq
        %v448 = vshrl.u32 %v447, 7
        %v449 = vsub.s32 %v446, %v448
        %v450 = vrot.slane %v443, %v449
        %v452 = vadd.f32 %v439, %v450
        %454 = vset.pattern.permute.xlu0 0
        %455 = vperm.xlu0 %454, %v360
        %v456 = vpop.permute.xlu0 %455
        %459 = vset.pattern.permute.xlu0 0
        %460 = vperm.xlu0 %459, %v361
        %v461 = vpop.permute.xlu0 %460
        %v464 = vlaneseq
        %v465 = vshrl.u32 %v464, 7
        %v466 = vsub.s32 0, %v465
        %v467 = vrot.slane %v452, %v466
        %v468 = vlaneseq
        %v469 = vshrl.u32 %v468, 7
        %v470 = vsub.s32 4, %v469
        %v471 = vrot.slane %v452, %v470
        %v474 = vlaneseq
        %v475 = vshrl.u32 %v474, 7
        %v476 = vsub.s32 0, %v475
        %v477 = vrot.slane %v467, %v476
        %v478 = vlaneseq
        %v479 = vshrl.u32 %v478, 7
        %v480 = vsub.s32 0, %v479
        %v481 = vrot.slane %v471, %v480
        %v482 = vmul.f32 %v456, %v477
        %v483 = vmul.f32 %v456, %v481
        %v484 = vmul.f32 %v461, %v477
        %v485 = vmul.f32 %v461, %v481
        %486 = vset.pattern.permute.xlu0 1
        %487 = vperm.xlu0 %486, %v360
        %v488 = vpop.permute.xlu0 %487
        %490 = vset.pattern.permute.xlu0 1
        %491 = vperm.xlu0 %490, %v361
        %v492 = vpop.permute.xlu0 %491
        %v494 = vlaneseq
        %v495 = vshrl.u32 %v494, 7
        %v496 = vsub.s32 1, %v495
        %v497 = vrot.slane %v452, %v496
        %v498 = vlaneseq
        %v499 = vshrl.u32 %v498, 7
        %v500 = vsub.s32 5, %v499
        %v501 = vrot.slane %v452, %v500
        %v504 = vlaneseq
        %v505 = vshrl.u32 %v504, 7
        %v506 = vsub.s32 1, %v505
        %v507 = vrot.slane %v497, %v506
        %v508 = vlaneseq
        %v509 = vshrl.u32 %v508, 7
        %v510 = vsub.s32 1, %v509
        %v511 = vrot.slane %v501, %v510
        %v512 = vmul.f32 %v488, %v507
        %v513 = vmul.f32 %v488, %v511
        %v514 = vmul.f32 %v492, %v507
        %v515 = vmul.f32 %v492, %v511
        %v516 = vadd.f32 %v512, 0.0
        %v517 = vadd.f32 %v513, 0.0
        %v518 = vadd.f32 %v514, 0.0
        %v519 = vadd.f32 %v515, 0.0
        %520 = vset.pattern.permute.xlu0 2
        %521 = vperm.xlu0 %520, %v360
        %v522 = vpop.permute.xlu0 %521
        %524 = vset.pattern.permute.xlu0 2
        %525 = vperm.xlu0 %524, %v361
        %v526 = vpop.permute.xlu0 %525
        %v528 = vlaneseq
        %v529 = vshrl.u32 %v528, 7
        %v530 = vsub.s32 2, %v529
        %v531 = vrot.slane %v452, %v530
        %v532 = vlaneseq
        %v533 = vshrl.u32 %v532, 7
        %v534 = vsub.s32 6, %v533
        %v535 = vrot.slane %v452, %v534
        %v538 = vlaneseq
        %v539 = vshrl.u32 %v538, 7
        %v540 = vsub.s32 2, %v539
        %v541 = vrot.slane %v531, %v540
        %v542 = vlaneseq
        %v543 = vshrl.u32 %v542, 7
        %v544 = vsub.s32 2, %v543
        %v545 = vrot.slane %v535, %v544
        %v546 = vmul.f32 %v522, %v541
        %v547 = vmul.f32 %v522, %v545
        %v548 = vmul.f32 %v526, %v541
        %v549 = vmul.f32 %v526, %v545
        %v550 = vadd.f32 %v482, %v546
        %v551 = vadd.f32 %v483, %v547
        %v552 = vadd.f32 %v484, %v548
        %v553 = vadd.f32 %v485, %v549
        %554 = vset.pattern.permute.xlu0 3
        %555 = vperm.xlu0 %554, %v360
        %v556 = vpop.permute.xlu0 %555
        %558 = vset.pattern.permute.xlu0 3
        %559 = vperm.xlu0 %558, %v361
        %v560 = vpop.permute.xlu0 %559
        %v562 = vlaneseq
        %v563 = vshrl.u32 %v562, 7
        %v564 = vsub.s32 3, %v563
        %v565 = vrot.slane %v452, %v564
        %v566 = vlaneseq
        %v567 = vshrl.u32 %v566, 7
        %v568 = vsub.s32 7, %v567
        %v569 = vrot.slane %v452, %v568
        %v572 = vlaneseq
        %v573 = vshrl.u32 %v572, 7
        %v574 = vsub.s32 3, %v573
        %v575 = vrot.slane %v565, %v574
        %v576 = vlaneseq
        %v577 = vshrl.u32 %v576, 7
        %v578 = vsub.s32 3, %v577
        %v579 = vrot.slane %v569, %v578
        %v580 = vmul.f32 %v556, %v575
        %v581 = vmul.f32 %v556, %v579
        %v582 = vmul.f32 %v560, %v575
        %v583 = vmul.f32 %v560, %v579
        %v584 = vadd.f32 %v516, %v580
        %v585 = vadd.f32 %v517, %v581
        %v586 = vadd.f32 %v518, %v582
        %v587 = vadd.f32 %v519, %v583
        %v588 = vadd.f32 %v550, %v584
        %v589 = vadd.f32 %v551, %v585
        %v590 = vadd.f32 %v552, %v586
        %v591 = vadd.f32 %v553, %v587
        %593 = vset.pattern.permute.xlu0 0
        %594 = vperm.xlu0 %593, %v362
        %v595 = vpop.permute.xlu0 %594
        %598 = vset.pattern.permute.xlu0 0
        %599 = vperm.xlu0 %598, %v363
        %v600 = vpop.permute.xlu0 %599
        %v602 = vadd.f32 %v588, %v595
        %v603 = vadd.f32 %v589, %v595
        %v604 = vadd.f32 %v590, %v600
        %v605 = vadd.f32 %v591, %v600
        %v606 = vmul.f32 %v602, 0.70710677
        %v607 = vmul.f32 %v603, 0.70710677
        %v608 = vand.u32 2147483647, %v606
        %v609 = vand.u32 2147483647, %v607
        %v610 = vmul.f32 %v608, 0.3275911
        %v611 = vmul.f32 %v609, 0.3275911
        %v612 = vadd.f32 %v610, 1.0
        %v613 = vadd.f32 %v611, 1.0
        %v614 = vrcp.pop %v612
        %v615 = vmul.f32 1.0, %v614
        %v616 = vrcp.pop %v613
        %v617 = vmul.f32 1.0, %v616
        %v618 = vmul.f32 %v615, 1.0614054
        %v619 = vmul.f32 %v617, 1.0614054
        %v620 = vadd.f32 %v618, -1.4531521
        %v621 = vadd.f32 %v619, -1.4531521
        %v622 = vmul.f32 %v615, %v620
        %v623 = vmul.f32 %v617, %v621
        %v624 = vadd.f32 %v622, 1.4214138
        %v625 = vadd.f32 %v623, 1.4214138
        %v626 = vmul.f32 %v615, %v624
        %v627 = vmul.f32 %v617, %v625
        %v628 = vadd.f32 %v626, -0.28449672
        %v629 = vadd.f32 %v627, -0.28449672
        %v630 = vmul.f32 %v615, %v628
        %v631 = vmul.f32 %v617, %v629
        %v632 = vadd.f32 %v630, 0.2548296
        %v633 = vadd.f32 %v631, 0.2548296
        %v634 = vmul.f32 %v615, %v632
        %v635 = vmul.f32 %v617, %v633
        %v636 = vsub.f32 0.0, %v608
        %v637 = vsub.f32 0.0, %v609
        %v638 = vmul.f32 %v636, %v608
        %v639 = vmul.f32 %v637, %v609
        %v640 = vmul.f32 %v638, 1.442695
        %v641 = vpow.pop %v640
        %v642 = vmul.f32 %v639, 1.442695
        %v643 = vpow.pop %v642
        %v644 = vmul.f32 %v634, %v641
        %v645 = vmul.f32 %v635, %v643
        %v646 = vsub.f32 1.0, %v644
        %v647 = vsub.f32 1.0, %v645
        %vm648 = vcmp.lt.f32.partialorder %v606, 0.0
        %vm649 = vcmp.lt.f32.partialorder %v607, 0.0
        %v650 = vsub.f32 0.0, %v646
        %v651 = vsub.f32 0.0, %v647
        %v652 = vsel %vm648, %v650, %v646
        %v653 = vsel %vm649, %v651, %v647
        %v654 = vmul.f32 %v602, 0.5
        %v655 = vmul.f32 %v603, 0.5
        %v656 = vadd.f32 %v652, 1.0
        %v657 = vadd.f32 %v653, 1.0
        %v658 = vmul.f32 %v654, %v656
        %v659 = vmul.f32 %v655, %v657
        %v660 = vld [vmem:[%s5] sm:$0xff]
        %v661 = vld [vmem:[%s5 + $0x8] sm:$0xff]
        %665 = vrot.lane.b32.xlu0 0.0, 85
        %v666 = vpop.permute.xlu0 %665
        %667 = vrot.lane.b32.xlu0 %v658, 85
        %v668 = vpop.permute.xlu0 %667
        %669 = vrot.lane.b32.xlu0 %v659, 85
        %v670 = vpop.permute.xlu0 %669
        %vm671 = vcmask 695296
        %v672 = vsel %vm671, %v666, %v668
        %v673 = vsel %vm671, %v668, %v670
        %v676 = vmul.f32 %v660, %v672
        %v677 = vmul.f32 %v661, %v673
        %v678 = vadd.f32 %v676, 0.0
        %v679 = vadd.f32 %v677, 0.0
        %s680 = scalar_lea.vmem %s5, 264
        %v681 = vld [vmem:[%s680] sm:$0xff]
        %v682 = vld [vmem:[%s680 + $0x8] sm:$0xff]
        %683 = vrot.lane.b32.xlu0 0.0, 69
        %v684 = vpop.permute.xlu0 %683
        %685 = vrot.lane.b32.xlu0 %v658, 69
        %v686 = vpop.permute.xlu0 %685
        %687 = vrot.lane.b32.xlu0 %v659, 69
        %v688 = vpop.permute.xlu0 %687
        %vm689 = vcmask 564224
        %v690 = vsel %vm689, %v684, %v686
        %v691 = vsel %vm689, %v686, %v688
        %v694 = vmul.f32 %v681, %v690
        %v695 = vmul.f32 %v682, %v691
        %v696 = vadd.f32 %v694, 0.0
        %v697 = vadd.f32 %v695, 0.0
        %s698 = scalar_lea.vmem %s5, 528
        %v699 = vld [vmem:[%s698] sm:$0xff]
        %v700 = vld [vmem:[%s698 + $0x8] sm:$0xff]
        %701 = vrot.lane.b32.xlu0 0.0, 53
        %v702 = vpop.permute.xlu0 %701
        %703 = vrot.lane.b32.xlu0 %v658, 53
        %v704 = vpop.permute.xlu0 %703
        %705 = vrot.lane.b32.xlu0 %v659, 53
        %v706 = vpop.permute.xlu0 %705
        %vm707 = vcmask 433152
        %v708 = vsel %vm707, %v702, %v704
        %v709 = vsel %vm707, %v704, %v706
        %v712 = vmul.f32 %v699, %v708
        %v713 = vmul.f32 %v700, %v709
        %v714 = vadd.f32 %v678, %v712
        %v715 = vadd.f32 %v679, %v713
        %s716 = scalar_lea.vmem %s5, 792
        %v717 = vld [vmem:[%s716] sm:$0xff]
        %v718 = vld [vmem:[%s716 + $0x8] sm:$0xff]
        %719 = vrot.lane.b32.xlu0 0.0, 37
        %v720 = vpop.permute.xlu0 %719
        %721 = vrot.lane.b32.xlu0 %v658, 37
        %v722 = vpop.permute.xlu0 %721
        %723 = vrot.lane.b32.xlu0 %v659, 37
        %v724 = vpop.permute.xlu0 %723
        %vm725 = vcmask 302080
        %v726 = vsel %vm725, %v720, %v722
        %v727 = vsel %vm725, %v722, %v724
        %v730 = vmul.f32 %v717, %v726
        %v731 = vmul.f32 %v718, %v727
        %v732 = vadd.f32 %v696, %v730
        %v733 = vadd.f32 %v697, %v731
        %s734 = scalar_lea.vmem %s5, 1056
        %v735 = vld [vmem:[%s734] sm:$0xff]
        %v736 = vld [vmem:[%s734 + $0x8] sm:$0xff]
        %737 = vrot.lane.b32.xlu0 0.0, 21
        %v738 = vpop.permute.xlu0 %737
        %739 = vrot.lane.b32.xlu0 %v658, 21
        %v740 = vpop.permute.xlu0 %739
        %741 = vrot.lane.b32.xlu0 %v659, 21
        %v742 = vpop.permute.xlu0 %741
        %vm743 = vcmask 171008
        %v744 = vsel %vm743, %v738, %v740
        %v745 = vsel %vm743, %v740, %v742
        %v748 = vmul.f32 %v735, %v744
        %v749 = vmul.f32 %v736, %v745
        %v750 = vadd.f32 %v714, %v748
        %v751 = vadd.f32 %v715, %v749
        %s752 = scalar_lea.vmem %s5, 1320
        %v753 = vld [vmem:[%s752] sm:$0xff]
        %v754 = vld [vmem:[%s752 + $0x8] sm:$0xff]
        %755 = vrot.lane.b32.xlu0 0.0, 5
        %v756 = vpop.permute.xlu0 %755
        %757 = vrot.lane.b32.xlu0 %v658, 5
        %v758 = vpop.permute.xlu0 %757
        %759 = vrot.lane.b32.xlu0 %v659, 5
        %v760 = vpop.permute.xlu0 %759
        %vm761 = vcmask 39936
        %v762 = vsel %vm761, %v756, %v758
        %v763 = vsel %vm761, %v758, %v760
        %v766 = vmul.f32 %v753, %v762
        %v767 = vmul.f32 %v754, %v763
        %v768 = vadd.f32 %v732, %v766
        %v769 = vadd.f32 %v733, %v767
        %s770 = scalar_lea.vmem %s5, 1584
        %v771 = vld [vmem:[%s770] sm:$0xff]
        %v772 = vld [vmem:[%s770 + $0x8] sm:$0xff]
        %773 = vrot.lane.b32.xlu0 %v658, 117
        %v774 = vpop.permute.xlu0 %773
        %775 = vrot.lane.b32.xlu0 %v659, 117
        %v776 = vpop.permute.xlu0 %775
        %777 = vrot.lane.b32.xlu0 0.0, 117
        %v778 = vpop.permute.xlu0 %777
        %vm779 = vcmask 957440
        %v780 = vsel %vm779, %v774, %v776
        %v781 = vsel %vm779, %v776, %v778
        %v784 = vmul.f32 %v771, %v780
        %v785 = vmul.f32 %v772, %v781
        %v786 = vadd.f32 %v750, %v784
        %v787 = vadd.f32 %v751, %v785
        %s788 = scalar_lea.vmem %s5, 1848
        %v789 = vld [vmem:[%s788] sm:$0xff]
        %v790 = vld [vmem:[%s788 + $0x8] sm:$0xff]
        %791 = vrot.lane.b32.xlu0 %v658, 101
        %v792 = vpop.permute.xlu0 %791
        %793 = vrot.lane.b32.xlu0 %v659, 101
        %v794 = vpop.permute.xlu0 %793
        %795 = vrot.lane.b32.xlu0 0.0, 101
        %v796 = vpop.permute.xlu0 %795
        %vm797 = vcmask 826368
        %v798 = vsel %vm797, %v792, %v794
        %v799 = vsel %vm797, %v794, %v796
        %v802 = vmul.f32 %v789, %v798
        %v803 = vmul.f32 %v790, %v799
        %v804 = vadd.f32 %v768, %v802
        %v805 = vadd.f32 %v769, %v803
        %s806 = scalar_lea.vmem %s5, 2112
        %v807 = vld [vmem:[%s806] sm:$0xff]
        %v808 = vld [vmem:[%s806 + $0x8] sm:$0xff]
        %v809 = vsel %vm671, %v670, %v666
        %v811 = vmul.f32 %v807, %v673
        %v812 = vmul.f32 %v808, %v809
        %v813 = vadd.f32 %v786, %v811
        %v814 = vadd.f32 %v787, %v812
        %s815 = scalar_lea.vmem %s5, 2376
        %v816 = vld [vmem:[%s815] sm:$0xff]
        %v817 = vld [vmem:[%s815 + $0x8] sm:$0xff]
        %v818 = vsel %vm689, %v688, %v684
        %v820 = vmul.f32 %v816, %v691
        %v821 = vmul.f32 %v817, %v818
        %v822 = vadd.f32 %v804, %v820
        %v823 = vadd.f32 %v805, %v821
        %s824 = scalar_lea.vmem %s5, 2640
        %v825 = vld [vmem:[%s824] sm:$0xff]
        %v826 = vld [vmem:[%s824 + $0x8] sm:$0xff]
        %v827 = vsel %vm707, %v706, %v702
        %v829 = vmul.f32 %v825, %v709
        %v830 = vmul.f32 %v826, %v827
        %v831 = vadd.f32 %v813, %v829
        %v832 = vadd.f32 %v814, %v830
        %v833 = vadd.f32 %v831, %v822
        %v834 = vadd.f32 %v832, %v823
        %v835 = vlaneseq
        %v836 = vshrl.u32 %v835, 7
        %v837 = vsub.s32 0, %v836
        %v838 = vrot.slane %v367, %v837
        %v839 = vlaneseq
        %v840 = vshrl.u32 %v839, 7
        %v841 = vsub.s32 0, %v840
        %v842 = vrot.slane %v368, %v841
        %v843 = vmul.f32 %v833, %v838
        %v844 = vmul.f32 %v834, %v842
        %v845 = vadd.f32 %v843, 0.0
        %v846 = vadd.f32 %v844, 0.0
        %s847 = scalar_lea.vmem %s5, 24
        %v848 = vld [vmem:[%s847] sm:$0xff]
        %v849 = vld [vmem:[%s847 + $0x8] sm:$0xff]
        %v850 = vld [vmem:[%s847 + $0x10] sm:$0xff]
        %v852 = vmul.f32 %v848, %v672
        %v853 = vmul.f32 %v849, %v673
        %v854 = vmul.f32 %v850, %v670
        %v855 = vadd.f32 %v852, 0.0
        %v856 = vadd.f32 %v853, 0.0
        %v857 = vadd.f32 %v854, 0.0
        %s858 = scalar_lea.vmem %s5, 288
        %v859 = vld [vmem:[%s858] sm:$0xff]
        %v860 = vld [vmem:[%s858 + $0x8] sm:$0xff]
        %v861 = vld [vmem:[%s858 + $0x10] sm:$0xff]
        %v863 = vmul.f32 %v859, %v690
        %v864 = vmul.f32 %v860, %v691
        %v865 = vmul.f32 %v861, %v688
        %v866 = vadd.f32 %v863, 0.0
        %v867 = vadd.f32 %v864, 0.0
        %v868 = vadd.f32 %v865, 0.0
        %s869 = scalar_lea.vmem %s5, 552
        %v870 = vld [vmem:[%s869] sm:$0xff]
        %v871 = vld [vmem:[%s869 + $0x8] sm:$0xff]
        %v872 = vld [vmem:[%s869 + $0x10] sm:$0xff]
        %v874 = vmul.f32 %v870, %v708
        %v875 = vmul.f32 %v871, %v709
        %v876 = vmul.f32 %v872, %v706
        %v877 = vadd.f32 %v855, %v874
        %v878 = vadd.f32 %v856, %v875
        %v879 = vadd.f32 %v857, %v876
        %s880 = scalar_lea.vmem %s5, 816
        %v881 = vld [vmem:[%s880] sm:$0xff]
        %v882 = vld [vmem:[%s880 + $0x8] sm:$0xff]
        %v883 = vld [vmem:[%s880 + $0x10] sm:$0xff]
        %v885 = vmul.f32 %v881, %v726
        %v886 = vmul.f32 %v882, %v727
        %v887 = vmul.f32 %v883, %v724
        %v888 = vadd.f32 %v866, %v885
        %v889 = vadd.f32 %v867, %v886
        %v890 = vadd.f32 %v868, %v887
        %s891 = scalar_lea.vmem %s5, 1080
        %v892 = vld [vmem:[%s891] sm:$0xff]
        %v893 = vld [vmem:[%s891 + $0x8] sm:$0xff]
        %v894 = vld [vmem:[%s891 + $0x10] sm:$0xff]
        %v896 = vmul.f32 %v892, %v744
        %v897 = vmul.f32 %v893, %v745
        %v898 = vmul.f32 %v894, %v742
        %v899 = vadd.f32 %v877, %v896
        %v900 = vadd.f32 %v878, %v897
        %v901 = vadd.f32 %v879, %v898
        %s902 = scalar_lea.vmem %s5, 1344
        %v903 = vld [vmem:[%s902] sm:$0xff]
        %v904 = vld [vmem:[%s902 + $0x8] sm:$0xff]
        %v905 = vld [vmem:[%s902 + $0x10] sm:$0xff]
        %v906 = vsel %vm761, %v760, %v756
        %v908 = vmul.f32 %v903, %v762
        %v909 = vmul.f32 %v904, %v763
        %v910 = vmul.f32 %v905, %v906
        %v911 = vadd.f32 %v888, %v908
        %v912 = vadd.f32 %v889, %v909
        %v913 = vadd.f32 %v890, %v910
        %s914 = scalar_lea.vmem %s5, 1608
        %v915 = vld [vmem:[%s914] sm:$0xff]
        %v916 = vld [vmem:[%s914 + $0x8] sm:$0xff]
        %v917 = vld [vmem:[%s914 + $0x10] sm:$0xff]
        %v919 = vmul.f32 %v915, %v780
        %v920 = vmul.f32 %v916, %v781
        %v921 = vmul.f32 %v917, %v778
        %v922 = vadd.f32 %v899, %v919
        %v923 = vadd.f32 %v900, %v920
        %v924 = vadd.f32 %v901, %v921
        %s925 = scalar_lea.vmem %s5, 1872
        %v926 = vld [vmem:[%s925] sm:$0xff]
        %v927 = vld [vmem:[%s925 + $0x8] sm:$0xff]
        %v928 = vld [vmem:[%s925 + $0x10] sm:$0xff]
        %v930 = vmul.f32 %v926, %v798
        %v931 = vmul.f32 %v927, %v799
        %v932 = vmul.f32 %v928, %v796
        %v933 = vadd.f32 %v911, %v930
        %v934 = vadd.f32 %v912, %v931
        %v935 = vadd.f32 %v913, %v932
        %s936 = scalar_lea.vmem %s5, 2136
        %v937 = vld [vmem:[%s936] sm:$0xff]
        %v938 = vld [vmem:[%s936 + $0x8] sm:$0xff]
        %v939 = vld [vmem:[%s936 + $0x10] sm:$0xff]
        %v941 = vmul.f32 %v937, %v673
        %v942 = vmul.f32 %v938, %v809
        %v943 = vmul.f32 %v939, %v666
        %v944 = vadd.f32 %v922, %v941
        %v945 = vadd.f32 %v923, %v942
        %v946 = vadd.f32 %v924, %v943
        %s947 = scalar_lea.vmem %s5, 2400
        %v948 = vld [vmem:[%s947] sm:$0xff]
        %v949 = vld [vmem:[%s947 + $0x8] sm:$0xff]
        %v950 = vld [vmem:[%s947 + $0x10] sm:$0xff]
        %v952 = vmul.f32 %v948, %v691
        %v953 = vmul.f32 %v949, %v818
        %v954 = vmul.f32 %v950, %v684
        %v955 = vadd.f32 %v933, %v952
        %v956 = vadd.f32 %v934, %v953
        %v957 = vadd.f32 %v935, %v954
        %s958 = scalar_lea.vmem %s5, 2664
        %v959 = vld [vmem:[%s958] sm:$0xff]
        %v960 = vld [vmem:[%s958 + $0x8] sm:$0xff]
        %v961 = vld [vmem:[%s958 + $0x10] sm:$0xff]
        %v963 = vmul.f32 %v959, %v709
        %v964 = vmul.f32 %v960, %v827
        %v965 = vmul.f32 %v961, %v702
        %v966 = vadd.f32 %v944, %v963
        %v967 = vadd.f32 %v945, %v964
        %v968 = vadd.f32 %v946, %v965
        %v969 = vadd.f32 %v966, %v955
        %v970 = vadd.f32 %v967, %v956
        %v971 = vadd.f32 %v968, %v957
        %v972 = vlaneseq
        %v973 = vshrl.u32 %v972, 7
        %v974 = vsub.s32 1, %v973
        %v975 = vrot.slane %v367, %v974
        %v976 = vlaneseq
        %v977 = vshrl.u32 %v976, 7
        %v978 = vsub.s32 1, %v977
        %v979 = vrot.slane %v368, %v978
        %982 = vrot.lane.b32.xlu0 %v975, 1
        %v983 = vpop.permute.xlu0 %982
        %984 = vrot.lane.b32.xlu0 %v979, 1
        %v985 = vpop.permute.xlu0 %984
        %vm986 = vcmask 7168
        %v987 = vsel %vm986, %v983, %v985
        %v991 = vmul.f32 %v969, %v983
        %v992 = vmul.f32 %v970, %v987
        %v993 = vmul.f32 %v971, %v985
        %v994 = vadd.f32 %v991, 0.0
        %v995 = vadd.f32 %v992, 0.0
        %v996 = vadd.f32 %v993, 0.0
        %s997 = scalar_lea.vmem %s5, 48
        %v998 = vld [vmem:[%s997] sm:$0xff]
        %v999 = vld [vmem:[%s997 + $0x8] sm:$0xff]
        %v1000 = vld [vmem:[%s997 + $0x10] sm:$0xff]
        %v1001 = vmul.f32 %v998, %v672
        %v1002 = vmul.f32 %v999, %v673
        %v1003 = vmul.f32 %v1000, %v670
        %v1004 = vadd.f32 %v1001, 0.0
        %v1005 = vadd.f32 %v1002, 0.0
        %v1006 = vadd.f32 %v1003, 0.0
        %s1007 = scalar_lea.vmem %s5, 312
        %v1008 = vld [vmem:[%s1007] sm:$0xff]
        %v1009 = vld [vmem:[%s1007 + $0x8] sm:$0xff]
        %v1010 = vld [vmem:[%s1007 + $0x10] sm:$0xff]
        %v1011 = vmul.f32 %v1008, %v690
        %v1012 = vmul.f32 %v1009, %v691
        %v1013 = vmul.f32 %v1010, %v688
        %v1014 = vadd.f32 %v1011, 0.0
        %v1015 = vadd.f32 %v1012, 0.0
        %v1016 = vadd.f32 %v1013, 0.0
        %s1017 = scalar_lea.vmem %s5, 576
        %v1018 = vld [vmem:[%s1017] sm:$0xff]
        %v1019 = vld [vmem:[%s1017 + $0x8] sm:$0xff]
        %v1020 = vld [vmem:[%s1017 + $0x10] sm:$0xff]
        %v1021 = vmul.f32 %v1018, %v708
        %v1022 = vmul.f32 %v1019, %v709
        %v1023 = vmul.f32 %v1020, %v706
        %v1024 = vadd.f32 %v1004, %v1021
        %v1025 = vadd.f32 %v1005, %v1022
        %v1026 = vadd.f32 %v1006, %v1023
        %s1027 = scalar_lea.vmem %s5, 840
        %v1028 = vld [vmem:[%s1027] sm:$0xff]
        %v1029 = vld [vmem:[%s1027 + $0x8] sm:$0xff]
        %v1030 = vld [vmem:[%s1027 + $0x10] sm:$0xff]
        %v1031 = vmul.f32 %v1028, %v726
        %v1032 = vmul.f32 %v1029, %v727
        %v1033 = vmul.f32 %v1030, %v724
        %v1034 = vadd.f32 %v1014, %v1031
        %v1035 = vadd.f32 %v1015, %v1032
        %v1036 = vadd.f32 %v1016, %v1033
        %s1037 = scalar_lea.vmem %s5, 1104
        %v1038 = vld [vmem:[%s1037] sm:$0xff]
        %v1039 = vld [vmem:[%s1037 + $0x8] sm:$0xff]
        %v1040 = vld [vmem:[%s1037 + $0x10] sm:$0xff]
        %v1041 = vmul.f32 %v1038, %v744
        %v1042 = vmul.f32 %v1039, %v745
        %v1043 = vmul.f32 %v1040, %v742
        %v1044 = vadd.f32 %v1024, %v1041
        %v1045 = vadd.f32 %v1025, %v1042
        %v1046 = vadd.f32 %v1026, %v1043
        %s1047 = scalar_lea.vmem %s5, 1368
        %v1048 = vld [vmem:[%s1047] sm:$0xff]
        %v1049 = vld [vmem:[%s1047 + $0x8] sm:$0xff]
        %v1050 = vld [vmem:[%s1047 + $0x10] sm:$0xff]
        %v1051 = vmul.f32 %v1048, %v762
        %v1052 = vmul.f32 %v1049, %v763
        %v1053 = vmul.f32 %v1050, %v906
        %v1054 = vadd.f32 %v1034, %v1051
        %v1055 = vadd.f32 %v1035, %v1052
        %v1056 = vadd.f32 %v1036, %v1053
        %s1057 = scalar_lea.vmem %s5, 1632
        %v1058 = vld [vmem:[%s1057] sm:$0xff]
        %v1059 = vld [vmem:[%s1057 + $0x8] sm:$0xff]
        %v1060 = vld [vmem:[%s1057 + $0x10] sm:$0xff]
        %v1061 = vmul.f32 %v1058, %v780
        %v1062 = vmul.f32 %v1059, %v781
        %v1063 = vmul.f32 %v1060, %v778
        %v1064 = vadd.f32 %v1044, %v1061
        %v1065 = vadd.f32 %v1045, %v1062
        %v1066 = vadd.f32 %v1046, %v1063
        %s1067 = scalar_lea.vmem %s5, 1896
        %v1068 = vld [vmem:[%s1067] sm:$0xff]
        %v1069 = vld [vmem:[%s1067 + $0x8] sm:$0xff]
        %v1070 = vld [vmem:[%s1067 + $0x10] sm:$0xff]
        %v1071 = vmul.f32 %v1068, %v798
        %v1072 = vmul.f32 %v1069, %v799
        %v1073 = vmul.f32 %v1070, %v796
        %v1074 = vadd.f32 %v1054, %v1071
        %v1075 = vadd.f32 %v1055, %v1072
        %v1076 = vadd.f32 %v1056, %v1073
        %s1077 = scalar_lea.vmem %s5, 2160
        %v1078 = vld [vmem:[%s1077] sm:$0xff]
        %v1079 = vld [vmem:[%s1077 + $0x8] sm:$0xff]
        %v1080 = vld [vmem:[%s1077 + $0x10] sm:$0xff]
        %v1081 = vmul.f32 %v1078, %v673
        %v1082 = vmul.f32 %v1079, %v809
        %v1083 = vmul.f32 %v1080, %v666
        %v1084 = vadd.f32 %v1064, %v1081
        %v1085 = vadd.f32 %v1065, %v1082
        %v1086 = vadd.f32 %v1066, %v1083
        %s1087 = scalar_lea.vmem %s5, 2424
        %v1088 = vld [vmem:[%s1087] sm:$0xff]
        %v1089 = vld [vmem:[%s1087 + $0x8] sm:$0xff]
        %v1090 = vld [vmem:[%s1087 + $0x10] sm:$0xff]
        %v1091 = vmul.f32 %v1088, %v691
        %v1092 = vmul.f32 %v1089, %v818
        %v1093 = vmul.f32 %v1090, %v684
        %v1094 = vadd.f32 %v1074, %v1091
        %v1095 = vadd.f32 %v1075, %v1092
        %v1096 = vadd.f32 %v1076, %v1093
        %s1097 = scalar_lea.vmem %s5, 2688
        %v1098 = vld [vmem:[%s1097] sm:$0xff]
        %v1099 = vld [vmem:[%s1097 + $0x8] sm:$0xff]
        %v1100 = vld [vmem:[%s1097 + $0x10] sm:$0xff]
        %v1101 = vmul.f32 %v1098, %v709
        %v1102 = vmul.f32 %v1099, %v827
        %v1103 = vmul.f32 %v1100, %v702
        %v1104 = vadd.f32 %v1084, %v1101
        %v1105 = vadd.f32 %v1085, %v1102
        %v1106 = vadd.f32 %v1086, %v1103
        %v1107 = vadd.f32 %v1104, %v1094
        %v1108 = vadd.f32 %v1105, %v1095
        %v1109 = vadd.f32 %v1106, %v1096
        %v1110 = vlaneseq
        %v1111 = vshrl.u32 %v1110, 7
        %v1112 = vsub.s32 2, %v1111
        %v1113 = vrot.slane %v367, %v1112
        %v1114 = vlaneseq
        %v1115 = vshrl.u32 %v1114, 7
        %v1116 = vsub.s32 2, %v1115
        %v1117 = vrot.slane %v368, %v1116
        %1120 = vrot.lane.b32.xlu0 %v1113, 2
        %v1121 = vpop.permute.xlu0 %1120
        %1122 = vrot.lane.b32.xlu0 %v1117, 2
        %v1123 = vpop.permute.xlu0 %1122
        %vm1124 = vcmask 15360
        %v1125 = vsel %vm1124, %v1121, %v1123
        %v1129 = vmul.f32 %v1107, %v1121
        %v1130 = vmul.f32 %v1108, %v1125
        %v1131 = vmul.f32 %v1109, %v1123
        %1135 = vrot.lane.b32.xlu0 %v1129, 126
        %v1136 = vpop.permute.xlu0 %1135
        %1137 = vrot.lane.b32.xlu0 %v1130, 126
        %v1138 = vpop.permute.xlu0 %1137
        %1139 = vrot.lane.b32.xlu0 %v1131, 126
        %v1140 = vpop.permute.xlu0 %1139
        %vm1141 = vcmask 1031168
        %v1142 = vsel %vm1141, %v1136, %v1138
        %v1143 = vsel %vm1141, %v1138, %v1140
        %v1146 = vadd.f32 %v845, %v1142
        %v1147 = vadd.f32 %v846, %v1143
        %s1148 = scalar_lea.vmem %s5, 72
        %v1149 = vld [vmem:[%s1148] sm:$0xff]
        %v1150 = vld [vmem:[%s1148 + $0x8] sm:$0xff]
        %v1151 = vld [vmem:[%s1148 + $0x10] sm:$0xff]
        %v1152 = vmul.f32 %v1149, %v672
        %v1153 = vmul.f32 %v1150, %v673
        %v1154 = vmul.f32 %v1151, %v670
        %v1155 = vadd.f32 %v1152, 0.0
        %v1156 = vadd.f32 %v1153, 0.0
        %v1157 = vadd.f32 %v1154, 0.0
        %s1158 = scalar_lea.vmem %s5, 336
        %v1159 = vld [vmem:[%s1158] sm:$0xff]
        %v1160 = vld [vmem:[%s1158 + $0x8] sm:$0xff]
        %v1161 = vld [vmem:[%s1158 + $0x10] sm:$0xff]
        %v1162 = vmul.f32 %v1159, %v690
        %v1163 = vmul.f32 %v1160, %v691
        %v1164 = vmul.f32 %v1161, %v688
        %v1165 = vadd.f32 %v1162, 0.0
        %v1166 = vadd.f32 %v1163, 0.0
        %v1167 = vadd.f32 %v1164, 0.0
        %s1168 = scalar_lea.vmem %s5, 600
        %v1169 = vld [vmem:[%s1168] sm:$0xff]
        %v1170 = vld [vmem:[%s1168 + $0x8] sm:$0xff]
        %v1171 = vld [vmem:[%s1168 + $0x10] sm:$0xff]
        %v1172 = vmul.f32 %v1169, %v708
        %v1173 = vmul.f32 %v1170, %v709
        %v1174 = vmul.f32 %v1171, %v706
        %v1175 = vadd.f32 %v1155, %v1172
        %v1176 = vadd.f32 %v1156, %v1173
        %v1177 = vadd.f32 %v1157, %v1174
        %s1178 = scalar_lea.vmem %s5, 864
        %v1179 = vld [vmem:[%s1178] sm:$0xff]
        %v1180 = vld [vmem:[%s1178 + $0x8] sm:$0xff]
        %v1181 = vld [vmem:[%s1178 + $0x10] sm:$0xff]
        %v1182 = vmul.f32 %v1179, %v726
        %v1183 = vmul.f32 %v1180, %v727
        %v1184 = vmul.f32 %v1181, %v724
        %v1185 = vadd.f32 %v1165, %v1182
        %v1186 = vadd.f32 %v1166, %v1183
        %v1187 = vadd.f32 %v1167, %v1184
        %s1188 = scalar_lea.vmem %s5, 1128
        %v1189 = vld [vmem:[%s1188] sm:$0xff]
        %v1190 = vld [vmem:[%s1188 + $0x8] sm:$0xff]
        %v1191 = vld [vmem:[%s1188 + $0x10] sm:$0xff]
        %v1192 = vmul.f32 %v1189, %v744
        %v1193 = vmul.f32 %v1190, %v745
        %v1194 = vmul.f32 %v1191, %v742
        %v1195 = vadd.f32 %v1175, %v1192
        %v1196 = vadd.f32 %v1176, %v1193
        %v1197 = vadd.f32 %v1177, %v1194
        %s1198 = scalar_lea.vmem %s5, 1392
        %v1199 = vld [vmem:[%s1198] sm:$0xff]
        %v1200 = vld [vmem:[%s1198 + $0x8] sm:$0xff]
        %v1201 = vld [vmem:[%s1198 + $0x10] sm:$0xff]
        %v1202 = vmul.f32 %v1199, %v762
        %v1203 = vmul.f32 %v1200, %v763
        %v1204 = vmul.f32 %v1201, %v906
        %v1205 = vadd.f32 %v1185, %v1202
        %v1206 = vadd.f32 %v1186, %v1203
        %v1207 = vadd.f32 %v1187, %v1204
        %s1208 = scalar_lea.vmem %s5, 1656
        %v1209 = vld [vmem:[%s1208] sm:$0xff]
        %v1210 = vld [vmem:[%s1208 + $0x8] sm:$0xff]
        %v1211 = vld [vmem:[%s1208 + $0x10] sm:$0xff]
        %v1212 = vmul.f32 %v1209, %v780
        %v1213 = vmul.f32 %v1210, %v781
        %v1214 = vmul.f32 %v1211, %v778
        %v1215 = vadd.f32 %v1195, %v1212
        %v1216 = vadd.f32 %v1196, %v1213
        %v1217 = vadd.f32 %v1197, %v1214
        %s1218 = scalar_lea.vmem %s5, 1920
        %v1219 = vld [vmem:[%s1218] sm:$0xff]
        %v1220 = vld [vmem:[%s1218 + $0x8] sm:$0xff]
        %v1221 = vld [vmem:[%s1218 + $0x10] sm:$0xff]
        %v1222 = vmul.f32 %v1219, %v798
        %v1223 = vmul.f32 %v1220, %v799
        %v1224 = vmul.f32 %v1221, %v796
        %v1225 = vadd.f32 %v1205, %v1222
        %v1226 = vadd.f32 %v1206, %v1223
        %v1227 = vadd.f32 %v1207, %v1224
        %s1228 = scalar_lea.vmem %s5, 2184
        %v1229 = vld [vmem:[%s1228] sm:$0xff]
        %v1230 = vld [vmem:[%s1228 + $0x8] sm:$0xff]
        %v1231 = vld [vmem:[%s1228 + $0x10] sm:$0xff]
        %v1232 = vmul.f32 %v1229, %v673
        %v1233 = vmul.f32 %v1230, %v809
        %v1234 = vmul.f32 %v1231, %v666
        %v1235 = vadd.f32 %v1215, %v1232
        %v1236 = vadd.f32 %v1216, %v1233
        %v1237 = vadd.f32 %v1217, %v1234
        %s1238 = scalar_lea.vmem %s5, 2448
        %v1239 = vld [vmem:[%s1238] sm:$0xff]
        %v1240 = vld [vmem:[%s1238 + $0x8] sm:$0xff]
        %v1241 = vld [vmem:[%s1238 + $0x10] sm:$0xff]
        %v1242 = vmul.f32 %v1239, %v691
        %v1243 = vmul.f32 %v1240, %v818
        %v1244 = vmul.f32 %v1241, %v684
        %v1245 = vadd.f32 %v1225, %v1242
        %v1246 = vadd.f32 %v1226, %v1243
        %v1247 = vadd.f32 %v1227, %v1244
        %s1248 = scalar_lea.vmem %s5, 2712
        %v1249 = vld [vmem:[%s1248] sm:$0xff]
        %v1250 = vld [vmem:[%s1248 + $0x8] sm:$0xff]
        %v1251 = vld [vmem:[%s1248 + $0x10] sm:$0xff]
        %v1252 = vmul.f32 %v1249, %v709
        %v1253 = vmul.f32 %v1250, %v827
        %v1254 = vmul.f32 %v1251, %v702
        %v1255 = vadd.f32 %v1235, %v1252
        %v1256 = vadd.f32 %v1236, %v1253
        %v1257 = vadd.f32 %v1237, %v1254
        %v1258 = vadd.f32 %v1255, %v1245
        %v1259 = vadd.f32 %v1256, %v1246
        %v1260 = vadd.f32 %v1257, %v1247
        %v1261 = vlaneseq
        %v1262 = vshrl.u32 %v1261, 7
        %v1263 = vsub.s32 3, %v1262
        %v1264 = vrot.slane %v367, %v1263
        %v1265 = vlaneseq
        %v1266 = vshrl.u32 %v1265, 7
        %v1267 = vsub.s32 3, %v1266
        %v1268 = vrot.slane %v368, %v1267
        %1271 = vrot.lane.b32.xlu0 %v1264, 3
        %v1272 = vpop.permute.xlu0 %1271
        %1273 = vrot.lane.b32.xlu0 %v1268, 3
        %v1274 = vpop.permute.xlu0 %1273
        %vm1275 = vcmask 23552
        %v1276 = vsel %vm1275, %v1272, %v1274
        %v1280 = vmul.f32 %v1258, %v1272
        %v1281 = vmul.f32 %v1259, %v1276
        %v1282 = vmul.f32 %v1260, %v1274
        %1286 = vrot.lane.b32.xlu0 %v1280, 126
        %v1287 = vpop.permute.xlu0 %1286
        %1288 = vrot.lane.b32.xlu0 %v1281, 126
        %v1289 = vpop.permute.xlu0 %1288
        %1290 = vrot.lane.b32.xlu0 %v1282, 126
        %v1291 = vpop.permute.xlu0 %1290
        %v1292 = vsel %vm1141, %v1287, %v1289
        %v1293 = vsel %vm1141, %v1289, %v1291
        %v1297 = vadd.f32 %v994, %v1292
        %v1298 = vadd.f32 %v995, %v1293
        %v1299 = vadd.f32 %v996, %v1291
        %s1300 = scalar_lea.vmem %s5, 96
        %v1301 = vld [vmem:[%s1300] sm:$0xff]
        %v1302 = vld [vmem:[%s1300 + $0x8] sm:$0xff]
        %v1303 = vld [vmem:[%s1300 + $0x10] sm:$0xff]
        %v1304 = vmul.f32 %v1301, %v672
        %v1305 = vmul.f32 %v1302, %v673
        %v1306 = vmul.f32 %v1303, %v670
        %v1307 = vadd.f32 %v1304, 0.0
        %v1308 = vadd.f32 %v1305, 0.0
        %v1309 = vadd.f32 %v1306, 0.0
        %s1310 = scalar_lea.vmem %s5, 360
        %v1311 = vld [vmem:[%s1310] sm:$0xff]
        %v1312 = vld [vmem:[%s1310 + $0x8] sm:$0xff]
        %v1313 = vld [vmem:[%s1310 + $0x10] sm:$0xff]
        %v1314 = vmul.f32 %v1311, %v690
        %v1315 = vmul.f32 %v1312, %v691
        %v1316 = vmul.f32 %v1313, %v688
        %v1317 = vadd.f32 %v1314, 0.0
        %v1318 = vadd.f32 %v1315, 0.0
        %v1319 = vadd.f32 %v1316, 0.0
        %s1320 = scalar_lea.vmem %s5, 624
        %v1321 = vld [vmem:[%s1320] sm:$0xff]
        %v1322 = vld [vmem:[%s1320 + $0x8] sm:$0xff]
        %v1323 = vld [vmem:[%s1320 + $0x10] sm:$0xff]
        %v1324 = vmul.f32 %v1321, %v708
        %v1325 = vmul.f32 %v1322, %v709
        %v1326 = vmul.f32 %v1323, %v706
        %v1327 = vadd.f32 %v1307, %v1324
        %v1328 = vadd.f32 %v1308, %v1325
        %v1329 = vadd.f32 %v1309, %v1326
        %s1330 = scalar_lea.vmem %s5, 888
        %v1331 = vld [vmem:[%s1330] sm:$0xff]
        %v1332 = vld [vmem:[%s1330 + $0x8] sm:$0xff]
        %v1333 = vld [vmem:[%s1330 + $0x10] sm:$0xff]
        %v1334 = vmul.f32 %v1331, %v726
        %v1335 = vmul.f32 %v1332, %v727
        %v1336 = vmul.f32 %v1333, %v724
        %v1337 = vadd.f32 %v1317, %v1334
        %v1338 = vadd.f32 %v1318, %v1335
        %v1339 = vadd.f32 %v1319, %v1336
        %s1340 = scalar_lea.vmem %s5, 1152
        %v1341 = vld [vmem:[%s1340] sm:$0xff]
        %v1342 = vld [vmem:[%s1340 + $0x8] sm:$0xff]
        %v1343 = vld [vmem:[%s1340 + $0x10] sm:$0xff]
        %v1344 = vmul.f32 %v1341, %v744
        %v1345 = vmul.f32 %v1342, %v745
        %v1346 = vmul.f32 %v1343, %v742
        %v1347 = vadd.f32 %v1327, %v1344
        %v1348 = vadd.f32 %v1328, %v1345
        %v1349 = vadd.f32 %v1329, %v1346
        %s1350 = scalar_lea.vmem %s5, 1416
        %v1351 = vld [vmem:[%s1350] sm:$0xff]
        %v1352 = vld [vmem:[%s1350 + $0x8] sm:$0xff]
        %v1353 = vld [vmem:[%s1350 + $0x10] sm:$0xff]
        %v1354 = vmul.f32 %v1351, %v762
        %v1355 = vmul.f32 %v1352, %v763
        %v1356 = vmul.f32 %v1353, %v906
        %v1357 = vadd.f32 %v1337, %v1354
        %v1358 = vadd.f32 %v1338, %v1355
        %v1359 = vadd.f32 %v1339, %v1356
        %s1360 = scalar_lea.vmem %s5, 1680
        %v1361 = vld [vmem:[%s1360] sm:$0xff]
        %v1362 = vld [vmem:[%s1360 + $0x8] sm:$0xff]
        %v1363 = vld [vmem:[%s1360 + $0x10] sm:$0xff]
        %v1364 = vmul.f32 %v1361, %v780
        %v1365 = vmul.f32 %v1362, %v781
        %v1366 = vmul.f32 %v1363, %v778
        %v1367 = vadd.f32 %v1347, %v1364
        %v1368 = vadd.f32 %v1348, %v1365
        %v1369 = vadd.f32 %v1349, %v1366
        %s1370 = scalar_lea.vmem %s5, 1944
        %v1371 = vld [vmem:[%s1370] sm:$0xff]
        %v1372 = vld [vmem:[%s1370 + $0x8] sm:$0xff]
        %v1373 = vld [vmem:[%s1370 + $0x10] sm:$0xff]
        %v1374 = vmul.f32 %v1371, %v798
        %v1375 = vmul.f32 %v1372, %v799
        %v1376 = vmul.f32 %v1373, %v796
        %v1377 = vadd.f32 %v1357, %v1374
        %v1378 = vadd.f32 %v1358, %v1375
        %v1379 = vadd.f32 %v1359, %v1376
        %s1380 = scalar_lea.vmem %s5, 2208
        %v1381 = vld [vmem:[%s1380] sm:$0xff]
        %v1382 = vld [vmem:[%s1380 + $0x8] sm:$0xff]
        %v1383 = vld [vmem:[%s1380 + $0x10] sm:$0xff]
        %v1384 = vmul.f32 %v1381, %v673
        %v1385 = vmul.f32 %v1382, %v809
        %v1386 = vmul.f32 %v1383, %v666
        %v1387 = vadd.f32 %v1367, %v1384
        %v1388 = vadd.f32 %v1368, %v1385
        %v1389 = vadd.f32 %v1369, %v1386
        %s1390 = scalar_lea.vmem %s5, 2472
        %v1391 = vld [vmem:[%s1390] sm:$0xff]
        %v1392 = vld [vmem:[%s1390 + $0x8] sm:$0xff]
        %v1393 = vld [vmem:[%s1390 + $0x10] sm:$0xff]
        %v1394 = vmul.f32 %v1391, %v691
        %v1395 = vmul.f32 %v1392, %v818
        %v1396 = vmul.f32 %v1393, %v684
        %v1397 = vadd.f32 %v1377, %v1394
        %v1398 = vadd.f32 %v1378, %v1395
        %v1399 = vadd.f32 %v1379, %v1396
        %s1400 = scalar_lea.vmem %s5, 2736
        %v1401 = vld [vmem:[%s1400] sm:$0xff]
        %v1402 = vld [vmem:[%s1400 + $0x8] sm:$0xff]
        %v1403 = vld [vmem:[%s1400 + $0x10] sm:$0xff]
        %v1404 = vmul.f32 %v1401, %v709
        %v1405 = vmul.f32 %v1402, %v827
        %v1406 = vmul.f32 %v1403, %v702
        %v1407 = vadd.f32 %v1387, %v1404
        %v1408 = vadd.f32 %v1388, %v1405
        %v1409 = vadd.f32 %v1389, %v1406
        %v1410 = vadd.f32 %v1407, %v1397
        %v1411 = vadd.f32 %v1408, %v1398
        %v1412 = vadd.f32 %v1409, %v1399
        %v1413 = vlaneseq
        %v1414 = vshrl.u32 %v1413, 7
        %v1415 = vsub.s32 4, %v1414
        %v1416 = vrot.slane %v367, %v1415
        %v1417 = vlaneseq
        %v1418 = vshrl.u32 %v1417, 7
        %v1419 = vsub.s32 4, %v1418
        %v1420 = vrot.slane %v368, %v1419
        %1423 = vrot.lane.b32.xlu0 %v1416, 4
        %v1424 = vpop.permute.xlu0 %1423
        %1425 = vrot.lane.b32.xlu0 %v1420, 4
        %v1426 = vpop.permute.xlu0 %1425
        %vm1427 = vcmask 31744
        %v1428 = vsel %vm1427, %v1424, %v1426
        %v1432 = vmul.f32 %v1410, %v1424
        %v1433 = vmul.f32 %v1411, %v1428
        %v1434 = vmul.f32 %v1412, %v1426
        %1438 = vrot.lane.b32.xlu0 %v1432, 124
        %v1439 = vpop.permute.xlu0 %1438
        %1440 = vrot.lane.b32.xlu0 %v1433, 124
        %v1441 = vpop.permute.xlu0 %1440
        %1442 = vrot.lane.b32.xlu0 %v1434, 124
        %v1443 = vpop.permute.xlu0 %1442
        %vm1444 = vcmask 1014784
        %v1445 = vsel %vm1444, %v1439, %v1441
        %v1446 = vsel %vm1444, %v1441, %v1443
        %v1449 = vadd.f32 %v1146, %v1445
        %v1450 = vadd.f32 %v1147, %v1446
        %s1451 = scalar_lea.vmem %s5, 120
        %v1452 = vld [vmem:[%s1451] sm:$0xff]
        %v1453 = vld [vmem:[%s1451 + $0x8] sm:$0xff]
        %v1454 = vld [vmem:[%s1451 + $0x10] sm:$0xff]
        %v1455 = vmul.f32 %v1452, %v672
        %v1456 = vmul.f32 %v1453, %v673
        %v1457 = vmul.f32 %v1454, %v670
        %v1458 = vadd.f32 %v1455, 0.0
        %v1459 = vadd.f32 %v1456, 0.0
        %v1460 = vadd.f32 %v1457, 0.0
        %s1461 = scalar_lea.vmem %s5, 384
        %v1462 = vld [vmem:[%s1461] sm:$0xff]
        %v1463 = vld [vmem:[%s1461 + $0x8] sm:$0xff]
        %v1464 = vld [vmem:[%s1461 + $0x10] sm:$0xff]
        %v1465 = vmul.f32 %v1462, %v690
        %v1466 = vmul.f32 %v1463, %v691
        %v1467 = vmul.f32 %v1464, %v688
        %v1468 = vadd.f32 %v1465, 0.0
        %v1469 = vadd.f32 %v1466, 0.0
        %v1470 = vadd.f32 %v1467, 0.0
        %s1471 = scalar_lea.vmem %s5, 648
        %v1472 = vld [vmem:[%s1471] sm:$0xff]
        %v1473 = vld [vmem:[%s1471 + $0x8] sm:$0xff]
        %v1474 = vld [vmem:[%s1471 + $0x10] sm:$0xff]
        %v1475 = vmul.f32 %v1472, %v708
        %v1476 = vmul.f32 %v1473, %v709
        %v1477 = vmul.f32 %v1474, %v706
        %v1478 = vadd.f32 %v1458, %v1475
        %v1479 = vadd.f32 %v1459, %v1476
        %v1480 = vadd.f32 %v1460, %v1477
        %s1481 = scalar_lea.vmem %s5, 912
        %v1482 = vld [vmem:[%s1481] sm:$0xff]
        %v1483 = vld [vmem:[%s1481 + $0x8] sm:$0xff]
        %v1484 = vld [vmem:[%s1481 + $0x10] sm:$0xff]
        %v1485 = vmul.f32 %v1482, %v726
        %v1486 = vmul.f32 %v1483, %v727
        %v1487 = vmul.f32 %v1484, %v724
        %v1488 = vadd.f32 %v1468, %v1485
        %v1489 = vadd.f32 %v1469, %v1486
        %v1490 = vadd.f32 %v1470, %v1487
        %s1491 = scalar_lea.vmem %s5, 1176
        %v1492 = vld [vmem:[%s1491] sm:$0xff]
        %v1493 = vld [vmem:[%s1491 + $0x8] sm:$0xff]
        %v1494 = vld [vmem:[%s1491 + $0x10] sm:$0xff]
        %v1495 = vmul.f32 %v1492, %v744
        %v1496 = vmul.f32 %v1493, %v745
        %v1497 = vmul.f32 %v1494, %v742
        %v1498 = vadd.f32 %v1478, %v1495
        %v1499 = vadd.f32 %v1479, %v1496
        %v1500 = vadd.f32 %v1480, %v1497
        %s1501 = scalar_lea.vmem %s5, 1440
        %v1502 = vld [vmem:[%s1501] sm:$0xff]
        %v1503 = vld [vmem:[%s1501 + $0x8] sm:$0xff]
        %v1504 = vld [vmem:[%s1501 + $0x10] sm:$0xff]
        %v1505 = vmul.f32 %v1502, %v762
        %v1506 = vmul.f32 %v1503, %v763
        %v1507 = vmul.f32 %v1504, %v906
        %v1508 = vadd.f32 %v1488, %v1505
        %v1509 = vadd.f32 %v1489, %v1506
        %v1510 = vadd.f32 %v1490, %v1507
        %s1511 = scalar_lea.vmem %s5, 1704
        %v1512 = vld [vmem:[%s1511] sm:$0xff]
        %v1513 = vld [vmem:[%s1511 + $0x8] sm:$0xff]
        %v1514 = vld [vmem:[%s1511 + $0x10] sm:$0xff]
        %v1515 = vmul.f32 %v1512, %v780
        %v1516 = vmul.f32 %v1513, %v781
        %v1517 = vmul.f32 %v1514, %v778
        %v1518 = vadd.f32 %v1498, %v1515
        %v1519 = vadd.f32 %v1499, %v1516
        %v1520 = vadd.f32 %v1500, %v1517
        %s1521 = scalar_lea.vmem %s5, 1968
        %v1522 = vld [vmem:[%s1521] sm:$0xff]
        %v1523 = vld [vmem:[%s1521 + $0x8] sm:$0xff]
        %v1524 = vld [vmem:[%s1521 + $0x10] sm:$0xff]
        %v1525 = vmul.f32 %v1522, %v798
        %v1526 = vmul.f32 %v1523, %v799
        %v1527 = vmul.f32 %v1524, %v796
        %v1528 = vadd.f32 %v1508, %v1525
        %v1529 = vadd.f32 %v1509, %v1526
        %v1530 = vadd.f32 %v1510, %v1527
        %s1531 = scalar_lea.vmem %s5, 2232
        %v1532 = vld [vmem:[%s1531] sm:$0xff]
        %v1533 = vld [vmem:[%s1531 + $0x8] sm:$0xff]
        %v1534 = vld [vmem:[%s1531 + $0x10] sm:$0xff]
        %v1535 = vmul.f32 %v1532, %v673
        %v1536 = vmul.f32 %v1533, %v809
        %v1537 = vmul.f32 %v1534, %v666
        %v1538 = vadd.f32 %v1518, %v1535
        %v1539 = vadd.f32 %v1519, %v1536
        %v1540 = vadd.f32 %v1520, %v1537
        %s1541 = scalar_lea.vmem %s5, 2496
        %v1542 = vld [vmem:[%s1541] sm:$0xff]
        %v1543 = vld [vmem:[%s1541 + $0x8] sm:$0xff]
        %v1544 = vld [vmem:[%s1541 + $0x10] sm:$0xff]
        %v1545 = vmul.f32 %v1542, %v691
        %v1546 = vmul.f32 %v1543, %v818
        %v1547 = vmul.f32 %v1544, %v684
        %v1548 = vadd.f32 %v1528, %v1545
        %v1549 = vadd.f32 %v1529, %v1546
        %v1550 = vadd.f32 %v1530, %v1547
        %s1551 = scalar_lea.vmem %s5, 2760
        %v1552 = vld [vmem:[%s1551] sm:$0xff]
        %v1553 = vld [vmem:[%s1551 + $0x8] sm:$0xff]
        %v1554 = vld [vmem:[%s1551 + $0x10] sm:$0xff]
        %v1555 = vmul.f32 %v1552, %v709
        %v1556 = vmul.f32 %v1553, %v827
        %v1557 = vmul.f32 %v1554, %v702
        %v1558 = vadd.f32 %v1538, %v1555
        %v1559 = vadd.f32 %v1539, %v1556
        %v1560 = vadd.f32 %v1540, %v1557
        %v1561 = vadd.f32 %v1558, %v1548
        %v1562 = vadd.f32 %v1559, %v1549
        %v1563 = vadd.f32 %v1560, %v1550
        %v1564 = vlaneseq
        %v1565 = vshrl.u32 %v1564, 7
        %v1566 = vsub.s32 5, %v1565
        %v1567 = vrot.slane %v367, %v1566
        %v1568 = vlaneseq
        %v1569 = vshrl.u32 %v1568, 7
        %v1570 = vsub.s32 5, %v1569
        %v1571 = vrot.slane %v368, %v1570
        %1574 = vrot.lane.b32.xlu0 %v1567, 5
        %v1575 = vpop.permute.xlu0 %1574
        %1576 = vrot.lane.b32.xlu0 %v1571, 5
        %v1577 = vpop.permute.xlu0 %1576
        %v1578 = vsel %vm761, %v1575, %v1577
        %v1582 = vmul.f32 %v1561, %v1575
        %v1583 = vmul.f32 %v1562, %v1578
        %v1584 = vmul.f32 %v1563, %v1577
        %1588 = vrot.lane.b32.xlu0 %v1582, 124
        %v1589 = vpop.permute.xlu0 %1588
        %1590 = vrot.lane.b32.xlu0 %v1583, 124
        %v1591 = vpop.permute.xlu0 %1590
        %1592 = vrot.lane.b32.xlu0 %v1584, 124
        %v1593 = vpop.permute.xlu0 %1592
        %v1594 = vsel %vm1444, %v1589, %v1591
        %v1595 = vsel %vm1444, %v1591, %v1593
        %v1599 = vadd.f32 %v1297, %v1594
        %v1600 = vadd.f32 %v1298, %v1595
        %v1601 = vadd.f32 %v1299, %v1593
        %s1602 = scalar_lea.vmem %s5, 144
        %v1603 = vld [vmem:[%s1602] sm:$0xff]
        %v1604 = vld [vmem:[%s1602 + $0x8] sm:$0xff]
        %v1605 = vld [vmem:[%s1602 + $0x10] sm:$0xff]
        %v1606 = vmul.f32 %v1603, %v672
        %v1607 = vmul.f32 %v1604, %v673
        %v1608 = vmul.f32 %v1605, %v670
        %v1609 = vadd.f32 %v1606, 0.0
        %v1610 = vadd.f32 %v1607, 0.0
        %v1611 = vadd.f32 %v1608, 0.0
        %s1612 = scalar_lea.vmem %s5, 408
        %v1613 = vld [vmem:[%s1612] sm:$0xff]
        %v1614 = vld [vmem:[%s1612 + $0x8] sm:$0xff]
        %v1615 = vld [vmem:[%s1612 + $0x10] sm:$0xff]
        %v1616 = vmul.f32 %v1613, %v690
        %v1617 = vmul.f32 %v1614, %v691
        %v1618 = vmul.f32 %v1615, %v688
        %v1619 = vadd.f32 %v1616, 0.0
        %v1620 = vadd.f32 %v1617, 0.0
        %v1621 = vadd.f32 %v1618, 0.0
        %s1622 = scalar_lea.vmem %s5, 672
        %v1623 = vld [vmem:[%s1622] sm:$0xff]
        %v1624 = vld [vmem:[%s1622 + $0x8] sm:$0xff]
        %v1625 = vld [vmem:[%s1622 + $0x10] sm:$0xff]
        %v1626 = vmul.f32 %v1623, %v708
        %v1627 = vmul.f32 %v1624, %v709
        %v1628 = vmul.f32 %v1625, %v706
        %v1629 = vadd.f32 %v1609, %v1626
        %v1630 = vadd.f32 %v1610, %v1627
        %v1631 = vadd.f32 %v1611, %v1628
        %s1632 = scalar_lea.vmem %s5, 936
        %v1633 = vld [vmem:[%s1632] sm:$0xff]
        %v1634 = vld [vmem:[%s1632 + $0x8] sm:$0xff]
        %v1635 = vld [vmem:[%s1632 + $0x10] sm:$0xff]
        %v1636 = vmul.f32 %v1633, %v726
        %v1637 = vmul.f32 %v1634, %v727
        %v1638 = vmul.f32 %v1635, %v724
        %v1639 = vadd.f32 %v1619, %v1636
        %v1640 = vadd.f32 %v1620, %v1637
        %v1641 = vadd.f32 %v1621, %v1638
        %s1642 = scalar_lea.vmem %s5, 1200
        %v1643 = vld [vmem:[%s1642] sm:$0xff]
        %v1644 = vld [vmem:[%s1642 + $0x8] sm:$0xff]
        %v1645 = vld [vmem:[%s1642 + $0x10] sm:$0xff]
        %v1646 = vmul.f32 %v1643, %v744
        %v1647 = vmul.f32 %v1644, %v745
        %v1648 = vmul.f32 %v1645, %v742
        %v1649 = vadd.f32 %v1629, %v1646
        %v1650 = vadd.f32 %v1630, %v1647
        %v1651 = vadd.f32 %v1631, %v1648
        %s1652 = scalar_lea.vmem %s5, 1464
        %v1653 = vld [vmem:[%s1652] sm:$0xff]
        %v1654 = vld [vmem:[%s1652 + $0x8] sm:$0xff]
        %v1655 = vld [vmem:[%s1652 + $0x10] sm:$0xff]
        %v1656 = vmul.f32 %v1653, %v762
        %v1657 = vmul.f32 %v1654, %v763
        %v1658 = vmul.f32 %v1655, %v906
        %v1659 = vadd.f32 %v1639, %v1656
        %v1660 = vadd.f32 %v1640, %v1657
        %v1661 = vadd.f32 %v1641, %v1658
        %s1662 = scalar_lea.vmem %s5, 1728
        %v1663 = vld [vmem:[%s1662] sm:$0xff]
        %v1664 = vld [vmem:[%s1662 + $0x8] sm:$0xff]
        %v1665 = vld [vmem:[%s1662 + $0x10] sm:$0xff]
        %v1666 = vmul.f32 %v1663, %v780
        %v1667 = vmul.f32 %v1664, %v781
        %v1668 = vmul.f32 %v1665, %v778
        %v1669 = vadd.f32 %v1649, %v1666
        %v1670 = vadd.f32 %v1650, %v1667
        %v1671 = vadd.f32 %v1651, %v1668
        %s1672 = scalar_lea.vmem %s5, 1992
        %v1673 = vld [vmem:[%s1672] sm:$0xff]
        %v1674 = vld [vmem:[%s1672 + $0x8] sm:$0xff]
        %v1675 = vld [vmem:[%s1672 + $0x10] sm:$0xff]
        %v1676 = vmul.f32 %v1673, %v798
        %v1677 = vmul.f32 %v1674, %v799
        %v1678 = vmul.f32 %v1675, %v796
        %v1679 = vadd.f32 %v1659, %v1676
        %v1680 = vadd.f32 %v1660, %v1677
        %v1681 = vadd.f32 %v1661, %v1678
        %s1682 = scalar_lea.vmem %s5, 2256
        %v1683 = vld [vmem:[%s1682] sm:$0xff]
        %v1684 = vld [vmem:[%s1682 + $0x8] sm:$0xff]
        %v1685 = vld [vmem:[%s1682 + $0x10] sm:$0xff]
        %v1686 = vmul.f32 %v1683, %v673
        %v1687 = vmul.f32 %v1684, %v809
        %v1688 = vmul.f32 %v1685, %v666
        %v1689 = vadd.f32 %v1669, %v1686
        %v1690 = vadd.f32 %v1670, %v1687
        %v1691 = vadd.f32 %v1671, %v1688
        %s1692 = scalar_lea.vmem %s5, 2520
        %v1693 = vld [vmem:[%s1692] sm:$0xff]
        %v1694 = vld [vmem:[%s1692 + $0x8] sm:$0xff]
        %v1695 = vld [vmem:[%s1692 + $0x10] sm:$0xff]
        %v1696 = vmul.f32 %v1693, %v691
        %v1697 = vmul.f32 %v1694, %v818
        %v1698 = vmul.f32 %v1695, %v684
        %v1699 = vadd.f32 %v1679, %v1696
        %v1700 = vadd.f32 %v1680, %v1697
        %v1701 = vadd.f32 %v1681, %v1698
        %s1702 = scalar_lea.vmem %s5, 2784
        %v1703 = vld [vmem:[%s1702] sm:$0xff]
        %v1704 = vld [vmem:[%s1702 + $0x8] sm:$0xff]
        %v1705 = vld [vmem:[%s1702 + $0x10] sm:$0xff]
        %v1706 = vmul.f32 %v1703, %v709
        %v1707 = vmul.f32 %v1704, %v827
        %v1708 = vmul.f32 %v1705, %v702
        %v1709 = vadd.f32 %v1689, %v1706
        %v1710 = vadd.f32 %v1690, %v1707
        %v1711 = vadd.f32 %v1691, %v1708
        %v1712 = vadd.f32 %v1709, %v1699
        %v1713 = vadd.f32 %v1710, %v1700
        %v1714 = vadd.f32 %v1711, %v1701
        %v1715 = vlaneseq
        %v1716 = vshrl.u32 %v1715, 7
        %v1717 = vsub.s32 6, %v1716
        %v1718 = vrot.slane %v367, %v1717
        %v1719 = vlaneseq
        %v1720 = vshrl.u32 %v1719, 7
        %v1721 = vsub.s32 6, %v1720
        %v1722 = vrot.slane %v368, %v1721
        %1725 = vrot.lane.b32.xlu0 %v1718, 6
        %v1726 = vpop.permute.xlu0 %1725
        %1727 = vrot.lane.b32.xlu0 %v1722, 6
        %v1728 = vpop.permute.xlu0 %1727
        %vm1729 = vcmask 48128
        %v1730 = vsel %vm1729, %v1726, %v1728
        %v1734 = vmul.f32 %v1712, %v1726
        %v1735 = vmul.f32 %v1713, %v1730
        %v1736 = vmul.f32 %v1714, %v1728
        %1740 = vrot.lane.b32.xlu0 %v1734, 122
        %v1741 = vpop.permute.xlu0 %1740
        %1742 = vrot.lane.b32.xlu0 %v1735, 122
        %v1743 = vpop.permute.xlu0 %1742
        %1744 = vrot.lane.b32.xlu0 %v1736, 122
        %v1745 = vpop.permute.xlu0 %1744
        %vm1746 = vcmask 998400
        %v1747 = vsel %vm1746, %v1741, %v1743
        %v1748 = vsel %vm1746, %v1743, %v1745
        %v1751 = vadd.f32 %v1449, %v1747
        %v1752 = vadd.f32 %v1450, %v1748
        %s1753 = scalar_lea.vmem %s5, 168
        %v1754 = vld [vmem:[%s1753] sm:$0xff]
        %v1755 = vld [vmem:[%s1753 + $0x8] sm:$0xff]
        %v1756 = vld [vmem:[%s1753 + $0x10] sm:$0xff]
        %v1757 = vmul.f32 %v1754, %v672
        %v1758 = vmul.f32 %v1755, %v673
        %v1759 = vmul.f32 %v1756, %v670
        %v1760 = vadd.f32 %v1757, 0.0
        %v1761 = vadd.f32 %v1758, 0.0
        %v1762 = vadd.f32 %v1759, 0.0
        %s1763 = scalar_lea.vmem %s5, 432
        %v1764 = vld [vmem:[%s1763] sm:$0xff]
        %v1765 = vld [vmem:[%s1763 + $0x8] sm:$0xff]
        %v1766 = vld [vmem:[%s1763 + $0x10] sm:$0xff]
        %v1767 = vmul.f32 %v1764, %v690
        %v1768 = vmul.f32 %v1765, %v691
        %v1769 = vmul.f32 %v1766, %v688
        %v1770 = vadd.f32 %v1767, 0.0
        %v1771 = vadd.f32 %v1768, 0.0
        %v1772 = vadd.f32 %v1769, 0.0
        %s1773 = scalar_lea.vmem %s5, 696
        %v1774 = vld [vmem:[%s1773] sm:$0xff]
        %v1775 = vld [vmem:[%s1773 + $0x8] sm:$0xff]
        %v1776 = vld [vmem:[%s1773 + $0x10] sm:$0xff]
        %v1777 = vmul.f32 %v1774, %v708
        %v1778 = vmul.f32 %v1775, %v709
        %v1779 = vmul.f32 %v1776, %v706
        %v1780 = vadd.f32 %v1760, %v1777
        %v1781 = vadd.f32 %v1761, %v1778
        %v1782 = vadd.f32 %v1762, %v1779
        %s1783 = scalar_lea.vmem %s5, 960
        %v1784 = vld [vmem:[%s1783] sm:$0xff]
        %v1785 = vld [vmem:[%s1783 + $0x8] sm:$0xff]
        %v1786 = vld [vmem:[%s1783 + $0x10] sm:$0xff]
        %v1787 = vmul.f32 %v1784, %v726
        %v1788 = vmul.f32 %v1785, %v727
        %v1789 = vmul.f32 %v1786, %v724
        %v1790 = vadd.f32 %v1770, %v1787
        %v1791 = vadd.f32 %v1771, %v1788
        %v1792 = vadd.f32 %v1772, %v1789
        %s1793 = scalar_lea.vmem %s5, 1224
        %v1794 = vld [vmem:[%s1793] sm:$0xff]
        %v1795 = vld [vmem:[%s1793 + $0x8] sm:$0xff]
        %v1796 = vld [vmem:[%s1793 + $0x10] sm:$0xff]
        %v1797 = vmul.f32 %v1794, %v744
        %v1798 = vmul.f32 %v1795, %v745
        %v1799 = vmul.f32 %v1796, %v742
        %v1800 = vadd.f32 %v1780, %v1797
        %v1801 = vadd.f32 %v1781, %v1798
        %v1802 = vadd.f32 %v1782, %v1799
        %s1803 = scalar_lea.vmem %s5, 1488
        %v1804 = vld [vmem:[%s1803] sm:$0xff]
        %v1805 = vld [vmem:[%s1803 + $0x8] sm:$0xff]
        %v1806 = vld [vmem:[%s1803 + $0x10] sm:$0xff]
        %v1807 = vmul.f32 %v1804, %v762
        %v1808 = vmul.f32 %v1805, %v763
        %v1809 = vmul.f32 %v1806, %v906
        %v1810 = vadd.f32 %v1790, %v1807
        %v1811 = vadd.f32 %v1791, %v1808
        %v1812 = vadd.f32 %v1792, %v1809
        %s1813 = scalar_lea.vmem %s5, 1752
        %v1814 = vld [vmem:[%s1813] sm:$0xff]
        %v1815 = vld [vmem:[%s1813 + $0x8] sm:$0xff]
        %v1816 = vld [vmem:[%s1813 + $0x10] sm:$0xff]
        %v1817 = vmul.f32 %v1814, %v780
        %v1818 = vmul.f32 %v1815, %v781
        %v1819 = vmul.f32 %v1816, %v778
        %v1820 = vadd.f32 %v1800, %v1817
        %v1821 = vadd.f32 %v1801, %v1818
        %v1822 = vadd.f32 %v1802, %v1819
        %s1823 = scalar_lea.vmem %s5, 2016
        %v1824 = vld [vmem:[%s1823] sm:$0xff]
        %v1825 = vld [vmem:[%s1823 + $0x8] sm:$0xff]
        %v1826 = vld [vmem:[%s1823 + $0x10] sm:$0xff]
        %v1827 = vmul.f32 %v1824, %v798
        %v1828 = vmul.f32 %v1825, %v799
        %v1829 = vmul.f32 %v1826, %v796
        %v1830 = vadd.f32 %v1810, %v1827
        %v1831 = vadd.f32 %v1811, %v1828
        %v1832 = vadd.f32 %v1812, %v1829
        %s1833 = scalar_lea.vmem %s5, 2280
        %v1834 = vld [vmem:[%s1833] sm:$0xff]
        %v1835 = vld [vmem:[%s1833 + $0x8] sm:$0xff]
        %v1836 = vld [vmem:[%s1833 + $0x10] sm:$0xff]
        %v1837 = vmul.f32 %v1834, %v673
        %v1838 = vmul.f32 %v1835, %v809
        %v1839 = vmul.f32 %v1836, %v666
        %v1840 = vadd.f32 %v1820, %v1837
        %v1841 = vadd.f32 %v1821, %v1838
        %v1842 = vadd.f32 %v1822, %v1839
        %s1843 = scalar_lea.vmem %s5, 2544
        %v1844 = vld [vmem:[%s1843] sm:$0xff]
        %v1845 = vld [vmem:[%s1843 + $0x8] sm:$0xff]
        %v1846 = vld [vmem:[%s1843 + $0x10] sm:$0xff]
        %v1847 = vmul.f32 %v1844, %v691
        %v1848 = vmul.f32 %v1845, %v818
        %v1849 = vmul.f32 %v1846, %v684
        %v1850 = vadd.f32 %v1830, %v1847
        %v1851 = vadd.f32 %v1831, %v1848
        %v1852 = vadd.f32 %v1832, %v1849
        %s1853 = scalar_lea.vmem %s5, 2808
        %v1854 = vld [vmem:[%s1853] sm:$0xff]
        %v1855 = vld [vmem:[%s1853 + $0x8] sm:$0xff]
        %v1856 = vld [vmem:[%s1853 + $0x10] sm:$0xff]
        %v1857 = vmul.f32 %v1854, %v709
        %v1858 = vmul.f32 %v1855, %v827
        %v1859 = vmul.f32 %v1856, %v702
        %v1860 = vadd.f32 %v1840, %v1857
        %v1861 = vadd.f32 %v1841, %v1858
        %v1862 = vadd.f32 %v1842, %v1859
        %v1863 = vadd.f32 %v1860, %v1850
        %v1864 = vadd.f32 %v1861, %v1851
        %v1865 = vadd.f32 %v1862, %v1852
        %v1866 = vlaneseq
        %v1867 = vshrl.u32 %v1866, 7
        %v1868 = vsub.s32 7, %v1867
        %v1869 = vrot.slane %v367, %v1868
        %v1870 = vlaneseq
        %v1871 = vshrl.u32 %v1870, 7
        %v1872 = vsub.s32 7, %v1871
        %v1873 = vrot.slane %v368, %v1872
        %1876 = vrot.lane.b32.xlu0 %v1869, 7
        %v1877 = vpop.permute.xlu0 %1876
        %1878 = vrot.lane.b32.xlu0 %v1873, 7
        %v1879 = vpop.permute.xlu0 %1878
        %vm1880 = vcmask 56320
        %v1881 = vsel %vm1880, %v1877, %v1879
        %v1885 = vmul.f32 %v1863, %v1877
        %v1886 = vmul.f32 %v1864, %v1881
        %v1887 = vmul.f32 %v1865, %v1879
        %1891 = vrot.lane.b32.xlu0 %v1885, 122
        %v1892 = vpop.permute.xlu0 %1891
        %1893 = vrot.lane.b32.xlu0 %v1886, 122
        %v1894 = vpop.permute.xlu0 %1893
        %1895 = vrot.lane.b32.xlu0 %v1887, 122
        %v1896 = vpop.permute.xlu0 %1895
        %v1897 = vsel %vm1746, %v1892, %v1894
        %v1898 = vsel %vm1746, %v1894, %v1896
        %v1902 = vadd.f32 %v1599, %v1897
        %v1903 = vadd.f32 %v1600, %v1898
        %v1904 = vadd.f32 %v1601, %v1896
        %s1905 = scalar_lea.vmem %s5, 192
        %v1906 = vld [vmem:[%s1905] sm:$0xff]
        %v1907 = vld [vmem:[%s1905 + $0x8] sm:$0xff]
        %v1908 = vld [vmem:[%s1905 + $0x10] sm:$0xff]
        %v1909 = vmul.f32 %v1906, %v672
        %v1910 = vmul.f32 %v1907, %v673
        %v1911 = vmul.f32 %v1908, %v670
        %v1912 = vadd.f32 %v1909, 0.0
        %v1913 = vadd.f32 %v1910, 0.0
        %v1914 = vadd.f32 %v1911, 0.0
        %s1915 = scalar_lea.vmem %s5, 456
        %v1916 = vld [vmem:[%s1915] sm:$0xff]
        %v1917 = vld [vmem:[%s1915 + $0x8] sm:$0xff]
        %v1918 = vld [vmem:[%s1915 + $0x10] sm:$0xff]
        %v1919 = vmul.f32 %v1916, %v690
        %v1920 = vmul.f32 %v1917, %v691
        %v1921 = vmul.f32 %v1918, %v688
        %v1922 = vadd.f32 %v1919, 0.0
        %v1923 = vadd.f32 %v1920, 0.0
        %v1924 = vadd.f32 %v1921, 0.0
        %s1925 = scalar_lea.vmem %s5, 720
        %v1926 = vld [vmem:[%s1925] sm:$0xff]
        %v1927 = vld [vmem:[%s1925 + $0x8] sm:$0xff]
        %v1928 = vld [vmem:[%s1925 + $0x10] sm:$0xff]
        %v1929 = vmul.f32 %v1926, %v708
        %v1930 = vmul.f32 %v1927, %v709
        %v1931 = vmul.f32 %v1928, %v706
        %v1932 = vadd.f32 %v1912, %v1929
        %v1933 = vadd.f32 %v1913, %v1930
        %v1934 = vadd.f32 %v1914, %v1931
        %s1935 = scalar_lea.vmem %s5, 984
        %v1936 = vld [vmem:[%s1935] sm:$0xff]
        %v1937 = vld [vmem:[%s1935 + $0x8] sm:$0xff]
        %v1938 = vld [vmem:[%s1935 + $0x10] sm:$0xff]
        %v1939 = vmul.f32 %v1936, %v726
        %v1940 = vmul.f32 %v1937, %v727
        %v1941 = vmul.f32 %v1938, %v724
        %v1942 = vadd.f32 %v1922, %v1939
        %v1943 = vadd.f32 %v1923, %v1940
        %v1944 = vadd.f32 %v1924, %v1941
        %s1945 = scalar_lea.vmem %s5, 1248
        %v1946 = vld [vmem:[%s1945] sm:$0xff]
        %v1947 = vld [vmem:[%s1945 + $0x8] sm:$0xff]
        %v1948 = vld [vmem:[%s1945 + $0x10] sm:$0xff]
        %v1949 = vmul.f32 %v1946, %v744
        %v1950 = vmul.f32 %v1947, %v745
        %v1951 = vmul.f32 %v1948, %v742
        %v1952 = vadd.f32 %v1932, %v1949
        %v1953 = vadd.f32 %v1933, %v1950
        %v1954 = vadd.f32 %v1934, %v1951
        %s1955 = scalar_lea.vmem %s5, 1512
        %v1956 = vld [vmem:[%s1955] sm:$0xff]
        %v1957 = vld [vmem:[%s1955 + $0x8] sm:$0xff]
        %v1958 = vld [vmem:[%s1955 + $0x10] sm:$0xff]
        %v1959 = vmul.f32 %v1956, %v762
        %v1960 = vmul.f32 %v1957, %v763
        %v1961 = vmul.f32 %v1958, %v906
        %v1962 = vadd.f32 %v1942, %v1959
        %v1963 = vadd.f32 %v1943, %v1960
        %v1964 = vadd.f32 %v1944, %v1961
        %s1965 = scalar_lea.vmem %s5, 1776
        %v1966 = vld [vmem:[%s1965] sm:$0xff]
        %v1967 = vld [vmem:[%s1965 + $0x8] sm:$0xff]
        %v1968 = vld [vmem:[%s1965 + $0x10] sm:$0xff]
        %v1969 = vmul.f32 %v1966, %v780
        %v1970 = vmul.f32 %v1967, %v781
        %v1971 = vmul.f32 %v1968, %v778
        %v1972 = vadd.f32 %v1952, %v1969
        %v1973 = vadd.f32 %v1953, %v1970
        %v1974 = vadd.f32 %v1954, %v1971
        %s1975 = scalar_lea.vmem %s5, 2040
        %v1976 = vld [vmem:[%s1975] sm:$0xff]
        %v1977 = vld [vmem:[%s1975 + $0x8] sm:$0xff]
        %v1978 = vld [vmem:[%s1975 + $0x10] sm:$0xff]
        %v1979 = vmul.f32 %v1976, %v798
        %v1980 = vmul.f32 %v1977, %v799
        %v1981 = vmul.f32 %v1978, %v796
        %v1982 = vadd.f32 %v1962, %v1979
        %v1983 = vadd.f32 %v1963, %v1980
        %v1984 = vadd.f32 %v1964, %v1981
        %s1985 = scalar_lea.vmem %s5, 2304
        %v1986 = vld [vmem:[%s1985] sm:$0xff]
        %v1987 = vld [vmem:[%s1985 + $0x8] sm:$0xff]
        %v1988 = vld [vmem:[%s1985 + $0x10] sm:$0xff]
        %v1989 = vmul.f32 %v1986, %v673
        %v1990 = vmul.f32 %v1987, %v809
        %v1991 = vmul.f32 %v1988, %v666
        %v1992 = vadd.f32 %v1972, %v1989
        %v1993 = vadd.f32 %v1973, %v1990
        %v1994 = vadd.f32 %v1974, %v1991
        %s1995 = scalar_lea.vmem %s5, 2568
        %v1996 = vld [vmem:[%s1995] sm:$0xff]
        %v1997 = vld [vmem:[%s1995 + $0x8] sm:$0xff]
        %v1998 = vld [vmem:[%s1995 + $0x10] sm:$0xff]
        %v1999 = vmul.f32 %v1996, %v691
        %v2000 = vmul.f32 %v1997, %v818
        %v2001 = vmul.f32 %v1998, %v684
        %v2002 = vadd.f32 %v1982, %v1999
        %v2003 = vadd.f32 %v1983, %v2000
        %v2004 = vadd.f32 %v1984, %v2001
        %s2005 = scalar_lea.vmem %s5, 2832
        %v2006 = vld [vmem:[%s2005] sm:$0xff]
        %v2007 = vld [vmem:[%s2005 + $0x8] sm:$0xff]
        %v2008 = vld [vmem:[%s2005 + $0x10] sm:$0xff]
        %v2009 = vmul.f32 %v2006, %v709
        %v2010 = vmul.f32 %v2007, %v827
        %v2011 = vmul.f32 %v2008, %v702
        %v2012 = vadd.f32 %v1992, %v2009
        %v2013 = vadd.f32 %v1993, %v2010
        %v2014 = vadd.f32 %v1994, %v2011
        %v2015 = vadd.f32 %v2012, %v2002
        %v2016 = vadd.f32 %v2013, %v2003
        %v2017 = vadd.f32 %v2014, %v2004
        %v2018 = vlaneseq
        %v2019 = vshrl.u32 %v2018, 7
        %v2020 = vsub.s32 0, %v2019
        %v2021 = vrot.slane %v369, %v2020
        %v2022 = vlaneseq
        %v2023 = vshrl.u32 %v2022, 7
        %v2024 = vsub.s32 0, %v2023
        %v2025 = vrot.slane %v370, %v2024
        %2028 = vrot.lane.b32.xlu0 %v2021, 8
        %v2029 = vpop.permute.xlu0 %2028
        %2030 = vrot.lane.b32.xlu0 %v2025, 8
        %v2031 = vpop.permute.xlu0 %2030
        %vm2032 = vcmask 64512
        %v2033 = vsel %vm2032, %v2029, %v2031
        %v2037 = vmul.f32 %v2015, %v2029
        %v2038 = vmul.f32 %v2016, %v2033
        %v2039 = vmul.f32 %v2017, %v2031
        %2043 = vrot.lane.b32.xlu0 %v2037, 120
        %v2044 = vpop.permute.xlu0 %2043
        %2045 = vrot.lane.b32.xlu0 %v2038, 120
        %v2046 = vpop.permute.xlu0 %2045
        %2047 = vrot.lane.b32.xlu0 %v2039, 120
        %v2048 = vpop.permute.xlu0 %2047
        %vm2049 = vcmask 982016
        %v2050 = vsel %vm2049, %v2044, %v2046
        %v2051 = vsel %vm2049, %v2046, %v2048
        %v2054 = vadd.f32 %v1751, %v2050
        %v2055 = vadd.f32 %v1752, %v2051
        %s2056 = scalar_lea.vmem %s5, 216
        %v2057 = vld [vmem:[%s2056] sm:$0xff]
        %v2058 = vld [vmem:[%s2056 + $0x8] sm:$0xff]
        %v2059 = vld [vmem:[%s2056 + $0x10] sm:$0xff]
        %v2060 = vmul.f32 %v2057, %v672
        %v2061 = vmul.f32 %v2058, %v673
        %v2062 = vmul.f32 %v2059, %v670
        %v2063 = vadd.f32 %v2060, 0.0
        %v2064 = vadd.f32 %v2061, 0.0
        %v2065 = vadd.f32 %v2062, 0.0
        %s2066 = scalar_lea.vmem %s5, 480
        %v2067 = vld [vmem:[%s2066] sm:$0xff]
        %v2068 = vld [vmem:[%s2066 + $0x8] sm:$0xff]
        %v2069 = vld [vmem:[%s2066 + $0x10] sm:$0xff]
        %v2070 = vmul.f32 %v2067, %v690
        %v2071 = vmul.f32 %v2068, %v691
        %v2072 = vmul.f32 %v2069, %v688
        %v2073 = vadd.f32 %v2070, 0.0
        %v2074 = vadd.f32 %v2071, 0.0
        %v2075 = vadd.f32 %v2072, 0.0
        %s2076 = scalar_lea.vmem %s5, 744
        %v2077 = vld [vmem:[%s2076] sm:$0xff]
        %v2078 = vld [vmem:[%s2076 + $0x8] sm:$0xff]
        %v2079 = vld [vmem:[%s2076 + $0x10] sm:$0xff]
        %v2080 = vmul.f32 %v2077, %v708
        %v2081 = vmul.f32 %v2078, %v709
        %v2082 = vmul.f32 %v2079, %v706
        %v2083 = vadd.f32 %v2063, %v2080
        %v2084 = vadd.f32 %v2064, %v2081
        %v2085 = vadd.f32 %v2065, %v2082
        %s2086 = scalar_lea.vmem %s5, 1008
        %v2087 = vld [vmem:[%s2086] sm:$0xff]
        %v2088 = vld [vmem:[%s2086 + $0x8] sm:$0xff]
        %v2089 = vld [vmem:[%s2086 + $0x10] sm:$0xff]
        %v2090 = vmul.f32 %v2087, %v726
        %v2091 = vmul.f32 %v2088, %v727
        %v2092 = vmul.f32 %v2089, %v724
        %v2093 = vadd.f32 %v2073, %v2090
        %v2094 = vadd.f32 %v2074, %v2091
        %v2095 = vadd.f32 %v2075, %v2092
        %s2096 = scalar_lea.vmem %s5, 1272
        %v2097 = vld [vmem:[%s2096] sm:$0xff]
        %v2098 = vld [vmem:[%s2096 + $0x8] sm:$0xff]
        %v2099 = vld [vmem:[%s2096 + $0x10] sm:$0xff]
        %v2100 = vmul.f32 %v2097, %v744
        %v2101 = vmul.f32 %v2098, %v745
        %v2102 = vmul.f32 %v2099, %v742
        %v2103 = vadd.f32 %v2083, %v2100
        %v2104 = vadd.f32 %v2084, %v2101
        %v2105 = vadd.f32 %v2085, %v2102
        %s2106 = scalar_lea.vmem %s5, 1536
        %v2107 = vld [vmem:[%s2106] sm:$0xff]
        %v2108 = vld [vmem:[%s2106 + $0x8] sm:$0xff]
        %v2109 = vld [vmem:[%s2106 + $0x10] sm:$0xff]
        %v2110 = vmul.f32 %v2107, %v762
        %v2111 = vmul.f32 %v2108, %v763
        %v2112 = vmul.f32 %v2109, %v906
        %v2113 = vadd.f32 %v2093, %v2110
        %v2114 = vadd.f32 %v2094, %v2111
        %v2115 = vadd.f32 %v2095, %v2112
        %s2116 = scalar_lea.vmem %s5, 1800
        %v2117 = vld [vmem:[%s2116] sm:$0xff]
        %v2118 = vld [vmem:[%s2116 + $0x8] sm:$0xff]
        %v2119 = vld [vmem:[%s2116 + $0x10] sm:$0xff]
        %v2120 = vmul.f32 %v2117, %v780
        %v2121 = vmul.f32 %v2118, %v781
        %v2122 = vmul.f32 %v2119, %v778
        %v2123 = vadd.f32 %v2103, %v2120
        %v2124 = vadd.f32 %v2104, %v2121
        %v2125 = vadd.f32 %v2105, %v2122
        %s2126 = scalar_lea.vmem %s5, 2064
        %v2127 = vld [vmem:[%s2126] sm:$0xff]
        %v2128 = vld [vmem:[%s2126 + $0x8] sm:$0xff]
        %v2129 = vld [vmem:[%s2126 + $0x10] sm:$0xff]
        %v2130 = vmul.f32 %v2127, %v798
        %v2131 = vmul.f32 %v2128, %v799
        %v2132 = vmul.f32 %v2129, %v796
        %v2133 = vadd.f32 %v2113, %v2130
        %v2134 = vadd.f32 %v2114, %v2131
        %v2135 = vadd.f32 %v2115, %v2132
        %s2136 = scalar_lea.vmem %s5, 2328
        %v2137 = vld [vmem:[%s2136] sm:$0xff]
        %v2138 = vld [vmem:[%s2136 + $0x8] sm:$0xff]
        %v2139 = vld [vmem:[%s2136 + $0x10] sm:$0xff]
        %v2140 = vmul.f32 %v2137, %v673
        %v2141 = vmul.f32 %v2138, %v809
        %v2142 = vmul.f32 %v2139, %v666
        %v2143 = vadd.f32 %v2123, %v2140
        %v2144 = vadd.f32 %v2124, %v2141
        %v2145 = vadd.f32 %v2125, %v2142
        %s2146 = scalar_lea.vmem %s5, 2592
        %v2147 = vld [vmem:[%s2146] sm:$0xff]
        %v2148 = vld [vmem:[%s2146 + $0x8] sm:$0xff]
        %v2149 = vld [vmem:[%s2146 + $0x10] sm:$0xff]
        %v2150 = vmul.f32 %v2147, %v691
        %v2151 = vmul.f32 %v2148, %v818
        %v2152 = vmul.f32 %v2149, %v684
        %v2153 = vadd.f32 %v2133, %v2150
        %v2154 = vadd.f32 %v2134, %v2151
        %v2155 = vadd.f32 %v2135, %v2152
        %s2156 = scalar_lea.vmem %s5, 2856
        %v2157 = vld [vmem:[%s2156] sm:$0xff]
        %v2158 = vld [vmem:[%s2156 + $0x8] sm:$0xff]
        %v2159 = vld [vmem:[%s2156 + $0x10] sm:$0xff]
        %v2160 = vmul.f32 %v2157, %v709
        %v2161 = vmul.f32 %v2158, %v827
        %v2162 = vmul.f32 %v2159, %v702
        %v2163 = vadd.f32 %v2143, %v2160
        %v2164 = vadd.f32 %v2144, %v2161
        %v2165 = vadd.f32 %v2145, %v2162
        %v2166 = vadd.f32 %v2163, %v2153
        %v2167 = vadd.f32 %v2164, %v2154
        %v2168 = vadd.f32 %v2165, %v2155
        %v2169 = vlaneseq
        %v2170 = vshrl.u32 %v2169, 7
        %v2171 = vsub.s32 1, %v2170
        %v2172 = vrot.slane %v369, %v2171
        %v2173 = vlaneseq
        %v2174 = vshrl.u32 %v2173, 7
        %v2175 = vsub.s32 1, %v2174
        %v2176 = vrot.slane %v370, %v2175
        %2179 = vrot.lane.b32.xlu0 %v2172, 9
        %v2180 = vpop.permute.xlu0 %2179
        %2181 = vrot.lane.b32.xlu0 %v2176, 9
        %v2182 = vpop.permute.xlu0 %2181
        %vm2183 = vcmask 72704
        %v2184 = vsel %vm2183, %v2180, %v2182
        %v2188 = vmul.f32 %v2166, %v2180
        %v2189 = vmul.f32 %v2167, %v2184
        %v2190 = vmul.f32 %v2168, %v2182
        %2194 = vrot.lane.b32.xlu0 %v2188, 120
        %v2195 = vpop.permute.xlu0 %2194
        %2196 = vrot.lane.b32.xlu0 %v2189, 120
        %v2197 = vpop.permute.xlu0 %2196
        %2198 = vrot.lane.b32.xlu0 %v2190, 120
        %v2199 = vpop.permute.xlu0 %2198
        %v2200 = vsel %vm2049, %v2195, %v2197
        %v2201 = vsel %vm2049, %v2197, %v2199
        %v2205 = vadd.f32 %v1902, %v2200
        %v2206 = vadd.f32 %v1903, %v2201
        %v2207 = vadd.f32 %v1904, %v2199
        %s2208 = scalar_lea.vmem %s5, 240
        %v2209 = vld [vmem:[%s2208] sm:$0xff]
        %v2210 = vld [vmem:[%s2208 + $0x8] sm:$0xff]
        %v2211 = vld [vmem:[%s2208 + $0x10] sm:$0xff]
        %v2212 = vmul.f32 %v2209, %v672
        %v2213 = vmul.f32 %v2210, %v673
        %v2214 = vmul.f32 %v2211, %v670
        %v2215 = vadd.f32 %v2212, 0.0
        %v2216 = vadd.f32 %v2213, 0.0
        %v2217 = vadd.f32 %v2214, 0.0
        %s2218 = scalar_lea.vmem %s5, 504
        %v2219 = vld [vmem:[%s2218] sm:$0xff]
        %v2220 = vld [vmem:[%s2218 + $0x8] sm:$0xff]
        %v2221 = vld [vmem:[%s2218 + $0x10] sm:$0xff]
        %v2222 = vmul.f32 %v2219, %v690
        %v2223 = vmul.f32 %v2220, %v691
        %v2224 = vmul.f32 %v2221, %v688
        %v2225 = vadd.f32 %v2222, 0.0
        %v2226 = vadd.f32 %v2223, 0.0
        %v2227 = vadd.f32 %v2224, 0.0
        %s2228 = scalar_lea.vmem %s5, 768
        %v2229 = vld [vmem:[%s2228] sm:$0xff]
        %v2230 = vld [vmem:[%s2228 + $0x8] sm:$0xff]
        %v2231 = vld [vmem:[%s2228 + $0x10] sm:$0xff]
        %v2232 = vmul.f32 %v2229, %v708
        %v2233 = vmul.f32 %v2230, %v709
        %v2234 = vmul.f32 %v2231, %v706
        %v2235 = vadd.f32 %v2215, %v2232
        %v2236 = vadd.f32 %v2216, %v2233
        %v2237 = vadd.f32 %v2217, %v2234
        %s2238 = scalar_lea.vmem %s5, 1032
        %v2239 = vld [vmem:[%s2238] sm:$0xff]
        %v2240 = vld [vmem:[%s2238 + $0x8] sm:$0xff]
        %v2241 = vld [vmem:[%s2238 + $0x10] sm:$0xff]
        %v2242 = vmul.f32 %v2239, %v726
        %v2243 = vmul.f32 %v2240, %v727
        %v2244 = vmul.f32 %v2241, %v724
        %v2245 = vadd.f32 %v2225, %v2242
        %v2246 = vadd.f32 %v2226, %v2243
        %v2247 = vadd.f32 %v2227, %v2244
        %s2248 = scalar_lea.vmem %s5, 1296
        %v2249 = vld [vmem:[%s2248] sm:$0xff]
        %v2250 = vld [vmem:[%s2248 + $0x8] sm:$0xff]
        %v2251 = vld [vmem:[%s2248 + $0x10] sm:$0xff]
        %v2252 = vmul.f32 %v2249, %v744
        %v2253 = vmul.f32 %v2250, %v745
        %v2254 = vmul.f32 %v2251, %v742
        %v2255 = vadd.f32 %v2235, %v2252
        %v2256 = vadd.f32 %v2236, %v2253
        %v2257 = vadd.f32 %v2237, %v2254
        %s2258 = scalar_lea.vmem %s5, 1560
        %v2259 = vld [vmem:[%s2258] sm:$0xff]
        %v2260 = vld [vmem:[%s2258 + $0x8] sm:$0xff]
        %v2261 = vld [vmem:[%s2258 + $0x10] sm:$0xff]
        %v2262 = vmul.f32 %v2259, %v762
        %v2263 = vmul.f32 %v2260, %v763
        %v2264 = vmul.f32 %v2261, %v906
        %v2265 = vadd.f32 %v2245, %v2262
        %v2266 = vadd.f32 %v2246, %v2263
        %v2267 = vadd.f32 %v2247, %v2264
        %s2268 = scalar_lea.vmem %s5, 1824
        %v2269 = vld [vmem:[%s2268] sm:$0xff]
        %v2270 = vld [vmem:[%s2268 + $0x8] sm:$0xff]
        %v2271 = vld [vmem:[%s2268 + $0x10] sm:$0xff]
        %v2272 = vmul.f32 %v2269, %v780
        %v2273 = vmul.f32 %v2270, %v781
        %v2274 = vmul.f32 %v2271, %v778
        %v2275 = vadd.f32 %v2255, %v2272
        %v2276 = vadd.f32 %v2256, %v2273
        %v2277 = vadd.f32 %v2257, %v2274
        %s2278 = scalar_lea.vmem %s5, 2088
        %v2279 = vld [vmem:[%s2278] sm:$0xff]
        %v2280 = vld [vmem:[%s2278 + $0x8] sm:$0xff]
        %v2281 = vld [vmem:[%s2278 + $0x10] sm:$0xff]
        %v2282 = vmul.f32 %v2279, %v798
        %v2283 = vmul.f32 %v2280, %v799
        %v2284 = vmul.f32 %v2281, %v796
        %v2285 = vadd.f32 %v2265, %v2282
        %v2286 = vadd.f32 %v2266, %v2283
        %v2287 = vadd.f32 %v2267, %v2284
        %s2288 = scalar_lea.vmem %s5, 2352
        %v2289 = vld [vmem:[%s2288] sm:$0xff]
        %v2290 = vld [vmem:[%s2288 + $0x8] sm:$0xff]
        %v2291 = vld [vmem:[%s2288 + $0x10] sm:$0xff]
        %v2292 = vmul.f32 %v2289, %v673
        %v2293 = vmul.f32 %v2290, %v809
        %v2294 = vmul.f32 %v2291, %v666
        %v2295 = vadd.f32 %v2275, %v2292
        %v2296 = vadd.f32 %v2276, %v2293
        %v2297 = vadd.f32 %v2277, %v2294
        %s2298 = scalar_lea.vmem %s5, 2616
        %v2299 = vld [vmem:[%s2298] sm:$0xff]
        %v2300 = vld [vmem:[%s2298 + $0x8] sm:$0xff]
        %v2301 = vld [vmem:[%s2298 + $0x10] sm:$0xff]
        %v2302 = vmul.f32 %v2299, %v691
        %v2303 = vmul.f32 %v2300, %v818
        %v2304 = vmul.f32 %v2301, %v684
        %v2305 = vadd.f32 %v2285, %v2302
        %v2306 = vadd.f32 %v2286, %v2303
        %v2307 = vadd.f32 %v2287, %v2304
        %s2308 = scalar_lea.vmem %s5, 2880
        %v2309 = vld [vmem:[%s2308] sm:$0xff]
        %v2310 = vld [vmem:[%s2308 + $0x8] sm:$0xff]
        %v2311 = vld [vmem:[%s2308 + $0x10] sm:$0xff]
        %v2312 = vmul.f32 %v2309, %v709
        %v2313 = vmul.f32 %v2310, %v827
        %v2314 = vmul.f32 %v2311, %v702
        %v2315 = vadd.f32 %v2295, %v2312
        %v2316 = vadd.f32 %v2296, %v2313
        %v2317 = vadd.f32 %v2297, %v2314
        %v2318 = vadd.f32 %v2315, %v2305
        %v2319 = vadd.f32 %v2316, %v2306
        %v2320 = vadd.f32 %v2317, %v2307
        %v2321 = vlaneseq
        %v2322 = vshrl.u32 %v2321, 7
        %v2323 = vsub.s32 2, %v2322
        %v2324 = vrot.slane %v369, %v2323
        %v2325 = vlaneseq
        %v2326 = vshrl.u32 %v2325, 7
        %v2327 = vsub.s32 2, %v2326
        %v2328 = vrot.slane %v370, %v2327
        %2331 = vrot.lane.b32.xlu0 %v2324, 10
        %v2332 = vpop.permute.xlu0 %2331
        %2333 = vrot.lane.b32.xlu0 %v2328, 10
        %v2334 = vpop.permute.xlu0 %2333
        %vm2335 = vcmask 80896
        %v2336 = vsel %vm2335, %v2332, %v2334
        %v2340 = vmul.f32 %v2318, %v2332
        %v2341 = vmul.f32 %v2319, %v2336
        %v2342 = vmul.f32 %v2320, %v2334
        %2346 = vrot.lane.b32.xlu0 %v2340, 118
        %v2347 = vpop.permute.xlu0 %2346
        %2348 = vrot.lane.b32.xlu0 %v2341, 118
        %v2349 = vpop.permute.xlu0 %2348
        %2350 = vrot.lane.b32.xlu0 %v2342, 118
        %v2351 = vpop.permute.xlu0 %2350
        %vm2352 = vcmask 965632
        %v2353 = vsel %vm2352, %v2347, %v2349
        %v2354 = vsel %vm2352, %v2349, %v2351
        %v2357 = vadd.f32 %v2054, %v2353
        %v2358 = vadd.f32 %v2055, %v2354
        %2362 = vrot.lane.b32.xlu0 %v2205, 127
        %v2363 = vpop.permute.xlu0 %2362
        %2364 = vrot.lane.b32.xlu0 %v2206, 127
        %v2365 = vpop.permute.xlu0 %2364
        %2366 = vrot.lane.b32.xlu0 %v2207, 127
        %v2367 = vpop.permute.xlu0 %2366
        %vm2368 = vcmask 1039360
        %v2369 = vsel %vm2368, %v2363, %v2365
        %v2370 = vsel %vm2368, %v2365, %v2367
        %v2373 = vadd.f32 %v2357, %v2369
        %v2374 = vadd.f32 %v2358, %v2370
        %2376 = vset.pattern.permute.xlu0 0
        %2377 = vperm.xlu0 %2376, %v364
        %v2378 = vpop.permute.xlu0 %2377
        %v2380 = vadd.f32 %v2373, %v2378
        %v2381 = vadd.f32 %v2374, %v2378
        %v2382 = vmul.f32 %v2380, %v604
        %v2383 = vmul.f32 %v2381, %v605
        %2385 = vset.pattern.permute.xlu0 0
        %2386 = vperm.xlu0 %2385, %v365
        %v2387 = vpop.permute.xlu0 %2386
        %v2389 = vlaneseq
        %v2390 = vshrl.u32 %v2389, 7
        %v2391 = vsub.s32 0, %v2390
        %v2392 = vrot.slane %v2382, %v2391
        %v2393 = vlaneseq
        %v2394 = vshrl.u32 %v2393, 7
        %v2395 = vsub.s32 0, %v2394
        %v2396 = vrot.slane %v2383, %v2395
        %v2397 = vmul.f32 %v2387, %v2392
        %v2398 = vmul.f32 %v2387, %v2396
        %2399 = vset.pattern.permute.xlu0 1
        %2400 = vperm.xlu0 %2399, %v365
        %v2401 = vpop.permute.xlu0 %2400
        %v2403 = vlaneseq
        %v2404 = vshrl.u32 %v2403, 7
        %v2405 = vsub.s32 1, %v2404
        %v2406 = vrot.slane %v2382, %v2405
        %v2407 = vlaneseq
        %v2408 = vshrl.u32 %v2407, 7
        %v2409 = vsub.s32 1, %v2408
        %v2410 = vrot.slane %v2383, %v2409
        %v2411 = vmul.f32 %v2401, %v2406
        %v2412 = vmul.f32 %v2401, %v2410
        %v2413 = vadd.f32 %v2411, 0.0
        %v2414 = vadd.f32 %v2412, 0.0
        %2415 = vset.pattern.permute.xlu0 2
        %2416 = vperm.xlu0 %2415, %v365
        %v2417 = vpop.permute.xlu0 %2416
        %v2419 = vlaneseq
        %v2420 = vshrl.u32 %v2419, 7
        %v2421 = vsub.s32 2, %v2420
        %v2422 = vrot.slane %v2382, %v2421
        %v2423 = vlaneseq
        %v2424 = vshrl.u32 %v2423, 7
        %v2425 = vsub.s32 2, %v2424
        %v2426 = vrot.slane %v2383, %v2425
        %v2427 = vmul.f32 %v2417, %v2422
        %v2428 = vmul.f32 %v2417, %v2426
        %v2429 = vadd.f32 %v2397, %v2427
        %v2430 = vadd.f32 %v2398, %v2428
        %2431 = vset.pattern.permute.xlu0 3
        %2432 = vperm.xlu0 %2431, %v365
        %v2433 = vpop.permute.xlu0 %2432
        %v2435 = vlaneseq
        %v2436 = vshrl.u32 %v2435, 7
        %v2437 = vsub.s32 3, %v2436
        %v2438 = vrot.slane %v2382, %v2437
        %v2439 = vlaneseq
        %v2440 = vshrl.u32 %v2439, 7
        %v2441 = vsub.s32 3, %v2440
        %v2442 = vrot.slane %v2383, %v2441
        %v2443 = vmul.f32 %v2433, %v2438
        %v2444 = vmul.f32 %v2433, %v2442
        %v2445 = vadd.f32 %v2413, %v2443
        %v2446 = vadd.f32 %v2414, %v2444
        %2447 = vset.pattern.permute.xlu0 4
        %2448 = vperm.xlu0 %2447, %v365
        %v2449 = vpop.permute.xlu0 %2448
        %v2451 = vlaneseq
        %v2452 = vshrl.u32 %v2451, 7
        %v2453 = vsub.s32 4, %v2452
        %v2454 = vrot.slane %v2382, %v2453
        %v2455 = vlaneseq
        %v2456 = vshrl.u32 %v2455, 7
        %v2457 = vsub.s32 4, %v2456
        %v2458 = vrot.slane %v2383, %v2457
        %v2459 = vmul.f32 %v2449, %v2454
        %v2460 = vmul.f32 %v2449, %v2458
        %v2461 = vadd.f32 %v2429, %v2459
        %v2462 = vadd.f32 %v2430, %v2460
        %2463 = vset.pattern.permute.xlu0 5
        %2464 = vperm.xlu0 %2463, %v365
        %v2465 = vpop.permute.xlu0 %2464
        %v2467 = vlaneseq
        %v2468 = vshrl.u32 %v2467, 7
        %v2469 = vsub.s32 5, %v2468
        %v2470 = vrot.slane %v2382, %v2469
        %v2471 = vlaneseq
        %v2472 = vshrl.u32 %v2471, 7
        %v2473 = vsub.s32 5, %v2472
        %v2474 = vrot.slane %v2383, %v2473
        %v2475 = vmul.f32 %v2465, %v2470
        %v2476 = vmul.f32 %v2465, %v2474
        %v2477 = vadd.f32 %v2445, %v2475
        %v2478 = vadd.f32 %v2446, %v2476
        %2479 = vset.pattern.permute.xlu0 6
        %2480 = vperm.xlu0 %2479, %v365
        %v2481 = vpop.permute.xlu0 %2480
        %v2483 = vlaneseq
        %v2484 = vshrl.u32 %v2483, 7
        %v2485 = vsub.s32 6, %v2484
        %v2486 = vrot.slane %v2382, %v2485
        %v2487 = vlaneseq
        %v2488 = vshrl.u32 %v2487, 7
        %v2489 = vsub.s32 6, %v2488
        %v2490 = vrot.slane %v2383, %v2489
        %v2491 = vmul.f32 %v2481, %v2486
        %v2492 = vmul.f32 %v2481, %v2490
        %v2493 = vadd.f32 %v2461, %v2491
        %v2494 = vadd.f32 %v2462, %v2492
        %2495 = vset.pattern.permute.xlu0 7
        %2496 = vperm.xlu0 %2495, %v365
        %v2497 = vpop.permute.xlu0 %2496
        %v2499 = vlaneseq
        %v2500 = vshrl.u32 %v2499, 7
        %v2501 = vsub.s32 7, %v2500
        %v2502 = vrot.slane %v2382, %v2501
        %v2503 = vlaneseq
        %v2504 = vshrl.u32 %v2503, 7
        %v2505 = vsub.s32 7, %v2504
        %v2506 = vrot.slane %v2383, %v2505
        %v2507 = vmul.f32 %v2497, %v2502
        %v2508 = vmul.f32 %v2497, %v2506
        %v2509 = vadd.f32 %v2477, %v2507
        %v2510 = vadd.f32 %v2478, %v2508
        %v2511 = vadd.f32 %v2493, %v2509
        %v2512 = vadd.f32 %v2494, %v2510
        %2514 = vset.pattern.permute.xlu0 0
        %2515 = vperm.xlu0 %2514, %v366
        %v2516 = vpop.permute.xlu0 %2515
        %v2518 = vadd.f32 %v2511, %v2516
        %v2519 = vadd.f32 %v2512, %v2516
        %2520 = vst [vmem:[%s352] sm:$0xff] %v2518
        %2521 = vst [vmem:[%s352 + $0x8] sm:$0xff] %v2519
        %s2522 = sand.u32 %s247, 1
        %s2523 = scalar_lea.sflag [#allocation3], %s2522
        %s2524 = sand.u32 %s247, 1
        %s2525 = smul.addr %s2524, 16
        %s2526 = scalar_lea.vmem [#allocation2], %s2525
        // Predicated region
        $region61: #{tpu_custom_call.1} parent=59 // pred_check
          %p2527 = pneg %p257
        $region62: #{tpu_custom_call.1} parent=59 // pred_check_branch
          %2529 = sbr.rel (%p2527) target = $region64
        $region63: #{tpu_custom_call.1} parent=59 // pred_region
          %s2531 = ssub.s32 256, 256
          %2532 = vsyncadd %s2523, %s2531
          %s2533 = smul.addr %s24, 2
          %s2534 = smul.addr %s2533, 128
          %s2535 = scalar_lea.hbm %s10, %s2534
          %s2537 = sshll.u32 %s2526, 4
          %s2538 = int_to_ptr.vmem [resolvable:$true] %s2537
          %2540 = dma.vmem_to_hbm [thread:$0]  %s2538, 256, %s2535, %s2523
        $region64: #{tpu_custom_call.1} parent=59 // pred_fallthru
          _
      $region60: #{tpu_custom_call.1} parent=5 // pred_fallthru
        _
      %p2541 = scmp.le.s32.totalorder 2, %s19
      // Predicated region
      $region65: #{tpu_custom_call.1} parent=5 // pred_check
        %p2542 = pneg %p2541
      $region66: #{tpu_custom_call.1} parent=5 // pred_check_branch
        %2544 = sbr.rel (%p2542) target = $region68
      $region67: #{tpu_custom_call.1} parent=5 // pred_region
        %s2545 = ssub.s32 %s19, 2
        // Predicated region
        $region69: #{tpu_custom_call.1} parent=67 // pred_check
          %p2546 = pneg %p263
        $region70: #{tpu_custom_call.1} parent=67 // pred_check_branch
          %2548 = sbr.rel (%p2546) target = $region72
        $region71: #{tpu_custom_call.1} parent=67 // pred_region
          %s2549 = sand.u32 %s248, 1
          %s2550 = scalar_lea.sflag [#allocation3], %s2549
          %s2551 = sand.u32 %s248, 1
          %s2552 = smul.addr %s2551, 16
          %s2553 = scalar_lea.vmem [#allocation2], %s2552
          %2554 = dma.done %s2550, 256
        $region72: #{tpu_custom_call.1} parent=67 // pred_fallthru
          _
      $region68: #{tpu_custom_call.1} parent=5 // pred_fallthru
        _
    $region6: #{tpu_custom_call.1} parent=1 // loop_footer
      %s23 = sadd.s32 1, %s19
    $region7: #{tpu_custom_call.1} parent=1 // loop_footer_branch
      %18 = sbr.rel target = $region3
    $region8: #{tpu_custom_call.1} parent=1 // loop_exit
      _
    %2555 = vsyncpa [#allocation3], 1
    %s2556 = scalar_lea.sflag [#allocation3], 1
    %2557 = vsyncpa %s2556, 1

</llo_original>
